<compile_context>
chip_gen: v6e
topology: v6e:2x2x1
jax: 0.10.0
libtpu: 0.0.40
codegen_flags: <defaults>
</compile_context>

<pallas_src>
import numpy as np
import jax
import jax.numpy as jnp
from jax.experimental import pallas as pl
from jax.experimental.pallas import tpu as pltpu

LANE = 128


def _logsig(x):
    # numerically stable log-sigmoid: min(x, 0) - log(1 + exp(-|x|))
    return jnp.minimum(x, 0.0) - jnp.log(1.0 + jnp.exp(-jnp.abs(x)))


# -----------------------------------------------------------------------------
# Fused kernel factory.
#
# refs = (x_ref, mats_0, bias_0, ..., mats_{S-1}, bias_{S-1}, o_ref, act_ref)
#   x_ref   : [B_TILE*R_STRIDE, 128]  input images, row-striped (image b owns
#             rows [b*R_STRIDE, b*R_STRIDE + H)), W*C packed on lanes, 0-padded.
#   mats_s  : [taps_s*128, 128]  banded weight matrix of stage s (lane-padded)
#   bias_s  : [1, 128]
#   o_ref   : [B_TILE, 128]      padded logits (LogSoftmax over the real lanes)
#   act_ref : VMEM scratch [B_TILE*R_STRIDE, 128], conv-stage activations in the
#             same row-striped layout.
#
# Conv-type stages (spatial rows > 1):
#   lhs = concat_d src[d : d + rows, :]   (global row shift; per-image shifts
#   pre = lhs @ mats + bias                are correct because every image owns
#   act[0:rows, :] = logsig(pre)           a fixed R_STRIDE-row stripe; rows
#                                          past an image's real extent are
#                                          garbage but feed only garbage rows)
# Dense-type stages (pool+flatten+Linear, later Linears):
#   lhs = concat_d src[d::R_STRIDE, :]    (row d of every image, strided load)
#   then a plain [B, K] @ [K, 128] matmul.
# -----------------------------------------------------------------------------
def make_kernel(metas, b_tile, r_stride, nclass):
    n_stage = len(metas)
    total_rows = b_tile * r_stride

    def kernel(*refs):
        x_ref = refs[0]
        o_ref = refs[1 + 2 * n_stage]
        act_ref = refs[2 + 2 * n_stage]

        # zero scratch so never-written rows are benign (they only ever feed
        # garbage rows anyway, but keep them finite).
        act_ref[...] = jnp.zeros_like(act_ref)

        src_ref = x_ref          # ref holding row-striped activations
        dense = None             # [B_TILE, 128] value once spatial dims collapse

        for s, (taps, is_dense) in enumerate(metas):
            m_ref = refs[1 + 2 * s]
            b_ref = refs[2 + 2 * s]

            if not is_dense:
                rows = total_rows - (taps - 1)
                lhs = jnp.concatenate(
                    [src_ref[pl.ds(d, rows), :] for d in range(taps)], axis=1)
            elif dense is None:
                # gather row d of every image (stride R_STRIDE), concat on lanes
                lhs = jnp.concatenate(
                    [src_ref[pl.ds(d, b_tile, stride=r_stride), :]
                     for d in range(taps)], axis=1)
            else:
                lhs = dense      # plain Linear layer (taps == 1)

            acc = jnp.dot(lhs, m_ref[...], preferred_element_type=jnp.float32)
            acc = acc + b_ref[...]

            if s < n_stage - 1:
                h = _logsig(acc)
                if not is_dense:
                    act_ref[pl.ds(0, rows), :] = h
                    src_ref = act_ref
                else:
                    dense = h
            else:
                # LogSoftmax over the real logit lanes only.
                lane_id = jax.lax.broadcasted_iota(jnp.int32, acc.shape, 1)
                logits = jnp.where(lane_id < nclass, acc, -1e30)
                zmax = jnp.max(logits, axis=1, keepdims=True)
                z = logits - zmax
                o_ref[...] = z - jnp.log(jnp.sum(jnp.exp(z), axis=1,
                                                 keepdims=True))

    return kernel


# -----------------------------------------------------------------------------
# One-time parameter preprocessing (outside the per-call path).
# Folds each AvgPool into the following linear op, builds banded conv matrices,
# pads every column dim to 128 lanes and flattens taps into one matrix/stage.
# Returns (stages, metas): stages = [(mats [taps*128,128], bias [1,128]), ...],
# metas = [(taps, is_dense), ...].
# -----------------------------------------------------------------------------
def prepare_params(params, cnn_arch, cnn_kernels, mlp_arch, in_hw, lane=LANE):
    n_conv = len(cnn_arch) - 1

    band, biases, pcols, dims = [], [], [], []
    ih, iw = in_hw
    for b in range(n_conv):
        k = cnn_kernels[b]
        cin, oc = cnn_arch[b], cnn_arch[b + 1]
        oh, ow = ih - k + 1, iw - k + 1
        ph, pw = oh - k + 1, ow - k + 1
        wt = np.asarray(params["conv"][b][0], np.float32)       # [OC, CIN, k, k]
        bs = np.asarray(params["conv"][b][1], np.float32)       # [OC]
        # banded conv matrices:  conv[h, w*OC+o] = sum_i (x[h+i, :] @ mats[i])
        mats = np.zeros((k, iw * cin, ow * oc), np.float32)
        for i in range(k):
            for j in range(k):
                blk = wt[:, :, i, j].T                           # [CIN, OC]
                for w_ in range(ow):
                    mats[i, (w_ + j) * cin:(w_ + j + 1) * cin,
                         w_ * oc:(w_ + 1) * oc] = blk
        # column half of AvgPool(k,1): (row @ pcol)[q*OC+o] = sum_j row[(q+j)*OC+o]
        pcol = np.zeros((ow * oc, pw * oc), np.float32)
        for q in range(pw):
            for j in range(k):
                for o in range(oc):
                    pcol[(q + j) * oc + o, q * oc + o] = 1.0
        band.append(mats)
        biases.append(np.tile(bs, ow).reshape(1, ow * oc))
        pcols.append(pcol)
        dims.append((k, oh, ow, oc, ph, pw))
        ih, iw = ph, pw

    # first Linear, columns reordered from PyTorch NCHW-flatten to [h, w*C + c]
    c_last = cnn_arch[-1]
    k_l, oh_l, ow_l, oc_l, ph_l, pw_l = dims[-1]
    w0 = np.asarray(params["mlp"][0][0], np.float32)             # [D1, C*PH*PW]
    b0 = np.asarray(params["mlp"][0][1], np.float32)
    d1 = w0.shape[0]
    assert w0.shape[1] == c_last * ph_l * pw_l
    w0_stack = np.transpose(w0.reshape(d1, c_last, ph_l, pw_l),
                            (2, 3, 1, 0)).reshape(ph_l, pw_l * c_last, d1)

    # last pool + flatten folded into the first Linear:
    mlp0 = np.zeros((oh_l, ow_l * oc_l, d1), np.float32)
    for r in range(ph_l):
        pm = (pcols[-1] @ w0_stack[r]) / float(k_l * k_l)        # [OW*OC, D1]
        for i in range(k_l):
            mlp0[r + i] += pm
    # pool of block b-1 folded into block b's band matrices:
    folded = [band[0]]
    for b in range(1, n_conv):
        k_prev = cnn_kernels[b - 1]
        ow_prev, oc_prev = dims[b - 1][2], dims[b - 1][3]
        k_b = cnn_kernels[b]
        fm = np.zeros((k_prev + k_b - 1, ow_prev * oc_prev,
                       band[b].shape[2]), np.float32)
        for i2 in range(k_b):
            pm = (pcols[b - 1] @ band[b][i2]) / float(k_prev * k_prev)
            for i1 in range(k_prev):
                fm[i1 + i2] += pm
        folded.append(fm)

    raw_stages = [(folded[b], biases[b], False) for b in range(n_conv)]
    raw_stages.append((mlp0, b0.reshape(1, -1), True))
    for (wl, bl) in params["mlp"][1:]:
        raw_stages.append((np.asarray(wl, np.float32).T[None, :, :],
                           np.asarray(bl, np.float32).reshape(1, -1), True))

    # ---- zero-pad every column dim to 128 lanes; merge taps into one matrix ----
    stages, metas = [], []
    for mats, bias, is_dense in raw_stages:
        taps, cin, cout = mats.shape
        assert cin <= lane and cout <= lane, \
            "layers wider than 128 lanes are not supported by this kernel"
        mp = np.zeros((taps, lane, lane), np.float32)
        mp[:, :cin, :cout] = mats
        bp = np.zeros((1, lane), np.float32)
        bp[0, :cout] = bias[0]
        stages.append((jnp.asarray(mp.reshape(taps * lane, lane)),
                       jnp.asarray(bp)))
        metas.append((taps, is_dense))
    return stages, metas


# -----------------------------------------------------------------------------
# Jitted forward: one batch-tiled pallas_call, both TensorCores used on v7x.
# -----------------------------------------------------------------------------
def build_forward(cnn_arch, mlp_arch, in_hw, metas, b_tile=16, lane=LANE):
    h_in, w_in = in_hw
    c0 = cnn_arch[0]
    nclass = mlp_arch[-1]
    assert b_tile % 8 == 0
    assert w_in * c0 <= lane and nclass <= lane
    r_stride = ((h_in + 7) // 8) * 8          # per-image row stripe (8-aligned)
    kernel = make_kernel(metas, b_tile, r_stride, nclass)

    def forward(x_nchw, stages):
        n = x_nchw.shape[0]
        n_pad = ((n + b_tile - 1) // b_tile) * b_tile
        # NCHW -> [N, H, W*C]; pad batch / rows / lanes; flatten to 2D stripes.
        x2d = jnp.transpose(x_nchw, (0, 2, 3, 1)).reshape(n, h_in, w_in * c0)
        x2d = jnp.pad(x2d, ((0, n_pad - n),
                            (0, r_stride - h_in),
                            (0, lane - w_in * c0)))
        x_flat = x2d.reshape(n_pad * r_stride, lane)

        flat_args = []
        in_specs = [pl.BlockSpec((b_tile * r_stride, lane), lambda i: (i, 0))]
        for (m, b) in stages:
            flat_args += [m, b]
            in_specs.append(pl.BlockSpec(m.shape, lambda i: (0, 0)))
            in_specs.append(pl.BlockSpec(b.shape, lambda i: (0, 0)))

        out = pl.pallas_call(
            kernel,
            out_shape=jax.ShapeDtypeStruct((n_pad, lane), jnp.float32),
            grid=(n_pad // b_tile,),
            in_specs=in_specs,
            out_specs=pl.BlockSpec((b_tile, lane), lambda i: (i, 0)),
            scratch_shapes=[pltpu.VMEM((b_tile * r_stride, lane), jnp.float32)],
            compiler_params=pltpu.CompilerParams(
                dimension_semantics=("parallel",),
                allow_input_fusion=[True] + [False] * (2 * len(stages)),
            ),
        )(x_flat, *flat_args)
        return out[:n, :nclass]

    return jax.jit(forward)


# -----------------------------------------------------------------------------
# Deterministic parameter init (PyTorch-default-style uniform bounds)
# -----------------------------------------------------------------------------
def init_params(key, cnn_arch, cnn_kernels, mlp_arch):
    params = {"conv": [], "mlp": []}
    for i in range(len(cnn_arch) - 1):
        cin, cout, k = cnn_arch[i], cnn_arch[i + 1], cnn_kernels[i]
        key, k1, k2 = jax.random.split(key, 3)
        bound = 1.0 / float(cin * k * k) ** 0.5
        w = jax.random.uniform(k1, (cout, cin, k, k), jnp.float32, -bound, bound)
        b = jax.random.uniform(k2, (cout,), jnp.float32, -bound, bound)
        params["conv"].append((w, b))
    for i in range(len(mlp_arch) - 1):
        din, dout = mlp_arch[i], mlp_arch[i + 1]
        key, k1, k2 = jax.random.split(key, 3)
        bound = 1.0 / float(din) ** 0.5
        w = jax.random.uniform(k1, (dout, din), jnp.float32, -bound, bound)
        b = jax.random.uniform(k2, (dout,), jnp.float32, -bound, bound)
        params["mlp"].append((w, b))
    return params


# -----------------------------------------------------------------------------
# Pure-JAX reference of CNN.forward (for validation of the fused kernel)
# -----------------------------------------------------------------------------
def reference_forward(x_nchw, params, cnn_kernels):
    x = x_nchw
    for (w, b), k in zip(params["conv"], cnn_kernels):
        x = jax.lax.conv_general_dilated(
            x, w, (1, 1), "VALID",
            dimension_numbers=("NCHW", "OIHW", "NCHW"),
            precision=jax.lax.Precision.HIGHEST)
        x = x + b.reshape(1, -1, 1, 1)
        x = jnp.minimum(x, 0.0) - jnp.log(1.0 + jnp.exp(-jnp.abs(x)))  # LogSigmoid
        x = jax.lax.reduce_window(x, 0.0, jax.lax.add,
                                  (1, 1, k, k), (1, 1, 1, 1), "VALID") / (k * k)
    x = x.reshape(x.shape[0], -1)                                      # NCHW flatten
    for (w, b) in params["mlp"][:-1]:
        x = jnp.dot(x, w.T, precision=jax.lax.Precision.HIGHEST) + b
        x = jnp.minimum(x, 0.0) - jnp.log(1.0 + jnp.exp(-jnp.abs(x)))
    w, b = params["mlp"][-1]
    x = jnp.dot(x, w.T, precision=jax.lax.Precision.HIGHEST) + b
    return jax.nn.log_softmax(x, axis=1)                               # LogSoftmax


if __name__ == "__main__":
    # Matches CNN([4,8,8], [3,3], [512,32,10], stride=1, padding=0,
    #             hidden_activation='logsig', output LogSoftmax, avg_pool)
    CNN_arch = [4, 8, 8]
    CNN_Kernels = [3, 3]
    H = W = 16          # 16 -conv3-> 14 -pool3/1-> 12 -conv3-> 10 -pool3/1-> 8
    MLP_arch = [8 * 8 * 8, 32, 10]

    key = jax.random.PRNGKey(0)
    key, xkey = jax.random.split(key)
    x = jax.random.normal(xkey, (2, CNN_arch[0], H, W), jnp.float32)    # NCHW
    params = init_params(key, CNN_arch, CNN_Kernels, MLP_arch)

    stages, metas = prepare_params(params, CNN_arch, CNN_Kernels, MLP_arch, (H, W))
    forward = build_forward(CNN_arch, MLP_arch, (H, W), metas, b_tile=16)

    out = jax.block_until_ready(forward(x, stages))
    assert out.shape == (2, MLP_arch[-1])
    # LogSoftmax rows exponentiate-sum to 1
    assert bool(jnp.allclose(jnp.sum(jnp.exp(out), axis=1), 1.0, atol=1e-4))
    # matches a straightforward JAX implementation of the PyTorch forward
    ref = reference_forward(x, params, CNN_Kernels)
    assert bool(jnp.allclose(out, ref, atol=1e-2, rtol=1e-3)), \
        float(jnp.max(jnp.abs(out - ref)))

    # multi-grid-step + batch-remainder path (19 -> padded to 32, 2 grid steps)
    key, xkey2 = jax.random.split(key)
    x2 = jax.random.normal(xkey2, (19, CNN_arch[0], H, W), jnp.float32)
    out2 = jax.block_until_ready(forward(x2, stages))
    ref2 = reference_forward(x2, params, CNN_Kernels)
    assert out2.shape == (19, MLP_arch[-1])
    assert bool(jnp.allclose(out2, ref2, atol=1e-2, rtol=1e-3)), \
        float(jnp.max(jnp.abs(out2 - ref2)))

    print("KERNEL_OK")
</pallas_src>

<mosaic_0001>
module attributes {stable_mosaic.version = 11 : i64} {
  func.func @kernel(%arg0: i32, %arg1: memref<256x128xf32, #tpu.memory_space<vmem>>, %arg2: memref<384x128xf32, #tpu.memory_space<vmem>>, %arg3: memref<1x128xf32, #tpu.memory_space<vmem>>, %arg4: memref<640x128xf32, #tpu.memory_space<vmem>>, %arg5: memref<1x128xf32, #tpu.memory_space<vmem>>, %arg6: memref<1280x128xf32, #tpu.memory_space<vmem>>, %arg7: memref<1x128xf32, #tpu.memory_space<vmem>>, %arg8: memref<128x128xf32, #tpu.memory_space<vmem>>, %arg9: memref<1x128xf32, #tpu.memory_space<vmem>>, %arg10: memref<16x128xf32, #tpu.memory_space<vmem>>, %arg11: memref<256x128xf32, #tpu.memory_space<vmem>>) attributes {dimension_semantics = [#tpu.dimension_semantics<parallel>], iteration_bounds = array<i64: 1>, scalar_prefetch = 0 : i64, scratch_operands = 1 : i64, tpu.core_type = #tpu.core_type<tc>, window_params = [{transform_indices = @transform_0, window_bounds = array<i64: 256, 128>}, {pipeline_mode = #tpu.pipeline_mode<synchronous>, transform_indices = @transform_1, window_bounds = array<i64: 384, 128>}, {pipeline_mode = #tpu.pipeline_mode<synchronous>, transform_indices = @transform_2, window_bounds = array<i64: 1, 128>}, {pipeline_mode = #tpu.pipeline_mode<synchronous>, transform_indices = @transform_3, window_bounds = array<i64: 640, 128>}, {pipeline_mode = #tpu.pipeline_mode<synchronous>, transform_indices = @transform_4, window_bounds = array<i64: 1, 128>}, {pipeline_mode = #tpu.pipeline_mode<synchronous>, transform_indices = @transform_5, window_bounds = array<i64: 1280, 128>}, {pipeline_mode = #tpu.pipeline_mode<synchronous>, transform_indices = @transform_6, window_bounds = array<i64: 1, 128>}, {pipeline_mode = #tpu.pipeline_mode<synchronous>, transform_indices = @transform_7, window_bounds = array<i64: 128, 128>}, {pipeline_mode = #tpu.pipeline_mode<synchronous>, transform_indices = @transform_8, window_bounds = array<i64: 1, 128>}, {transform_indices = @transform_9, window_bounds = array<i64: 16, 128>}]} {
    %cst = arith.constant 0.000000e+00 : f32
    %0 = vector.broadcast %cst : f32 to vector<256x128xf32>
    %c0 = arith.constant 0 : index
    %c0_0 = arith.constant 0 : index
    %1 = vector.load %arg11[%c0, %c0_0] : memref<256x128xf32, #tpu.memory_space<vmem>>, vector<256x128xf32>
    tpu.vector_store %arg11[%c0, %c0_0], %0 {strides = array<i32>} : memref<256x128xf32, #tpu.memory_space<vmem>>, vector<256x128xf32>,
    %c0_1 = arith.constant 0 : index
    %c0_2 = arith.constant 0 : index
    %2 = vector.load %arg1[%c0_1, %c0_2] : memref<256x128xf32, #tpu.memory_space<vmem>>, vector<254x128xf32>
    %c1 = arith.constant 1 : index
    %c0_3 = arith.constant 0 : index
    %3 = vector.load %arg1[%c1, %c0_3] : memref<256x128xf32, #tpu.memory_space<vmem>>, vector<254x128xf32>
    %c2 = arith.constant 2 : index
    %c0_4 = arith.constant 0 : index
    %4 = vector.load %arg1[%c2, %c0_4] : memref<256x128xf32, #tpu.memory_space<vmem>>, vector<254x128xf32>
    %5 = tpu.concatenate %2, %3, %4 in 1 : vector<254x128xf32>, vector<254x128xf32>, vector<254x128xf32> -> vector<254x384xf32>
    %c0_5 = arith.constant 0 : index
    %c0_6 = arith.constant 0 : index
    %6 = vector.load %arg2[%c0_5, %c0_6] : memref<384x128xf32, #tpu.memory_space<vmem>>, vector<384x128xf32>
    %cst_7 = arith.constant dense<0.000000e+00> : vector<254x128xf32>
    %7 = tpu.matmul %5, %6, %cst_7 {dimension_numbers = #tpu.dot_dimension_numbers<[1], [0], [0], [1], [0, 0, 1, 1], [], []>} : vector<254x384xf32>, vector<384x128xf32>, vector<254x128xf32> -> vector<254x128xf32>
    %c0_8 = arith.constant 0 : index
    %c0_9 = arith.constant 0 : index
    %8 = vector.load %arg3[%c0_8, %c0_9] : memref<1x128xf32, #tpu.memory_space<vmem>>, vector<1x128xf32>
    %9 = vector.broadcast %8 : vector<1x128xf32> to vector<254x128xf32>
    %10 = arith.addf %7, %9 : vector<254x128xf32>
    %cst_10 = arith.constant 0.000000e+00 : f32
    %11 = vector.broadcast %cst_10 : f32 to vector<254x128xf32>
    %12 = arith.minimumf %10, %11 : vector<254x128xf32>
    %13 = math.absf %10 : vector<254x128xf32>
    %cst_11 = arith.constant 0.000000e+00 : f32
    %14 = vector.broadcast %cst_11 : f32 to vector<254x128xf32>
    %15 = arith.subf %14, %13 : vector<254x128xf32>
    %16 = math.exp %15 : vector<254x128xf32>
    %cst_12 = arith.constant 1.000000e+00 : f32
    %17 = vector.broadcast %cst_12 : f32 to vector<254x128xf32>
    %18 = arith.addf %17, %16 : vector<254x128xf32>
    %19 = math.log %18 : vector<254x128xf32>
    %20 = arith.subf %12, %19 : vector<254x128xf32>
    %c0_13 = arith.constant 0 : index
    %c0_14 = arith.constant 0 : index
    %21 = vector.load %arg11[%c0_13, %c0_14] : memref<256x128xf32, #tpu.memory_space<vmem>>, vector<254x128xf32>
    tpu.vector_store %arg11[%c0_13, %c0_14], %20 {strides = array<i32>} : memref<256x128xf32, #tpu.memory_space<vmem>>, vector<254x128xf32>,
    %c0_15 = arith.constant 0 : index
    %c0_16 = arith.constant 0 : index
    %22 = vector.load %arg11[%c0_15, %c0_16] : memref<256x128xf32, #tpu.memory_space<vmem>>, vector<252x128xf32>
    %c1_17 = arith.constant 1 : index
    %c0_18 = arith.constant 0 : index
    %23 = vector.load %arg11[%c1_17, %c0_18] : memref<256x128xf32, #tpu.memory_space<vmem>>, vector<252x128xf32>
    %c2_19 = arith.constant 2 : index
    %c0_20 = arith.constant 0 : index
    %24 = vector.load %arg11[%c2_19, %c0_20] : memref<256x128xf32, #tpu.memory_space<vmem>>, vector<252x128xf32>
    %c3 = arith.constant 3 : index
    %c0_21 = arith.constant 0 : index
    %25 = vector.load %arg11[%c3, %c0_21] : memref<256x128xf32, #tpu.memory_space<vmem>>, vector<252x128xf32>
    %c4 = arith.constant 4 : index
    %c0_22 = arith.constant 0 : index
    %26 = vector.load %arg11[%c4, %c0_22] : memref<256x128xf32, #tpu.memory_space<vmem>>, vector<252x128xf32>
    %27 = tpu.concatenate %22, %23, %24, %25, %26 in 1 : vector<252x128xf32>, vector<252x128xf32>, vector<252x128xf32>, vector<252x128xf32>, vector<252x128xf32> -> vector<252x640xf32>
    %c0_23 = arith.constant 0 : index
    %c0_24 = arith.constant 0 : index
    %28 = vector.load %arg4[%c0_23, %c0_24] : memref<640x128xf32, #tpu.memory_space<vmem>>, vector<640x128xf32>
    %cst_25 = arith.constant dense<0.000000e+00> : vector<252x128xf32>
    %29 = tpu.matmul %27, %28, %cst_25 {dimension_numbers = #tpu.dot_dimension_numbers<[1], [0], [0], [1], [0, 0, 1, 1], [], []>} : vector<252x640xf32>, vector<640x128xf32>, vector<252x128xf32> -> vector<252x128xf32>
    %c0_26 = arith.constant 0 : index
    %c0_27 = arith.constant 0 : index
    %30 = vector.load %arg5[%c0_26, %c0_27] : memref<1x128xf32, #tpu.memory_space<vmem>>, vector<1x128xf32>
    %31 = vector.broadcast %30 : vector<1x128xf32> to vector<252x128xf32>
    %32 = arith.addf %29, %31 : vector<252x128xf32>
    %cst_28 = arith.constant 0.000000e+00 : f32
    %33 = vector.broadcast %cst_28 : f32 to vector<252x128xf32>
    %34 = arith.minimumf %32, %33 : vector<252x128xf32>
    %35 = math.absf %32 : vector<252x128xf32>
    %cst_29 = arith.constant 0.000000e+00 : f32
    %36 = vector.broadcast %cst_29 : f32 to vector<252x128xf32>
    %37 = arith.subf %36, %35 : vector<252x128xf32>
    %38 = math.exp %37 : vector<252x128xf32>
    %cst_30 = arith.constant 1.000000e+00 : f32
    %39 = vector.broadcast %cst_30 : f32 to vector<252x128xf32>
    %40 = arith.addf %39, %38 : vector<252x128xf32>
    %41 = math.log %40 : vector<252x128xf32>
    %42 = arith.subf %34, %41 : vector<252x128xf32>
    %c0_31 = arith.constant 0 : index
    %c0_32 = arith.constant 0 : index
    %43 = vector.load %arg11[%c0_31, %c0_32] : memref<256x128xf32, #tpu.memory_space<vmem>>, vector<252x128xf32>
    tpu.vector_store %arg11[%c0_31, %c0_32], %42 {strides = array<i32>} : memref<256x128xf32, #tpu.memory_space<vmem>>, vector<252x128xf32>,
    %c0_33 = arith.constant 0 : index
    %c0_34 = arith.constant 0 : index
    %44 = tpu.strided_load %arg11[%c0_33, %c0_34] {strides = array<i32: 16, 1>} : memref<256x128xf32, #tpu.memory_space<vmem>>, vector<16x128xf32>
    %c1_35 = arith.constant 1 : index
    %c0_36 = arith.constant 0 : index
    %45 = tpu.strided_load %arg11[%c1_35, %c0_36] {strides = array<i32: 16, 1>} : memref<256x128xf32, #tpu.memory_space<vmem>>, vector<16x128xf32>
    %c2_37 = arith.constant 2 : index
    %c0_38 = arith.constant 0 : index
    %46 = tpu.strided_load %arg11[%c2_37, %c0_38] {strides = array<i32: 16, 1>} : memref<256x128xf32, #tpu.memory_space<vmem>>, vector<16x128xf32>
    %c3_39 = arith.constant 3 : index
    %c0_40 = arith.constant 0 : index
    %47 = tpu.strided_load %arg11[%c3_39, %c0_40] {strides = array<i32: 16, 1>} : memref<256x128xf32, #tpu.memory_space<vmem>>, vector<16x128xf32>
    %c4_41 = arith.constant 4 : index
    %c0_42 = arith.constant 0 : index
    %48 = tpu.strided_load %arg11[%c4_41, %c0_42] {strides = array<i32: 16, 1>} : memref<256x128xf32, #tpu.memory_space<vmem>>, vector<16x128xf32>
    %c5 = arith.constant 5 : index
    %c0_43 = arith.constant 0 : index
    %49 = tpu.strided_load %arg11[%c5, %c0_43] {strides = array<i32: 16, 1>} : memref<256x128xf32, #tpu.memory_space<vmem>>, vector<16x128xf32>
    %c6 = arith.constant 6 : index
    %c0_44 = arith.constant 0 : index
    %50 = tpu.strided_load %arg11[%c6, %c0_44] {strides = array<i32: 16, 1>} : memref<256x128xf32, #tpu.memory_space<vmem>>, vector<16x128xf32>
    %c7 = arith.constant 7 : index
    %c0_45 = arith.constant 0 : index
    %51 = tpu.strided_load %arg11[%c7, %c0_45] {strides = array<i32: 16, 1>} : memref<256x128xf32, #tpu.memory_space<vmem>>, vector<16x128xf32>
    %c8 = arith.constant 8 : index
    %c0_46 = arith.constant 0 : index
    %52 = tpu.strided_load %arg11[%c8, %c0_46] {strides = array<i32: 16, 1>} : memref<256x128xf32, #tpu.memory_space<vmem>>, vector<16x128xf32>
    %c9 = arith.constant 9 : index
    %c0_47 = arith.constant 0 : index
    %53 = tpu.strided_load %arg11[%c9, %c0_47] {strides = array<i32: 16, 1>} : memref<256x128xf32, #tpu.memory_space<vmem>>, vector<16x128xf32>
    %54 = tpu.concatenate %44, %45, %46, %47, %48, %49, %50, %51, %52, %53 in 1 : vector<16x128xf32>, vector<16x128xf32>, vector<16x128xf32>, vector<16x128xf32>, vector<16x128xf32>, vector<16x128xf32>, vector<16x128xf32>, vector<16x128xf32>, vector<16x128xf32>, vector<16x128xf32> -> vector<16x1280xf32>
    %c0_48 = arith.constant 0 : index
    %c0_49 = arith.constant 0 : index
    %55 = vector.load %arg6[%c0_48, %c0_49] : memref<1280x128xf32, #tpu.memory_space<vmem>>, vector<1280x128xf32>
    %cst_50 = arith.constant dense<0.000000e+00> : vector<16x128xf32>
    %56 = tpu.matmul %54, %55, %cst_50 {dimension_numbers = #tpu.dot_dimension_numbers<[1], [0], [0], [1], [0, 0, 1, 1], [], []>} : vector<16x1280xf32>, vector<1280x128xf32>, vector<16x128xf32> -> vector<16x128xf32>
    %c0_51 = arith.constant 0 : index
    %c0_52 = arith.constant 0 : index
    %57 = vector.load %arg7[%c0_51, %c0_52] : memref<1x128xf32, #tpu.memory_space<vmem>>, vector<1x128xf32>
    %58 = vector.broadcast %57 : vector<1x128xf32> to vector<16x128xf32>
    %59 = arith.addf %56, %58 : vector<16x128xf32>
    %cst_53 = arith.constant 0.000000e+00 : f32
    %60 = vector.broadcast %cst_53 : f32 to vector<16x128xf32>
    %61 = arith.minimumf %59, %60 : vector<16x128xf32>
    %62 = math.absf %59 : vector<16x128xf32>
    %cst_54 = arith.constant 0.000000e+00 : f32
    %63 = vector.broadcast %cst_54 : f32 to vector<16x128xf32>
    %64 = arith.subf %63, %62 : vector<16x128xf32>
    %65 = math.exp %64 : vector<16x128xf32>
    %cst_55 = arith.constant 1.000000e+00 : f32
    %66 = vector.broadcast %cst_55 : f32 to vector<16x128xf32>
    %67 = arith.addf %66, %65 : vector<16x128xf32>
    %68 = math.log %67 : vector<16x128xf32>
    %69 = arith.subf %61, %68 : vector<16x128xf32>
    %c0_56 = arith.constant 0 : index
    %c0_57 = arith.constant 0 : index
    %70 = vector.load %arg8[%c0_56, %c0_57] : memref<128x128xf32, #tpu.memory_space<vmem>>, vector<128x128xf32>
    %cst_58 = arith.constant dense<0.000000e+00> : vector<16x128xf32>
    %71 = tpu.matmul %69, %70, %cst_58 {dimension_numbers = #tpu.dot_dimension_numbers<[1], [0], [0], [1], [0, 0, 1, 1], [], []>} : vector<16x128xf32>, vector<128x128xf32>, vector<16x128xf32> -> vector<16x128xf32>
    %c0_59 = arith.constant 0 : index
    %c0_60 = arith.constant 0 : index
    %72 = vector.load %arg9[%c0_59, %c0_60] : memref<1x128xf32, #tpu.memory_space<vmem>>, vector<1x128xf32>
    %73 = vector.broadcast %72 : vector<1x128xf32> to vector<16x128xf32>
    %74 = arith.addf %71, %73 : vector<16x128xf32>
    %75 = tpu.iota {dimensions = array<i32: 1>} : vector<16x128xi32>
    %c10_i32 = arith.constant 10 : i32
    %76 = vector.broadcast %c10_i32 : i32 to vector<16x128xi32>
    %77 = arith.cmpi slt, %75, %76 : vector<16x128xi32>
    %cst_61 = arith.constant -1.000000e+30 : f32
    %78 = vector.broadcast %cst_61 : f32 to vector<16x128xf32>
    %79 = arith.select %77, %74, %78 : vector<16x128xi1>, vector<16x128xf32>
    %cst_62 = arith.constant dense<0xFF800000> : vector<16xf32>
    %80 = vector.multi_reduction <maximumf>, %79, %cst_62 [1] : vector<16x128xf32> to vector<16xf32>
    %81 = vector.shape_cast %80 : vector<16xf32> to vector<16x1xf32>
    %82 = vector.broadcast %81 : vector<16x1xf32> to vector<16x128xf32>
    %83 = arith.subf %79, %82 : vector<16x128xf32>
    %84 = math.exp %83 : vector<16x128xf32>
    %cst_63 = arith.constant dense<0.000000e+00> : vector<16xf32>
    %85 = vector.multi_reduction <add>, %84, %cst_63 [1] : vector<16x128xf32> to vector<16xf32>
    %86 = vector.shape_cast %85 : vector<16xf32> to vector<16x1xf32>
    %87 = math.log %86 : vector<16x1xf32>
    %88 = vector.broadcast %87 : vector<16x1xf32> to vector<16x128xf32>
    %89 = arith.subf %83, %88 : vector<16x128xf32>
    %c0_64 = arith.constant 0 : index
    %c0_65 = arith.constant 0 : index
    %90 = vector.load %arg10[%c0_64, %c0_65] : memref<16x128xf32, #tpu.memory_space<vmem>>, vector<16x128xf32>
    tpu.vector_store %arg10[%c0_64, %c0_65], %89 {strides = array<i32>} : memref<16x128xf32, #tpu.memory_space<vmem>>, vector<16x128xf32>,
    return
  }
  func.func @transform_0(%arg0: i32) -> (i32, i32) {
    %c0_i32 = arith.constant 0 : i32
    %c0_i32_0 = arith.constant 0 : i32
    return %arg0, %c0_i32 : i32, i32
  }
  func.func @transform_1(%arg0: i32) -> (i32, i32) {
    %c0_i32 = arith.constant 0 : i32
    %c0_i32_0 = arith.constant 0 : i32
    %c0_i32_1 = arith.constant 0 : i32
    return %c0_i32, %c0_i32_0 : i32, i32
  }
  func.func @transform_2(%arg0: i32) -> (i32, i32) {
    %c0_i32 = arith.constant 0 : i32
    %c0_i32_0 = arith.constant 0 : i32
    %c0_i32_1 = arith.constant 0 : i32
    return %c0_i32, %c0_i32_0 : i32, i32
  }
  func.func @transform_3(%arg0: i32) -> (i32, i32) {
    %c0_i32 = arith.constant 0 : i32
    %c0_i32_0 = arith.constant 0 : i32
    %c0_i32_1 = arith.constant 0 : i32
    return %c0_i32, %c0_i32_0 : i32, i32
  }
  func.func @transform_4(%arg0: i32) -> (i32, i32) {
    %c0_i32 = arith.constant 0 : i32
    %c0_i32_0 = arith.constant 0 : i32
    %c0_i32_1 = arith.constant 0 : i32
    return %c0_i32, %c0_i32_0 : i32, i32
  }
  func.func @transform_5(%arg0: i32) -> (i32, i32) {
    %c0_i32 = arith.constant 0 : i32
    %c0_i32_0 = arith.constant 0 : i32
    %c0_i32_1 = arith.constant 0 : i32
    return %c0_i32, %c0_i32_0 : i32, i32
  }
  func.func @transform_6(%arg0: i32) -> (i32, i32) {
    %c0_i32 = arith.constant 0 : i32
    %c0_i32_0 = arith.constant 0 : i32
    %c0_i32_1 = arith.constant 0 : i32
    return %c0_i32, %c0_i32_0 : i32, i32
  }
  func.func @transform_7(%arg0: i32) -> (i32, i32) {
    %c0_i32 = arith.constant 0 : i32
    %c0_i32_0 = arith.constant 0 : i32
    %c0_i32_1 = arith.constant 0 : i32
    return %c0_i32, %c0_i32_0 : i32, i32
  }
  func.func @transform_8(%arg0: i32) -> (i32, i32) {
    %c0_i32 = arith.constant 0 : i32
    %c0_i32_0 = arith.constant 0 : i32
    %c0_i32_1 = arith.constant 0 : i32
    return %c0_i32, %c0_i32_0 : i32, i32
  }
  func.func @transform_9(%arg0: i32) -> (i32, i32) {
    %c0_i32 = arith.constant 0 : i32
    %c0_i32_0 = arith.constant 0 : i32
    return %arg0, %c0_i32 : i32, i32
  }
}

</mosaic_0001>

<llo_original>
// kernel: forward.1
$region0: #{forward.1}
  #allocation0 [shape = 'u32[]', space=smem, size = 0x4, offset = 0x4, fixed_abs, tag = 'smem constant byte address 0x4 - core index']
  #allocation1 [shape = 'u32[144,128]{1,0:T(1,128)}', space=vmem, size = 0x12000, scoped, tag = 'internal scratch']
  #allocation2 [shape = 'f32[256,128]{1,0:T(8,128)}', space=vmem, size = 0x20000, scoped, tag = 'scratch operand']
  %s0 = inlined_call_operand.vmem [shape: f32[256,128], index: 0, kind: input, shape index: {}]
  %s1 = inlined_call_operand.hbm [shape: f32[384,128], index: 1, kind: input, shape index: {}]
  %s2 = inlined_call_operand.vmem [shape: f32[1,128], index: 2, kind: input, shape index: {}]
  %s3 = inlined_call_operand.vmem [shape: f32[640,128], index: 3, kind: input, shape index: {}]
  %s4 = inlined_call_operand.vmem [shape: f32[1,128], index: 4, kind: input, shape index: {}]
  %s5 = inlined_call_operand.hbm [shape: f32[1280,128], index: 5, kind: input, shape index: {}]
  %s6 = inlined_call_operand.vmem [shape: f32[1,128], index: 6, kind: input, shape index: {}]
  %s7 = inlined_call_operand.hbm [shape: f32[128,128], index: 7, kind: input, shape index: {}]
  %s8 = inlined_call_operand.vmem [shape: f32[1,128], index: 8, kind: input, shape index: {}]
  %s9 = inlined_call_operand.vmem [shape: f32[16,128], index: 9, kind: output, shape index: {}]
  %s10 = sld [smem:[#allocation0]]
  $region58: #{forward.1} parent=0
    _
  %s12 = ssub.s32 1, %s10
  %s13 = scalar_select 0, %s12, %s10
  $region1: #{forward.1} parent=0
    #allocation3 [shape = 'u8[196608]{0}', space=vmem, size = 0x30000, scoped, tag = 'input window, operand 1, single buffered']
    #allocation4 [shape = 's32[1]{0}', space=sflag, size = 0x4, scoped, tag = 'scoped memory for forward.1']
    #allocation5 [shape = 'u8[655360]{0}', space=vmem, size = 0xa0000, scoped, tag = 'input window, operand 5, single buffered']
    #allocation6 [shape = 's32[1]{0}', space=sflag, size = 0x4, scoped, tag = 'scoped memory for forward.1']
    #allocation7 [shape = 'u8[65536]{0}', space=vmem, size = 0x10000, scoped, tag = 'input window, operand 7, single buffered']
    %14 = vsyncpa [#allocation4], 0
    %15 = vsyncpa [#allocation6], 0
    // Predicated region
    $region2: #{forward.1} parent=1 // pred_check
      _
    $region3: #{forward.1} parent=1 // pred_check_branch
      %17 = sbr.rel (0) target = $region5
    $region4: #{forward.1} parent=1 // pred_region
      _
    $region5: #{forward.1} parent=1 // pred_fallthru
      _
    // Predicated region
    $region6: #{forward.1} parent=1 // pred_check
      _
    $region7: #{forward.1} parent=1 // pred_check_branch
      %19 = sbr.rel (0) target = $region9
    $region8: #{forward.1} parent=1 // pred_region
      %s21 = ssub.s32 6144, 6144
      %22 = vsyncadd [#allocation4], %s21
      %s23 = sshll.u32 [#allocation3], 4
      %s24 = int_to_ptr.vmem [resolvable:$true] %s23
      %29 = dma.hbm_to_vmem [thread:$0]  %s1, 6144, %s24, [#allocation4], 128, 128, 8
    $region9: #{forward.1} parent=1 // pred_fallthru
      _
    // Predicated region
    $region10: #{forward.1} parent=1 // pred_check
      _
    $region11: #{forward.1} parent=1 // pred_check_branch
      %31 = sbr.rel (0) target = $region13
    $region12: #{forward.1} parent=1 // pred_region
      _
    $region13: #{forward.1} parent=1 // pred_fallthru
      _
    // Predicated region
    $region14: #{forward.1} parent=1 // pred_check
      _
    $region15: #{forward.1} parent=1 // pred_check_branch
      %33 = sbr.rel (0) target = $region17
    $region16: #{forward.1} parent=1 // pred_region
      _
    $region17: #{forward.1} parent=1 // pred_fallthru
      _
    // Predicated region
    $region18: #{forward.1} parent=1 // pred_check
      _
    $region19: #{forward.1} parent=1 // pred_check_branch
      %35 = sbr.rel (0) target = $region21
    $region20: #{forward.1} parent=1 // pred_region
      _
    $region21: #{forward.1} parent=1 // pred_fallthru
      _
    // Predicated region
    $region22: #{forward.1} parent=1 // pred_check
      _
    $region23: #{forward.1} parent=1 // pred_check_branch
      %37 = sbr.rel (0) target = $region25
    $region24: #{forward.1} parent=1 // pred_region
      %s39 = ssub.s32 20480, 20480
      %40 = vsyncadd [#allocation6], %s39
      %s41 = sshll.u32 [#allocation5], 4
      %s42 = int_to_ptr.vmem [resolvable:$true] %s41
      %47 = dma.hbm_to_vmem [thread:$0]  %s5, 20480, %s42, [#allocation6], 128, 128, 8
    $region25: #{forward.1} parent=1 // pred_fallthru
      _
    // Predicated region
    $region26: #{forward.1} parent=1 // pred_check
      _
    $region27: #{forward.1} parent=1 // pred_check_branch
      %49 = sbr.rel (0) target = $region29
    $region28: #{forward.1} parent=1 // pred_region
      _
    $region29: #{forward.1} parent=1 // pred_fallthru
      _
    // Predicated region
    $region30: #{forward.1} parent=1 // pred_check
      _
    $region31: #{forward.1} parent=1 // pred_check_branch
      %51 = sbr.rel (0) target = $region33
    $region32: #{forward.1} parent=1 // pred_region
      %s53 = ssub.s32 2048, 2048
      %54 = vsyncadd [#allocation6], %s53
      %s55 = sshll.u32 [#allocation7], 4
      %s56 = int_to_ptr.vmem [resolvable:$true] %s55
      %61 = dma.hbm_to_vmem [thread:$0]  %s7, 2048, %s56, [#allocation6], 128, 128, 8
    $region33: #{forward.1} parent=1 // pred_fallthru
      _
    // Predicated region
    $region34: #{forward.1} parent=1 // pred_check
      _
    $region35: #{forward.1} parent=1 // pred_check_branch
      %63 = sbr.rel (0) target = $region37
    $region36: #{forward.1} parent=1 // pred_region
      _
    $region37: #{forward.1} parent=1 // pred_fallthru
      _
    // Predicated region
    $region38: #{forward.1} parent=1 // pred_check
      _
    $region39: #{forward.1} parent=1 // pred_check_branch
      %65 = sbr.rel (0) target = $region41
    $region40: #{forward.1} parent=1 // pred_region
      %66 = dma.done [#allocation4], 6144
    $region41: #{forward.1} parent=1 // pred_fallthru
      _
    // Predicated region
    $region42: #{forward.1} parent=1 // pred_check
      _
    $region43: #{forward.1} parent=1 // pred_check_branch
      %68 = sbr.rel (0) target = $region45
    $region44: #{forward.1} parent=1 // pred_region
      %69 = dma.done [#allocation6], 20480
    $region45: #{forward.1} parent=1 // pred_fallthru
      _
    // Predicated region
    $region46: #{forward.1} parent=1 // pred_check
      _
    $region47: #{forward.1} parent=1 // pred_check_branch
      %71 = sbr.rel (0) target = $region49
    $region48: #{forward.1} parent=1 // pred_region
      %72 = dma.done [#allocation6], 2048
    $region49: #{forward.1} parent=1 // pred_fallthru
      _
    %73 = vst [vmem:[#allocation2] sm:$0xff] 0.0
    %74 = vst [vmem:[#allocation2 + $0x8] sm:$0xff] 0.0
    %75 = vst [vmem:[#allocation2 + $0x10] sm:$0xff] 0.0
    %76 = vst [vmem:[#allocation2 + $0x18] sm:$0xff] 0.0
    %77 = vst [vmem:[#allocation2 + $0x20] sm:$0xff] 0.0
    %78 = vst [vmem:[#allocation2 + $0x28] sm:$0xff] 0.0
    %79 = vst [vmem:[#allocation2 + $0x30] sm:$0xff] 0.0
    %80 = vst [vmem:[#allocation2 + $0x38] sm:$0xff] 0.0
    %81 = vst [vmem:[#allocation2 + $0x40] sm:$0xff] 0.0
    %82 = vst [vmem:[#allocation2 + $0x48] sm:$0xff] 0.0
    %83 = vst [vmem:[#allocation2 + $0x50] sm:$0xff] 0.0
    %84 = vst [vmem:[#allocation2 + $0x58] sm:$0xff] 0.0
    %85 = vst [vmem:[#allocation2 + $0x60] sm:$0xff] 0.0
    %86 = vst [vmem:[#allocation2 + $0x68] sm:$0xff] 0.0
    %87 = vst [vmem:[#allocation2 + $0x70] sm:$0xff] 0.0
    %88 = vst [vmem:[#allocation2 + $0x78] sm:$0xff] 0.0
    %89 = vst [vmem:[#allocation2 + $0x80] sm:$0xff] 0.0
    %90 = vst [vmem:[#allocation2 + $0x88] sm:$0xff] 0.0
    %91 = vst [vmem:[#allocation2 + $0x90] sm:$0xff] 0.0
    %92 = vst [vmem:[#allocation2 + $0x98] sm:$0xff] 0.0
    %93 = vst [vmem:[#allocation2 + $0xa0] sm:$0xff] 0.0
    %94 = vst [vmem:[#allocation2 + $0xa8] sm:$0xff] 0.0
    %95 = vst [vmem:[#allocation2 + $0xb0] sm:$0xff] 0.0
    %96 = vst [vmem:[#allocation2 + $0xb8] sm:$0xff] 0.0
    %97 = vst [vmem:[#allocation2 + $0xc0] sm:$0xff] 0.0
    %98 = vst [vmem:[#allocation2 + $0xc8] sm:$0xff] 0.0
    %99 = vst [vmem:[#allocation2 + $0xd0] sm:$0xff] 0.0
    %100 = vst [vmem:[#allocation2 + $0xd8] sm:$0xff] 0.0
    %101 = vst [vmem:[#allocation2 + $0xe0] sm:$0xff] 0.0
    %102 = vst [vmem:[#allocation2 + $0xe8] sm:$0xff] 0.0
    %103 = vst [vmem:[#allocation2 + $0xf0] sm:$0xff] 0.0
    %104 = vst [vmem:[#allocation2 + $0xf8] sm:$0xff] 0.0
    %v105 = vld [vmem:[%s0] sm:$0xff]
    %v106 = vld [vmem:[%s0 + $0x8] sm:$0xff]
    %v107 = vld [vmem:[%s0 + $0x10] sm:$0xff]
    %v108 = vld [vmem:[%s0 + $0x18] sm:$0xff]
    %v109 = vld [vmem:[%s0 + $0x20] sm:$0xff]
    %v110 = vld [vmem:[%s0 + $0x28] sm:$0xff]
    %v111 = vld [vmem:[%s0 + $0x30] sm:$0xff]
    %v112 = vld [vmem:[%s0 + $0x38] sm:$0xff]
    %v113 = vld [vmem:[%s0 + $0x40] sm:$0xff]
    %v114 = vld [vmem:[%s0 + $0x48] sm:$0xff]
    %v115 = vld [vmem:[%s0 + $0x50] sm:$0xff]
    %v116 = vld [vmem:[%s0 + $0x58] sm:$0xff]
    %v117 = vld [vmem:[%s0 + $0x60] sm:$0xff]
    %v118 = vld [vmem:[%s0 + $0x68] sm:$0xff]
    %v119 = vld [vmem:[%s0 + $0x70] sm:$0xff]
    %v120 = vld [vmem:[%s0 + $0x78] sm:$0xff]
    %v121 = vld [vmem:[%s0 + $0x80] sm:$0xff]
    %v122 = vld [vmem:[%s0 + $0x88] sm:$0xff]
    %v123 = vld [vmem:[%s0 + $0x90] sm:$0xff]
    %v124 = vld [vmem:[%s0 + $0x98] sm:$0xff]
    %v125 = vld [vmem:[%s0 + $0xa0] sm:$0xff]
    %v126 = vld [vmem:[%s0 + $0xa8] sm:$0xff]
    %v127 = vld [vmem:[%s0 + $0xb0] sm:$0xff]
    %v128 = vld [vmem:[%s0 + $0xb8] sm:$0xff]
    %v129 = vld [vmem:[%s0 + $0xc0] sm:$0xff]
    %v130 = vld [vmem:[%s0 + $0xc8] sm:$0xff]
    %v131 = vld [vmem:[%s0 + $0xd0] sm:$0xff]
    %v132 = vld [vmem:[%s0 + $0xd8] sm:$0xff]
    %v133 = vld [vmem:[%s0 + $0xe0] sm:$0xff]
    %v134 = vld [vmem:[%s0 + $0xe8] sm:$0xff]
    %v135 = vld [vmem:[%s0 + $0xf0] sm:$0xff]
    %v136 = vld [vmem:[%s0 + $0xf8] sm:$0x3f]
    %v137 = vld [vmem:[%s0 + $0x1] sm:$0xff]
    %v138 = vld [vmem:[%s0 + $0x9] sm:$0xff]
    %v139 = vld [vmem:[%s0 + $0x11] sm:$0xff]
    %v140 = vld [vmem:[%s0 + $0x19] sm:$0xff]
    %v141 = vld [vmem:[%s0 + $0x21] sm:$0xff]
    %v142 = vld [vmem:[%s0 + $0x29] sm:$0xff]
    %v143 = vld [vmem:[%s0 + $0x31] sm:$0xff]
    %v144 = vld [vmem:[%s0 + $0x39] sm:$0xff]
    %v145 = vld [vmem:[%s0 + $0x41] sm:$0xff]
    %v146 = vld [vmem:[%s0 + $0x49] sm:$0xff]
    %v147 = vld [vmem:[%s0 + $0x51] sm:$0xff]
    %v148 = vld [vmem:[%s0 + $0x59] sm:$0xff]
    %v149 = vld [vmem:[%s0 + $0x61] sm:$0xff]
    %v150 = vld [vmem:[%s0 + $0x69] sm:$0xff]
    %v151 = vld [vmem:[%s0 + $0x71] sm:$0xff]
    %v152 = vld [vmem:[%s0 + $0x79] sm:$0xff]
    %v153 = vld [vmem:[%s0 + $0x81] sm:$0xff]
    %v154 = vld [vmem:[%s0 + $0x89] sm:$0xff]
    %v155 = vld [vmem:[%s0 + $0x91] sm:$0xff]
    %v156 = vld [vmem:[%s0 + $0x99] sm:$0xff]
    %v157 = vld [vmem:[%s0 + $0xa1] sm:$0xff]
    %v158 = vld [vmem:[%s0 + $0xa9] sm:$0xff]
    %v159 = vld [vmem:[%s0 + $0xb1] sm:$0xff]
    %v160 = vld [vmem:[%s0 + $0xb9] sm:$0xff]
    %v161 = vld [vmem:[%s0 + $0xc1] sm:$0xff]
    %v162 = vld [vmem:[%s0 + $0xc9] sm:$0xff]
    %v163 = vld [vmem:[%s0 + $0xd1] sm:$0xff]
    %v164 = vld [vmem:[%s0 + $0xd9] sm:$0xff]
    %v165 = vld [vmem:[%s0 + $0xe1] sm:$0xff]
    %v166 = vld [vmem:[%s0 + $0xe9] sm:$0xff]
    %v167 = vld [vmem:[%s0 + $0xf1] sm:$0xff]
    %v168 = vld [vmem:[%s0 + $0xf9] sm:$0x3f]
    %v169 = vld [vmem:[%s0 + $0x2] sm:$0xff]
    %v170 = vld [vmem:[%s0 + $0xa] sm:$0xff]
    %v171 = vld [vmem:[%s0 + $0x12] sm:$0xff]
    %v172 = vld [vmem:[%s0 + $0x1a] sm:$0xff]
    %v173 = vld [vmem:[%s0 + $0x22] sm:$0xff]
    %v174 = vld [vmem:[%s0 + $0x2a] sm:$0xff]
    %v175 = vld [vmem:[%s0 + $0x32] sm:$0xff]
    %v176 = vld [vmem:[%s0 + $0x3a] sm:$0xff]
    %v177 = vld [vmem:[%s0 + $0x42] sm:$0xff]
    %v178 = vld [vmem:[%s0 + $0x4a] sm:$0xff]
    %v179 = vld [vmem:[%s0 + $0x52] sm:$0xff]
    %v180 = vld [vmem:[%s0 + $0x5a] sm:$0xff]
    %v181 = vld [vmem:[%s0 + $0x62] sm:$0xff]
    %v182 = vld [vmem:[%s0 + $0x6a] sm:$0xff]
    %v183 = vld [vmem:[%s0 + $0x72] sm:$0xff]
    %v184 = vld [vmem:[%s0 + $0x7a] sm:$0xff]
    %v185 = vld [vmem:[%s0 + $0x82] sm:$0xff]
    %v186 = vld [vmem:[%s0 + $0x8a] sm:$0xff]
    %v187 = vld [vmem:[%s0 + $0x92] sm:$0xff]
    %v188 = vld [vmem:[%s0 + $0x9a] sm:$0xff]
    %v189 = vld [vmem:[%s0 + $0xa2] sm:$0xff]
    %v190 = vld [vmem:[%s0 + $0xaa] sm:$0xff]
    %v191 = vld [vmem:[%s0 + $0xb2] sm:$0xff]
    %v192 = vld [vmem:[%s0 + $0xba] sm:$0xff]
    %v193 = vld [vmem:[%s0 + $0xc2] sm:$0xff]
    %v194 = vld [vmem:[%s0 + $0xca] sm:$0xff]
    %v195 = vld [vmem:[%s0 + $0xd2] sm:$0xff]
    %v196 = vld [vmem:[%s0 + $0xda] sm:$0xff]
    %v197 = vld [vmem:[%s0 + $0xe2] sm:$0xff]
    %v198 = vld [vmem:[%s0 + $0xea] sm:$0xff]
    %v199 = vld [vmem:[%s0 + $0xf2] sm:$0xff]
    %v200 = vld [vmem:[%s0 + $0xfa] sm:$0x3f]
    %v201 = vld [vmem:[#allocation3] sm:$0xff]
    %v202 = vld [vmem:[#allocation3 + $0x8] sm:$0xff]
    %v203 = vld [vmem:[#allocation3 + $0x10] sm:$0xff]
    %v204 = vld [vmem:[#allocation3 + $0x18] sm:$0xff]
    %v205 = vld [vmem:[#allocation3 + $0x20] sm:$0xff]
    %v206 = vld [vmem:[#allocation3 + $0x28] sm:$0xff]
    %v207 = vld [vmem:[#allocation3 + $0x30] sm:$0xff]
    %v208 = vld [vmem:[#allocation3 + $0x38] sm:$0xff]
    %v209 = vld [vmem:[#allocation3 + $0x40] sm:$0xff]
    %v210 = vld [vmem:[#allocation3 + $0x48] sm:$0xff]
    %v211 = vld [vmem:[#allocation3 + $0x50] sm:$0xff]
    %v212 = vld [vmem:[#allocation3 + $0x58] sm:$0xff]
    %v213 = vld [vmem:[#allocation3 + $0x60] sm:$0xff]
    %v214 = vld [vmem:[#allocation3 + $0x68] sm:$0xff]
    %v215 = vld [vmem:[#allocation3 + $0x70] sm:$0xff]
    %v216 = vld [vmem:[#allocation3 + $0x78] sm:$0xff]
    %v217 = vld [vmem:[#allocation3 + $0x80] sm:$0xff]
    %v218 = vld [vmem:[#allocation3 + $0x88] sm:$0xff]
    %v219 = vld [vmem:[#allocation3 + $0x90] sm:$0xff]
    %v220 = vld [vmem:[#allocation3 + $0x98] sm:$0xff]
    %v221 = vld [vmem:[#allocation3 + $0xa0] sm:$0xff]
    %v222 = vld [vmem:[#allocation3 + $0xa8] sm:$0xff]
    %v223 = vld [vmem:[#allocation3 + $0xb0] sm:$0xff]
    %v224 = vld [vmem:[#allocation3 + $0xb8] sm:$0xff]
    %v225 = vld [vmem:[#allocation3 + $0xc0] sm:$0xff]
    %v226 = vld [vmem:[#allocation3 + $0xc8] sm:$0xff]
    %v227 = vld [vmem:[#allocation3 + $0xd0] sm:$0xff]
    %v228 = vld [vmem:[#allocation3 + $0xd8] sm:$0xff]
    %v229 = vld [vmem:[#allocation3 + $0xe0] sm:$0xff]
    %v230 = vld [vmem:[#allocation3 + $0xe8] sm:$0xff]
    %v231 = vld [vmem:[#allocation3 + $0xf0] sm:$0xff]
    %v232 = vld [vmem:[#allocation3 + $0xf8] sm:$0xff]
    %v233 = vld [vmem:[#allocation3 + $0x100] sm:$0xff]
    %v234 = vld [vmem:[#allocation3 + $0x108] sm:$0xff]
    %v235 = vld [vmem:[#allocation3 + $0x110] sm:$0xff]
    %v236 = vld [vmem:[#allocation3 + $0x118] sm:$0xff]
    %v237 = vld [vmem:[#allocation3 + $0x120] sm:$0xff]
    %v238 = vld [vmem:[#allocation3 + $0x128] sm:$0xff]
    %v239 = vld [vmem:[#allocation3 + $0x130] sm:$0xff]
    %v240 = vld [vmem:[#allocation3 + $0x138] sm:$0xff]
    %v241 = vld [vmem:[#allocation3 + $0x140] sm:$0xff]
    %v242 = vld [vmem:[#allocation3 + $0x148] sm:$0xff]
    %v243 = vld [vmem:[#allocation3 + $0x150] sm:$0xff]
    %v244 = vld [vmem:[#allocation3 + $0x158] sm:$0xff]
    %v245 = vld [vmem:[#allocation3 + $0x160] sm:$0xff]
    %v246 = vld [vmem:[#allocation3 + $0x168] sm:$0xff]
    %v247 = vld [vmem:[#allocation3 + $0x170] sm:$0xff]
    %v248 = vld [vmem:[#allocation3 + $0x178] sm:$0xff]
    %v249 = vld [vmem:[%s2] sm:$0x1]
    %v251 = vlaneseq
    %v252 = vshrl.u32 %v251, 7
    %v253 = vsub.s32 0, %v252
    %v254 = vrot.slane %v249, %v253
    %256 = vmatprep.subr.mxu0 0.0
    %257 = vmatpush1.msra.mxu0 %v216
    %258 = vmatprep.subr.mxu0 0.0
    %259 = vmatpush1.msra.mxu0 %v215
    %260 = vmatprep.subr.mxu0 0.0
    %261 = vmatpush1.msra.mxu0 %v214
    %262 = vmatprep.subr.mxu0 0.0
    %263 = vmatpush1.msra.mxu0 %v213
    %264 = vmatprep.subr.mxu0 0.0
    %265 = vmatpush1.msra.mxu0 %v212
    %266 = vmatprep.subr.mxu0 0.0
    %267 = vmatpush1.msra.mxu0 %v211
    %268 = vmatprep.subr.mxu0 0.0
    %269 = vmatpush1.msra.mxu0 %v210
    %270 = vmatprep.subr.mxu0 0.0
    %271 = vmatpush1.msra.mxu0 %v209
    %272 = vmatprep.subr.mxu0 0.0
    %273 = vmatpush1.msra.mxu0 %v208
    %274 = vmatprep.subr.mxu0 0.0
    %275 = vmatpush1.msra.mxu0 %v207
    %276 = vmatprep.subr.mxu0 0.0
    %277 = vmatpush1.msra.mxu0 %v206
    %278 = vmatprep.subr.mxu0 0.0
    %279 = vmatpush1.msra.mxu0 %v205
    %280 = vmatprep.subr.mxu0 0.0
    %281 = vmatpush1.msra.mxu0 %v204
    %282 = vmatprep.subr.mxu0 0.0
    %283 = vmatpush1.msra.mxu0 %v203
    %284 = vmatprep.subr.mxu0 0.0
    %285 = vmatpush1.msra.mxu0 %v202
    %286 = vmatprep.subr.mxu0 0.0
    %287 = vmatpush1.msra.mxu0 %v201
    %288 = vmatprep.subr.mxu0 0.0
    %289 = vmatpush2.msra.mxu0 %v232
    %290 = vmatprep.subr.mxu0 0.0
    %291 = vmatpush2.msra.mxu0 %v231
    %292 = vmatprep.subr.mxu0 0.0
    %293 = vmatpush2.msra.mxu0 %v230
    %294 = vmatprep.subr.mxu0 0.0
    %295 = vmatpush2.msra.mxu0 %v229
    %296 = vmatprep.subr.mxu0 0.0
    %297 = vmatpush2.msra.mxu0 %v228
    %298 = vmatprep.subr.mxu0 0.0
    %299 = vmatpush2.msra.mxu0 %v227
    %300 = vmatprep.subr.mxu0 0.0
    %301 = vmatpush2.msra.mxu0 %v226
    %302 = vmatprep.subr.mxu0 0.0
    %303 = vmatpush2.msra.mxu0 %v225
    %304 = vmatprep.subr.mxu0 0.0
    %305 = vmatpush2.msra.mxu0 %v224
    %306 = vmatprep.subr.mxu0 0.0
    %307 = vmatpush2.msra.mxu0 %v223
    %308 = vmatprep.subr.mxu0 0.0
    %309 = vmatpush2.msra.mxu0 %v222
    %310 = vmatprep.subr.mxu0 0.0
    %311 = vmatpush2.msra.mxu0 %v221
    %312 = vmatprep.subr.mxu0 0.0
    %313 = vmatpush2.msra.mxu0 %v220
    %314 = vmatprep.subr.mxu0 0.0
    %315 = vmatpush2.msra.mxu0 %v219
    %316 = vmatprep.subr.mxu0 0.0
    %317 = vmatpush2.msra.mxu0 %v218
    %318 = vmatprep.subr.mxu0 0.0
    %319 = vmatpush2.msra.mxu0 %v217
    %320 = vmatprep.mubr.f32.mxu0 %v137
    %321 = vmatmul.mubr.f32.gmra.mxu0 %v105
    %v322 = vpop.f32.mrf.mxu0
    %v323 = vadd.f32 %v254, %v322
    %v324 = vpop.f32.mrf.mxu0
    %325 = vmatprep.mubr.f32.mxu0 %v138
    %326 = vmatmul.mubr.f32.gmra.mxu0 %v106
    %v327 = vpop.f32.mrf.mxu0
    %v328 = vadd.f32 %v254, %v327
    %v329 = vpop.f32.mrf.mxu0
    %330 = vmatprep.mubr.f32.mxu0 %v139
    %331 = vmatmul.mubr.f32.gmra.mxu0 %v107
    %v332 = vpop.f32.mrf.mxu0
    %v333 = vadd.f32 %v254, %v332
    %v334 = vpop.f32.mrf.mxu0
    %335 = vmatprep.mubr.f32.mxu0 %v140
    %336 = vmatmul.mubr.f32.gmra.mxu0 %v108
    %v337 = vpop.f32.mrf.mxu0
    %v338 = vadd.f32 %v254, %v337
    %v339 = vpop.f32.mrf.mxu0
    %340 = vmatprep.mubr.f32.mxu0 %v141
    %341 = vmatmul.mubr.f32.gmra.mxu0 %v109
    %v342 = vpop.f32.mrf.mxu0
    %v343 = vadd.f32 %v254, %v342
    %v344 = vpop.f32.mrf.mxu0
    %345 = vmatprep.mubr.f32.mxu0 %v142
    %346 = vmatmul.mubr.f32.gmra.mxu0 %v110
    %v347 = vpop.f32.mrf.mxu0
    %v348 = vadd.f32 %v254, %v347
    %v349 = vpop.f32.mrf.mxu0
    %350 = vmatprep.mubr.f32.mxu0 %v143
    %351 = vmatmul.mubr.f32.gmra.mxu0 %v111
    %v352 = vpop.f32.mrf.mxu0
    %v353 = vadd.f32 %v254, %v352
    %v354 = vpop.f32.mrf.mxu0
    %355 = vmatprep.mubr.f32.mxu0 %v144
    %356 = vmatmul.mubr.f32.gmra.mxu0 %v112
    %v357 = vpop.f32.mrf.mxu0
    %v358 = vadd.f32 %v254, %v357
    %v359 = vpop.f32.mrf.mxu0
    %360 = vmatprep.mubr.f32.mxu0 %v145
    %361 = vmatmul.mubr.f32.gmra.mxu0 %v113
    %v362 = vpop.f32.mrf.mxu0
    %v363 = vadd.f32 %v254, %v362
    %v364 = vpop.f32.mrf.mxu0
    %365 = vmatprep.mubr.f32.mxu0 %v146
    %366 = vmatmul.mubr.f32.gmra.mxu0 %v114
    %v367 = vpop.f32.mrf.mxu0
    %v368 = vadd.f32 %v254, %v367
    %v369 = vpop.f32.mrf.mxu0
    %370 = vmatprep.mubr.f32.mxu0 %v147
    %371 = vmatmul.mubr.f32.gmra.mxu0 %v115
    %v372 = vpop.f32.mrf.mxu0
    %v373 = vadd.f32 %v254, %v372
    %v374 = vpop.f32.mrf.mxu0
    %375 = vmatprep.mubr.f32.mxu0 %v148
    %376 = vmatmul.mubr.f32.gmra.mxu0 %v116
    %v377 = vpop.f32.mrf.mxu0
    %v378 = vadd.f32 %v254, %v377
    %v379 = vpop.f32.mrf.mxu0
    %380 = vmatprep.mubr.f32.mxu0 %v149
    %381 = vmatmul.mubr.f32.gmra.mxu0 %v117
    %v382 = vpop.f32.mrf.mxu0
    %v383 = vadd.f32 %v254, %v382
    %v384 = vpop.f32.mrf.mxu0
    %385 = vmatprep.mubr.f32.mxu0 %v150
    %386 = vmatmul.mubr.f32.gmra.mxu0 %v118
    %v387 = vpop.f32.mrf.mxu0
    %v388 = vadd.f32 %v254, %v387
    %v389 = vpop.f32.mrf.mxu0
    %390 = vmatprep.mubr.f32.mxu0 %v151
    %391 = vmatmul.mubr.f32.gmra.mxu0 %v119
    %v392 = vpop.f32.mrf.mxu0
    %v393 = vadd.f32 %v254, %v392
    %v394 = vpop.f32.mrf.mxu0
    %395 = vmatprep.mubr.f32.mxu0 %v152
    %396 = vmatmul.mubr.f32.gmra.mxu0 %v120
    %v397 = vpop.f32.mrf.mxu0
    %v398 = vadd.f32 %v254, %v397
    %v399 = vpop.f32.mrf.mxu0
    %400 = vmatprep.mubr.f32.mxu0 %v153
    %401 = vmatmul.mubr.f32.gmra.mxu0 %v121
    %v402 = vpop.f32.mrf.mxu0
    %v403 = vadd.f32 %v254, %v402
    %v404 = vpop.f32.mrf.mxu0
    %405 = vmatprep.mubr.f32.mxu0 %v154
    %406 = vmatmul.mubr.f32.gmra.mxu0 %v122
    %v407 = vpop.f32.mrf.mxu0
    %v408 = vadd.f32 %v254, %v407
    %v409 = vpop.f32.mrf.mxu0
    %410 = vmatprep.mubr.f32.mxu0 %v155
    %411 = vmatmul.mubr.f32.gmra.mxu0 %v123
    %v412 = vpop.f32.mrf.mxu0
    %v413 = vadd.f32 %v254, %v412
    %v414 = vpop.f32.mrf.mxu0
    %415 = vmatprep.mubr.f32.mxu0 %v156
    %416 = vmatmul.mubr.f32.gmra.mxu0 %v124
    %v417 = vpop.f32.mrf.mxu0
    %v418 = vadd.f32 %v254, %v417
    %v419 = vpop.f32.mrf.mxu0
    %420 = vmatprep.mubr.f32.mxu0 %v157
    %421 = vmatmul.mubr.f32.gmra.mxu0 %v125
    %v422 = vpop.f32.mrf.mxu0
    %v423 = vadd.f32 %v254, %v422
    %v424 = vpop.f32.mrf.mxu0
    %425 = vmatprep.mubr.f32.mxu0 %v158
    %426 = vmatmul.mubr.f32.gmra.mxu0 %v126
    %v427 = vpop.f32.mrf.mxu0
    %v428 = vadd.f32 %v254, %v427
    %v429 = vpop.f32.mrf.mxu0
    %430 = vmatprep.mubr.f32.mxu0 %v159
    %431 = vmatmul.mubr.f32.gmra.mxu0 %v127
    %v432 = vpop.f32.mrf.mxu0
    %v433 = vadd.f32 %v254, %v432
    %v434 = vpop.f32.mrf.mxu0
    %435 = vmatprep.mubr.f32.mxu0 %v160
    %436 = vmatmul.mubr.f32.gmra.mxu0 %v128
    %v437 = vpop.f32.mrf.mxu0
    %v438 = vadd.f32 %v254, %v437
    %v439 = vpop.f32.mrf.mxu0
    %440 = vmatprep.mubr.f32.mxu0 %v161
    %441 = vmatmul.mubr.f32.gmra.mxu0 %v129
    %v442 = vpop.f32.mrf.mxu0
    %v443 = vadd.f32 %v254, %v442
    %v444 = vpop.f32.mrf.mxu0
    %445 = vmatprep.mubr.f32.mxu0 %v162
    %446 = vmatmul.mubr.f32.gmra.mxu0 %v130
    %v447 = vpop.f32.mrf.mxu0
    %v448 = vadd.f32 %v254, %v447
    %v449 = vpop.f32.mrf.mxu0
    %450 = vmatprep.mubr.f32.mxu0 %v163
    %451 = vmatmul.mubr.f32.gmra.mxu0 %v131
    %v452 = vpop.f32.mrf.mxu0
    %v453 = vadd.f32 %v254, %v452
    %v454 = vpop.f32.mrf.mxu0
    %455 = vmatprep.mubr.f32.mxu0 %v164
    %456 = vmatmul.mubr.f32.gmra.mxu0 %v132
    %v457 = vpop.f32.mrf.mxu0
    %v458 = vadd.f32 %v254, %v457
    %v459 = vpop.f32.mrf.mxu0
    %460 = vmatprep.mubr.f32.mxu0 %v165
    %461 = vmatmul.mubr.f32.gmra.mxu0 %v133
    %v462 = vpop.f32.mrf.mxu0
    %v463 = vadd.f32 %v254, %v462
    %v464 = vpop.f32.mrf.mxu0
    %465 = vmatprep.mubr.f32.mxu0 %v166
    %466 = vmatmul.mubr.f32.gmra.mxu0 %v134
    %v467 = vpop.f32.mrf.mxu0
    %v468 = vadd.f32 %v254, %v467
    %v469 = vpop.f32.mrf.mxu0
    %470 = vmatprep.mubr.f32.mxu0 %v167
    %471 = vmatmul.mubr.f32.gmra.mxu0 %v135
    %v472 = vpop.f32.mrf.mxu0
    %v473 = vadd.f32 %v254, %v472
    %v474 = vpop.f32.mrf.mxu0
    %475 = vmatprep.mubr.f32.mxu0 %v168
    %476 = vmatmul.mubr.f32.gmra.mxu0 %v136
    %v477 = vpop.f32.mrf.mxu0
    %v478 = vadd.f32 %v254, %v477
    %v479 = vpop.f32.mrf.mxu0
    %480 = vdwg.mxu0
    %481 = vmatprep.subr.mxu0 0.0
    %482 = vmatpush1.msra.mxu0 %v248
    %483 = vmatprep.subr.mxu0 0.0
    %484 = vmatpush1.msra.mxu0 %v247
    %485 = vmatprep.subr.mxu0 0.0
    %486 = vmatpush1.msra.mxu0 %v246
    %487 = vmatprep.subr.mxu0 0.0
    %488 = vmatpush1.msra.mxu0 %v245
    %489 = vmatprep.subr.mxu0 0.0
    %490 = vmatpush1.msra.mxu0 %v244
    %491 = vmatprep.subr.mxu0 0.0
    %492 = vmatpush1.msra.mxu0 %v243
    %493 = vmatprep.subr.mxu0 0.0
    %494 = vmatpush1.msra.mxu0 %v242
    %495 = vmatprep.subr.mxu0 0.0
    %496 = vmatpush1.msra.mxu0 %v241
    %497 = vmatprep.subr.mxu0 0.0
    %498 = vmatpush1.msra.mxu0 %v240
    %499 = vmatprep.subr.mxu0 0.0
    %500 = vmatpush1.msra.mxu0 %v239
    %501 = vmatprep.subr.mxu0 0.0
    %502 = vmatpush1.msra.mxu0 %v238
    %503 = vmatprep.subr.mxu0 0.0
    %504 = vmatpush1.msra.mxu0 %v237
    %505 = vmatprep.subr.mxu0 0.0
    %506 = vmatpush1.msra.mxu0 %v236
    %507 = vmatprep.subr.mxu0 0.0
    %508 = vmatpush1.msra.mxu0 %v235
    %509 = vmatprep.subr.mxu0 0.0
    %510 = vmatpush1.msra.mxu0 %v234
    %511 = vmatprep.subr.mxu0 0.0
    %512 = vmatpush1.msra.mxu0 %v233
    %513 = vmatprep.subr.mxu0 0.0
    %514 = vmatpush2.msra.mxu0 0.0
    %515 = vmatprep.subr.mxu0 0.0
    %516 = vmatpush2.msra.mxu0 0.0
    %517 = vmatprep.subr.mxu0 0.0
    %518 = vmatpush2.msra.mxu0 0.0
    %519 = vmatprep.subr.mxu0 0.0
    %520 = vmatpush2.msra.mxu0 0.0
    %521 = vmatprep.subr.mxu0 0.0
    %522 = vmatpush2.msra.mxu0 0.0
    %523 = vmatprep.subr.mxu0 0.0
    %524 = vmatpush2.msra.mxu0 0.0
    %525 = vmatprep.subr.mxu0 0.0
    %526 = vmatpush2.msra.mxu0 0.0
    %527 = vmatprep.subr.mxu0 0.0
    %528 = vmatpush2.msra.mxu0 0.0
    %529 = vmatprep.subr.mxu0 0.0
    %530 = vmatpush2.msra.mxu0 0.0
    %531 = vmatprep.subr.mxu0 0.0
    %532 = vmatpush2.msra.mxu0 0.0
    %533 = vmatprep.subr.mxu0 0.0
    %534 = vmatpush2.msra.mxu0 0.0
    %535 = vmatprep.subr.mxu0 0.0
    %536 = vmatpush2.msra.mxu0 0.0
    %537 = vmatprep.subr.mxu0 0.0
    %538 = vmatpush2.msra.mxu0 0.0
    %539 = vmatprep.subr.mxu0 0.0
    %540 = vmatpush2.msra.mxu0 0.0
    %541 = vmatprep.subr.mxu0 0.0
    %542 = vmatpush2.msra.mxu0 0.0
    %543 = vmatprep.subr.mxu0 0.0
    %544 = vmatpush2.msra.mxu0 0.0
    %545 = vmatprep.mubr.f32.mxu0 0.0
    %546 = vmatmul.mubr.f32.gmra.mxu0 %v169
    %v547 = vpop.f32.mrf.mxu0
    %v548 = vadd.f32 %v323, %v547
    %v549 = vpop.f32.mrf.mxu0
    %550 = vmatprep.mubr.f32.mxu0 0.0
    %551 = vmatmul.mubr.f32.gmra.mxu0 %v170
    %v552 = vpop.f32.mrf.mxu0
    %v553 = vadd.f32 %v328, %v552
    %v554 = vpop.f32.mrf.mxu0
    %555 = vmatprep.mubr.f32.mxu0 0.0
    %556 = vmatmul.mubr.f32.gmra.mxu0 %v171
    %v557 = vpop.f32.mrf.mxu0
    %v558 = vadd.f32 %v333, %v557
    %v559 = vpop.f32.mrf.mxu0
    %560 = vmatprep.mubr.f32.mxu0 0.0
    %561 = vmatmul.mubr.f32.gmra.mxu0 %v172
    %v562 = vpop.f32.mrf.mxu0
    %v563 = vadd.f32 %v338, %v562
    %v564 = vpop.f32.mrf.mxu0
    %565 = vmatprep.mubr.f32.mxu0 0.0
    %566 = vmatmul.mubr.f32.gmra.mxu0 %v173
    %v567 = vpop.f32.mrf.mxu0
    %v568 = vadd.f32 %v343, %v567
    %v569 = vpop.f32.mrf.mxu0
    %570 = vmatprep.mubr.f32.mxu0 0.0
    %571 = vmatmul.mubr.f32.gmra.mxu0 %v174
    %v572 = vpop.f32.mrf.mxu0
    %v573 = vadd.f32 %v348, %v572
    %v574 = vpop.f32.mrf.mxu0
    %575 = vmatprep.mubr.f32.mxu0 0.0
    %576 = vmatmul.mubr.f32.gmra.mxu0 %v175
    %v577 = vpop.f32.mrf.mxu0
    %v578 = vadd.f32 %v353, %v577
    %v579 = vpop.f32.mrf.mxu0
    %580 = vmatprep.mubr.f32.mxu0 0.0
    %581 = vmatmul.mubr.f32.gmra.mxu0 %v176
    %v582 = vpop.f32.mrf.mxu0
    %v583 = vadd.f32 %v358, %v582
    %v584 = vpop.f32.mrf.mxu0
    %585 = vmatprep.mubr.f32.mxu0 0.0
    %586 = vmatmul.mubr.f32.gmra.mxu0 %v177
    %v587 = vpop.f32.mrf.mxu0
    %v588 = vadd.f32 %v363, %v587
    %v589 = vpop.f32.mrf.mxu0
    %590 = vmatprep.mubr.f32.mxu0 0.0
    %591 = vmatmul.mubr.f32.gmra.mxu0 %v178
    %v592 = vpop.f32.mrf.mxu0
    %v593 = vadd.f32 %v368, %v592
    %v594 = vpop.f32.mrf.mxu0
    %595 = vmatprep.mubr.f32.mxu0 0.0
    %596 = vmatmul.mubr.f32.gmra.mxu0 %v179
    %v597 = vpop.f32.mrf.mxu0
    %v598 = vadd.f32 %v373, %v597
    %v599 = vpop.f32.mrf.mxu0
    %600 = vmatprep.mubr.f32.mxu0 0.0
    %601 = vmatmul.mubr.f32.gmra.mxu0 %v180
    %v602 = vpop.f32.mrf.mxu0
    %v603 = vadd.f32 %v378, %v602
    %v604 = vpop.f32.mrf.mxu0
    %605 = vmatprep.mubr.f32.mxu0 0.0
    %606 = vmatmul.mubr.f32.gmra.mxu0 %v181
    %v607 = vpop.f32.mrf.mxu0
    %v608 = vadd.f32 %v383, %v607
    %v609 = vpop.f32.mrf.mxu0
    %610 = vmatprep.mubr.f32.mxu0 0.0
    %611 = vmatmul.mubr.f32.gmra.mxu0 %v182
    %v612 = vpop.f32.mrf.mxu0
    %v613 = vadd.f32 %v388, %v612
    %v614 = vpop.f32.mrf.mxu0
    %615 = vmatprep.mubr.f32.mxu0 0.0
    %616 = vmatmul.mubr.f32.gmra.mxu0 %v183
    %v617 = vpop.f32.mrf.mxu0
    %v618 = vadd.f32 %v393, %v617
    %v619 = vpop.f32.mrf.mxu0
    %620 = vmatprep.mubr.f32.mxu0 0.0
    %621 = vmatmul.mubr.f32.gmra.mxu0 %v184
    %v622 = vpop.f32.mrf.mxu0
    %v623 = vadd.f32 %v398, %v622
    %v624 = vpop.f32.mrf.mxu0
    %625 = vmatprep.mubr.f32.mxu0 0.0
    %626 = vmatmul.mubr.f32.gmra.mxu0 %v185
    %v627 = vpop.f32.mrf.mxu0
    %v628 = vadd.f32 %v403, %v627
    %v629 = vpop.f32.mrf.mxu0
    %630 = vmatprep.mubr.f32.mxu0 0.0
    %631 = vmatmul.mubr.f32.gmra.mxu0 %v186
    %v632 = vpop.f32.mrf.mxu0
    %v633 = vadd.f32 %v408, %v632
    %v634 = vpop.f32.mrf.mxu0
    %635 = vmatprep.mubr.f32.mxu0 0.0
    %636 = vmatmul.mubr.f32.gmra.mxu0 %v187
    %v637 = vpop.f32.mrf.mxu0
    %v638 = vadd.f32 %v413, %v637
    %v639 = vpop.f32.mrf.mxu0
    %640 = vmatprep.mubr.f32.mxu0 0.0
    %641 = vmatmul.mubr.f32.gmra.mxu0 %v188
    %v642 = vpop.f32.mrf.mxu0
    %v643 = vadd.f32 %v418, %v642
    %v644 = vpop.f32.mrf.mxu0
    %645 = vmatprep.mubr.f32.mxu0 0.0
    %646 = vmatmul.mubr.f32.gmra.mxu0 %v189
    %v647 = vpop.f32.mrf.mxu0
    %v648 = vadd.f32 %v423, %v647
    %v649 = vpop.f32.mrf.mxu0
    %650 = vmatprep.mubr.f32.mxu0 0.0
    %651 = vmatmul.mubr.f32.gmra.mxu0 %v190
    %v652 = vpop.f32.mrf.mxu0
    %v653 = vadd.f32 %v428, %v652
    %v654 = vpop.f32.mrf.mxu0
    %655 = vmatprep.mubr.f32.mxu0 0.0
    %656 = vmatmul.mubr.f32.gmra.mxu0 %v191
    %v657 = vpop.f32.mrf.mxu0
    %v658 = vadd.f32 %v433, %v657
    %v659 = vpop.f32.mrf.mxu0
    %660 = vmatprep.mubr.f32.mxu0 0.0
    %661 = vmatmul.mubr.f32.gmra.mxu0 %v192
    %v662 = vpop.f32.mrf.mxu0
    %v663 = vadd.f32 %v438, %v662
    %v664 = vpop.f32.mrf.mxu0
    %665 = vmatprep.mubr.f32.mxu0 0.0
    %666 = vmatmul.mubr.f32.gmra.mxu0 %v193
    %v667 = vpop.f32.mrf.mxu0
    %v668 = vadd.f32 %v443, %v667
    %v669 = vpop.f32.mrf.mxu0
    %670 = vmatprep.mubr.f32.mxu0 0.0
    %671 = vmatmul.mubr.f32.gmra.mxu0 %v194
    %v672 = vpop.f32.mrf.mxu0
    %v673 = vadd.f32 %v448, %v672
    %v674 = vpop.f32.mrf.mxu0
    %675 = vmatprep.mubr.f32.mxu0 0.0
    %676 = vmatmul.mubr.f32.gmra.mxu0 %v195
    %v677 = vpop.f32.mrf.mxu0
    %v678 = vadd.f32 %v453, %v677
    %v679 = vpop.f32.mrf.mxu0
    %680 = vmatprep.mubr.f32.mxu0 0.0
    %681 = vmatmul.mubr.f32.gmra.mxu0 %v196
    %v682 = vpop.f32.mrf.mxu0
    %v683 = vadd.f32 %v458, %v682
    %v684 = vpop.f32.mrf.mxu0
    %685 = vmatprep.mubr.f32.mxu0 0.0
    %686 = vmatmul.mubr.f32.gmra.mxu0 %v197
    %v687 = vpop.f32.mrf.mxu0
    %v688 = vadd.f32 %v463, %v687
    %v689 = vpop.f32.mrf.mxu0
    %690 = vmatprep.mubr.f32.mxu0 0.0
    %691 = vmatmul.mubr.f32.gmra.mxu0 %v198
    %v692 = vpop.f32.mrf.mxu0
    %v693 = vadd.f32 %v468, %v692
    %v694 = vpop.f32.mrf.mxu0
    %695 = vmatprep.mubr.f32.mxu0 0.0
    %696 = vmatmul.mubr.f32.gmra.mxu0 %v199
    %v697 = vpop.f32.mrf.mxu0
    %v698 = vadd.f32 %v473, %v697
    %v699 = vpop.f32.mrf.mxu0
    %700 = vmatprep.mubr.f32.mxu0 0.0
    %701 = vmatmul.mubr.f32.gmra.mxu0 %v200
    %v702 = vpop.f32.mrf.mxu0
    %v703 = vadd.f32 %v478, %v702
    %v704 = vpop.f32.mrf.mxu0
    %705 = vdwg.mxu0
    %v706 = vmin.f32 %v548, 0.0
    %v707 = vmin.f32 %v553, 0.0
    %v708 = vmin.f32 %v558, 0.0
    %v709 = vmin.f32 %v563, 0.0
    %v710 = vmin.f32 %v568, 0.0
    %v711 = vmin.f32 %v573, 0.0
    %v712 = vmin.f32 %v578, 0.0
    %v713 = vmin.f32 %v583, 0.0
    %v714 = vmin.f32 %v588, 0.0
    %v715 = vmin.f32 %v593, 0.0
    %v716 = vmin.f32 %v598, 0.0
    %v717 = vmin.f32 %v603, 0.0
    %v718 = vmin.f32 %v608, 0.0
    %v719 = vmin.f32 %v613, 0.0
    %v720 = vmin.f32 %v618, 0.0
    %v721 = vmin.f32 %v623, 0.0
    %v722 = vmin.f32 %v628, 0.0
    %v723 = vmin.f32 %v633, 0.0
    %v724 = vmin.f32 %v638, 0.0
    %v725 = vmin.f32 %v643, 0.0
    %v726 = vmin.f32 %v648, 0.0
    %v727 = vmin.f32 %v653, 0.0
    %v728 = vmin.f32 %v658, 0.0
    %v729 = vmin.f32 %v663, 0.0
    %v730 = vmin.f32 %v668, 0.0
    %v731 = vmin.f32 %v673, 0.0
    %v732 = vmin.f32 %v678, 0.0
    %v733 = vmin.f32 %v683, 0.0
    %v734 = vmin.f32 %v688, 0.0
    %v735 = vmin.f32 %v693, 0.0
    %v736 = vmin.f32 %v698, 0.0
    %v737 = vmin.f32 %v703, 0.0
    %v738 = vand.u32 2147483647, %v548
    %v739 = vand.u32 2147483647, %v553
    %v740 = vand.u32 2147483647, %v558
    %v741 = vand.u32 2147483647, %v563
    %v742 = vand.u32 2147483647, %v568
    %v743 = vand.u32 2147483647, %v573
    %v744 = vand.u32 2147483647, %v578
    %v745 = vand.u32 2147483647, %v583
    %v746 = vand.u32 2147483647, %v588
    %v747 = vand.u32 2147483647, %v593
    %v748 = vand.u32 2147483647, %v598
    %v749 = vand.u32 2147483647, %v603
    %v750 = vand.u32 2147483647, %v608
    %v751 = vand.u32 2147483647, %v613
    %v752 = vand.u32 2147483647, %v618
    %v753 = vand.u32 2147483647, %v623
    %v754 = vand.u32 2147483647, %v628
    %v755 = vand.u32 2147483647, %v633
    %v756 = vand.u32 2147483647, %v638
    %v757 = vand.u32 2147483647, %v643
    %v758 = vand.u32 2147483647, %v648
    %v759 = vand.u32 2147483647, %v653
    %v760 = vand.u32 2147483647, %v658
    %v761 = vand.u32 2147483647, %v663
    %v762 = vand.u32 2147483647, %v668
    %v763 = vand.u32 2147483647, %v673
    %v764 = vand.u32 2147483647, %v678
    %v765 = vand.u32 2147483647, %v683
    %v766 = vand.u32 2147483647, %v688
    %v767 = vand.u32 2147483647, %v693
    %v768 = vand.u32 2147483647, %v698
    %v769 = vand.u32 2147483647, %v703
    %v770 = vsub.f32 0.0, %v738
    %v771 = vsub.f32 0.0, %v739
    %v772 = vsub.f32 0.0, %v740
    %v773 = vsub.f32 0.0, %v741
    %v774 = vsub.f32 0.0, %v742
    %v775 = vsub.f32 0.0, %v743
    %v776 = vsub.f32 0.0, %v744
    %v777 = vsub.f32 0.0, %v745
    %v778 = vsub.f32 0.0, %v746
    %v779 = vsub.f32 0.0, %v747
    %v780 = vsub.f32 0.0, %v748
    %v781 = vsub.f32 0.0, %v749
    %v782 = vsub.f32 0.0, %v750
    %v783 = vsub.f32 0.0, %v751
    %v784 = vsub.f32 0.0, %v752
    %v785 = vsub.f32 0.0, %v753
    %v786 = vsub.f32 0.0, %v754
    %v787 = vsub.f32 0.0, %v755
    %v788 = vsub.f32 0.0, %v756
    %v789 = vsub.f32 0.0, %v757
    %v790 = vsub.f32 0.0, %v758
    %v791 = vsub.f32 0.0, %v759
    %v792 = vsub.f32 0.0, %v760
    %v793 = vsub.f32 0.0, %v761
    %v794 = vsub.f32 0.0, %v762
    %v795 = vsub.f32 0.0, %v763
    %v796 = vsub.f32 0.0, %v764
    %v797 = vsub.f32 0.0, %v765
    %v798 = vsub.f32 0.0, %v766
    %v799 = vsub.f32 0.0, %v767
    %v800 = vsub.f32 0.0, %v768
    %v801 = vsub.f32 0.0, %v769
    %v802 = vmul.f32 %v770, 1.442695
    %v803 = vpow.pop %v802
    %v804 = vmul.f32 %v771, 1.442695
    %v805 = vpow.pop %v804
    %v806 = vmul.f32 %v772, 1.442695
    %v807 = vpow.pop %v806
    %v808 = vmul.f32 %v773, 1.442695
    %v809 = vpow.pop %v808
    %v810 = vmul.f32 %v774, 1.442695
    %v811 = vpow.pop %v810
    %v812 = vmul.f32 %v775, 1.442695
    %v813 = vpow.pop %v812
    %v814 = vmul.f32 %v776, 1.442695
    %v815 = vpow.pop %v814
    %v816 = vmul.f32 %v777, 1.442695
    %v817 = vpow.pop %v816
    %v818 = vmul.f32 %v778, 1.442695
    %v819 = vpow.pop %v818
    %v820 = vmul.f32 %v779, 1.442695
    %v821 = vpow.pop %v820
    %v822 = vmul.f32 %v780, 1.442695
    %v823 = vpow.pop %v822
    %v824 = vmul.f32 %v781, 1.442695
    %v825 = vpow.pop %v824
    %v826 = vmul.f32 %v782, 1.442695
    %v827 = vpow.pop %v826
    %v828 = vmul.f32 %v783, 1.442695
    %v829 = vpow.pop %v828
    %v830 = vmul.f32 %v784, 1.442695
    %v831 = vpow.pop %v830
    %v832 = vmul.f32 %v785, 1.442695
    %v833 = vpow.pop %v832
    %v834 = vmul.f32 %v786, 1.442695
    %v835 = vpow.pop %v834
    %v836 = vmul.f32 %v787, 1.442695
    %v837 = vpow.pop %v836
    %v838 = vmul.f32 %v788, 1.442695
    %v839 = vpow.pop %v838
    %v840 = vmul.f32 %v789, 1.442695
    %v841 = vpow.pop %v840
    %v842 = vmul.f32 %v790, 1.442695
    %v843 = vpow.pop %v842
    %v844 = vmul.f32 %v791, 1.442695
    %v845 = vpow.pop %v844
    %v846 = vmul.f32 %v792, 1.442695
    %v847 = vpow.pop %v846
    %v848 = vmul.f32 %v793, 1.442695
    %v849 = vpow.pop %v848
    %v850 = vmul.f32 %v794, 1.442695
    %v851 = vpow.pop %v850
    %v852 = vmul.f32 %v795, 1.442695
    %v853 = vpow.pop %v852
    %v854 = vmul.f32 %v796, 1.442695
    %v855 = vpow.pop %v854
    %v856 = vmul.f32 %v797, 1.442695
    %v857 = vpow.pop %v856
    %v858 = vmul.f32 %v798, 1.442695
    %v859 = vpow.pop %v858
    %v860 = vmul.f32 %v799, 1.442695
    %v861 = vpow.pop %v860
    %v862 = vmul.f32 %v800, 1.442695
    %v863 = vpow.pop %v862
    %v864 = vmul.f32 %v801, 1.442695
    %v865 = vpow.pop %v864
    %v866 = vadd.f32 %v803, 1.0
    %v867 = vadd.f32 %v805, 1.0
    %v868 = vadd.f32 %v807, 1.0
    %v869 = vadd.f32 %v809, 1.0
    %v870 = vadd.f32 %v811, 1.0
    %v871 = vadd.f32 %v813, 1.0
    %v872 = vadd.f32 %v815, 1.0
    %v873 = vadd.f32 %v817, 1.0
    %v874 = vadd.f32 %v819, 1.0
    %v875 = vadd.f32 %v821, 1.0
    %v876 = vadd.f32 %v823, 1.0
    %v877 = vadd.f32 %v825, 1.0
    %v878 = vadd.f32 %v827, 1.0
    %v879 = vadd.f32 %v829, 1.0
    %v880 = vadd.f32 %v831, 1.0
    %v881 = vadd.f32 %v833, 1.0
    %v882 = vadd.f32 %v835, 1.0
    %v883 = vadd.f32 %v837, 1.0
    %v884 = vadd.f32 %v839, 1.0
    %v885 = vadd.f32 %v841, 1.0
    %v886 = vadd.f32 %v843, 1.0
    %v887 = vadd.f32 %v845, 1.0
    %v888 = vadd.f32 %v847, 1.0
    %v889 = vadd.f32 %v849, 1.0
    %v890 = vadd.f32 %v851, 1.0
    %v891 = vadd.f32 %v853, 1.0
    %v892 = vadd.f32 %v855, 1.0
    %v893 = vadd.f32 %v857, 1.0
    %v894 = vadd.f32 %v859, 1.0
    %v895 = vadd.f32 %v861, 1.0
    %v896 = vadd.f32 %v863, 1.0
    %v897 = vadd.f32 %v865, 1.0
    %v898 = vlog2.pop %v866
    %v899 = vmul.f32 %v898, 0.6931472
    %v900 = vlog2.pop %v867
    %v901 = vmul.f32 %v900, 0.6931472
    %v902 = vlog2.pop %v868
    %v903 = vmul.f32 %v902, 0.6931472
    %v904 = vlog2.pop %v869
    %v905 = vmul.f32 %v904, 0.6931472
    %v906 = vlog2.pop %v870
    %v907 = vmul.f32 %v906, 0.6931472
    %v908 = vlog2.pop %v871
    %v909 = vmul.f32 %v908, 0.6931472
    %v910 = vlog2.pop %v872
    %v911 = vmul.f32 %v910, 0.6931472
    %v912 = vlog2.pop %v873
    %v913 = vmul.f32 %v912, 0.6931472
    %v914 = vlog2.pop %v874
    %v915 = vmul.f32 %v914, 0.6931472
    %v916 = vlog2.pop %v875
    %v917 = vmul.f32 %v916, 0.6931472
    %v918 = vlog2.pop %v876
    %v919 = vmul.f32 %v918, 0.6931472
    %v920 = vlog2.pop %v877
    %v921 = vmul.f32 %v920, 0.6931472
    %v922 = vlog2.pop %v878
    %v923 = vmul.f32 %v922, 0.6931472
    %v924 = vlog2.pop %v879
    %v925 = vmul.f32 %v924, 0.6931472
    %v926 = vlog2.pop %v880
    %v927 = vmul.f32 %v926, 0.6931472
    %v928 = vlog2.pop %v881
    %v929 = vmul.f32 %v928, 0.6931472
    %v930 = vlog2.pop %v882
    %v931 = vmul.f32 %v930, 0.6931472
    %v932 = vlog2.pop %v883
    %v933 = vmul.f32 %v932, 0.6931472
    %v934 = vlog2.pop %v884
    %v935 = vmul.f32 %v934, 0.6931472
    %v936 = vlog2.pop %v885
    %v937 = vmul.f32 %v936, 0.6931472
    %v938 = vlog2.pop %v886
    %v939 = vmul.f32 %v938, 0.6931472
    %v940 = vlog2.pop %v887
    %v941 = vmul.f32 %v940, 0.6931472
    %v942 = vlog2.pop %v888
    %v943 = vmul.f32 %v942, 0.6931472
    %v944 = vlog2.pop %v889
    %v945 = vmul.f32 %v944, 0.6931472
    %v946 = vlog2.pop %v890
    %v947 = vmul.f32 %v946, 0.6931472
    %v948 = vlog2.pop %v891
    %v949 = vmul.f32 %v948, 0.6931472
    %v950 = vlog2.pop %v892
    %v951 = vmul.f32 %v950, 0.6931472
    %v952 = vlog2.pop %v893
    %v953 = vmul.f32 %v952, 0.6931472
    %v954 = vlog2.pop %v894
    %v955 = vmul.f32 %v954, 0.6931472
    %v956 = vlog2.pop %v895
    %v957 = vmul.f32 %v956, 0.6931472
    %v958 = vlog2.pop %v896
    %v959 = vmul.f32 %v958, 0.6931472
    %v960 = vlog2.pop %v897
    %v961 = vmul.f32 %v960, 0.6931472
    %v962 = vsub.f32 %v706, %v899
    %v963 = vsub.f32 %v707, %v901
    %v964 = vsub.f32 %v708, %v903
    %v965 = vsub.f32 %v709, %v905
    %v966 = vsub.f32 %v710, %v907
    %v967 = vsub.f32 %v711, %v909
    %v968 = vsub.f32 %v712, %v911
    %v969 = vsub.f32 %v713, %v913
    %v970 = vsub.f32 %v714, %v915
    %v971 = vsub.f32 %v715, %v917
    %v972 = vsub.f32 %v716, %v919
    %v973 = vsub.f32 %v717, %v921
    %v974 = vsub.f32 %v718, %v923
    %v975 = vsub.f32 %v719, %v925
    %v976 = vsub.f32 %v720, %v927
    %v977 = vsub.f32 %v721, %v929
    %v978 = vsub.f32 %v722, %v931
    %v979 = vsub.f32 %v723, %v933
    %v980 = vsub.f32 %v724, %v935
    %v981 = vsub.f32 %v725, %v937
    %v982 = vsub.f32 %v726, %v939
    %v983 = vsub.f32 %v727, %v941
    %v984 = vsub.f32 %v728, %v943
    %v985 = vsub.f32 %v729, %v945
    %v986 = vsub.f32 %v730, %v947
    %v987 = vsub.f32 %v731, %v949
    %v988 = vsub.f32 %v732, %v951
    %v989 = vsub.f32 %v733, %v953
    %v990 = vsub.f32 %v734, %v955
    %v991 = vsub.f32 %v735, %v957
    %v992 = vsub.f32 %v736, %v959
    %v993 = vsub.f32 %v737, %v961
    %994 = vst [vmem:[#allocation2] sm:$0xff] %v962
    %995 = vst [vmem:[#allocation2 + $0x8] sm:$0xff] %v963
    %996 = vst [vmem:[#allocation2 + $0x10] sm:$0xff] %v964
    %997 = vst [vmem:[#allocation2 + $0x18] sm:$0xff] %v965
    %998 = vst [vmem:[#allocation2 + $0x20] sm:$0xff] %v966
    %999 = vst [vmem:[#allocation2 + $0x28] sm:$0xff] %v967
    %1000 = vst [vmem:[#allocation2 + $0x30] sm:$0xff] %v968
    %1001 = vst [vmem:[#allocation2 + $0x38] sm:$0xff] %v969
    %1002 = vst [vmem:[#allocation2 + $0x40] sm:$0xff] %v970
    %1003 = vst [vmem:[#allocation2 + $0x48] sm:$0xff] %v971
    %1004 = vst [vmem:[#allocation2 + $0x50] sm:$0xff] %v972
    %1005 = vst [vmem:[#allocation2 + $0x58] sm:$0xff] %v973
    %1006 = vst [vmem:[#allocation2 + $0x60] sm:$0xff] %v974
    %1007 = vst [vmem:[#allocation2 + $0x68] sm:$0xff] %v975
    %1008 = vst [vmem:[#allocation2 + $0x70] sm:$0xff] %v976
    %1009 = vst [vmem:[#allocation2 + $0x78] sm:$0xff] %v977
    %1010 = vst [vmem:[#allocation2 + $0x80] sm:$0xff] %v978
    %1011 = vst [vmem:[#allocation2 + $0x88] sm:$0xff] %v979
    %1012 = vst [vmem:[#allocation2 + $0x90] sm:$0xff] %v980
    %1013 = vst [vmem:[#allocation2 + $0x98] sm:$0xff] %v981
    %1014 = vst [vmem:[#allocation2 + $0xa0] sm:$0xff] %v982
    %1015 = vst [vmem:[#allocation2 + $0xa8] sm:$0xff] %v983
    %1016 = vst [vmem:[#allocation2 + $0xb0] sm:$0xff] %v984
    %1017 = vst [vmem:[#allocation2 + $0xb8] sm:$0xff] %v985
    %1018 = vst [vmem:[#allocation2 + $0xc0] sm:$0xff] %v986
    %1019 = vst [vmem:[#allocation2 + $0xc8] sm:$0xff] %v987
    %1020 = vst [vmem:[#allocation2 + $0xd0] sm:$0xff] %v988
    %1021 = vst [vmem:[#allocation2 + $0xd8] sm:$0xff] %v989
    %1022 = vst [vmem:[#allocation2 + $0xe0] sm:$0xff] %v990
    %1023 = vst [vmem:[#allocation2 + $0xe8] sm:$0xff] %v991
    %1024 = vst [vmem:[#allocation2 + $0xf0] sm:$0xff] %v992
    %1025 = vst [vmem:[#allocation2 + $0xf8] sm:$0x3f] %v993
    %v1026 = vld [vmem:[#allocation2] sm:$0xff]
    %v1027 = vld [vmem:[#allocation2 + $0x8] sm:$0xff]
    %v1028 = vld [vmem:[#allocation2 + $0x10] sm:$0xff]
    %v1029 = vld [vmem:[#allocation2 + $0x18] sm:$0xff]
    %v1030 = vld [vmem:[#allocation2 + $0x20] sm:$0xff]
    %v1031 = vld [vmem:[#allocation2 + $0x28] sm:$0xff]
    %v1032 = vld [vmem:[#allocation2 + $0x30] sm:$0xff]
    %v1033 = vld [vmem:[#allocation2 + $0x38] sm:$0xff]
    %v1034 = vld [vmem:[#allocation2 + $0x40] sm:$0xff]
    %v1035 = vld [vmem:[#allocation2 + $0x48] sm:$0xff]
    %v1036 = vld [vmem:[#allocation2 + $0x50] sm:$0xff]
    %v1037 = vld [vmem:[#allocation2 + $0x58] sm:$0xff]
    %v1038 = vld [vmem:[#allocation2 + $0x60] sm:$0xff]
    %v1039 = vld [vmem:[#allocation2 + $0x68] sm:$0xff]
    %v1040 = vld [vmem:[#allocation2 + $0x70] sm:$0xff]
    %v1041 = vld [vmem:[#allocation2 + $0x78] sm:$0xff]
    %v1042 = vld [vmem:[#allocation2 + $0x80] sm:$0xff]
    %v1043 = vld [vmem:[#allocation2 + $0x88] sm:$0xff]
    %v1044 = vld [vmem:[#allocation2 + $0x90] sm:$0xff]
    %v1045 = vld [vmem:[#allocation2 + $0x98] sm:$0xff]
    %v1046 = vld [vmem:[#allocation2 + $0xa0] sm:$0xff]
    %v1047 = vld [vmem:[#allocation2 + $0xa8] sm:$0xff]
    %v1048 = vld [vmem:[#allocation2 + $0xb0] sm:$0xff]
    %v1049 = vld [vmem:[#allocation2 + $0xb8] sm:$0xff]
    %v1050 = vld [vmem:[#allocation2 + $0xc0] sm:$0xff]
    %v1051 = vld [vmem:[#allocation2 + $0xc8] sm:$0xff]
    %v1052 = vld [vmem:[#allocation2 + $0xd0] sm:$0xff]
    %v1053 = vld [vmem:[#allocation2 + $0xd8] sm:$0xff]
    %v1054 = vld [vmem:[#allocation2 + $0xe0] sm:$0xff]
    %v1055 = vld [vmem:[#allocation2 + $0xe8] sm:$0xff]
    %v1056 = vld [vmem:[#allocation2 + $0xf0] sm:$0xff]
    %v1057 = vld [vmem:[#allocation2 + $0xf8] sm:$0xf]
    %v1058 = vld [vmem:[#allocation2 + $0x1] sm:$0xff]
    %v1059 = vld [vmem:[#allocation2 + $0x9] sm:$0xff]
    %v1060 = vld [vmem:[#allocation2 + $0x11] sm:$0xff]
    %v1061 = vld [vmem:[#allocation2 + $0x19] sm:$0xff]
    %v1062 = vld [vmem:[#allocation2 + $0x21] sm:$0xff]
    %v1063 = vld [vmem:[#allocation2 + $0x29] sm:$0xff]
    %v1064 = vld [vmem:[#allocation2 + $0x31] sm:$0xff]
    %v1065 = vld [vmem:[#allocation2 + $0x39] sm:$0xff]
    %v1066 = vld [vmem:[#allocation2 + $0x41] sm:$0xff]
    %v1067 = vld [vmem:[#allocation2 + $0x49] sm:$0xff]
    %v1068 = vld [vmem:[#allocation2 + $0x51] sm:$0xff]
    %v1069 = vld [vmem:[#allocation2 + $0x59] sm:$0xff]
    %v1070 = vld [vmem:[#allocation2 + $0x61] sm:$0xff]
    %v1071 = vld [vmem:[#allocation2 + $0x69] sm:$0xff]
    %v1072 = vld [vmem:[#allocation2 + $0x71] sm:$0xff]
    %v1073 = vld [vmem:[#allocation2 + $0x79] sm:$0xff]
    %v1074 = vld [vmem:[#allocation2 + $0x81] sm:$0xff]
    %v1075 = vld [vmem:[#allocation2 + $0x89] sm:$0xff]
    %v1076 = vld [vmem:[#allocation2 + $0x91] sm:$0xff]
    %v1077 = vld [vmem:[#allocation2 + $0x99] sm:$0xff]
    %v1078 = vld [vmem:[#allocation2 + $0xa1] sm:$0xff]
    %v1079 = vld [vmem:[#allocation2 + $0xa9] sm:$0xff]
    %v1080 = vld [vmem:[#allocation2 + $0xb1] sm:$0xff]
    %v1081 = vld [vmem:[#allocation2 + $0xb9] sm:$0xff]
    %v1082 = vld [vmem:[#allocation2 + $0xc1] sm:$0xff]
    %v1083 = vld [vmem:[#allocation2 + $0xc9] sm:$0xff]
    %v1084 = vld [vmem:[#allocation2 + $0xd1] sm:$0xff]
    %v1085 = vld [vmem:[#allocation2 + $0xd9] sm:$0xff]
    %v1086 = vld [vmem:[#allocation2 + $0xe1] sm:$0xff]
    %v1087 = vld [vmem:[#allocation2 + $0xe9] sm:$0xff]
    %v1088 = vld [vmem:[#allocation2 + $0xf1] sm:$0xff]
    %v1089 = vld [vmem:[#allocation2 + $0xf9] sm:$0xf]
    %v1090 = vld [vmem:[#allocation2 + $0x2] sm:$0xff]
    %v1091 = vld [vmem:[#allocation2 + $0xa] sm:$0xff]
    %v1092 = vld [vmem:[#allocation2 + $0x12] sm:$0xff]
    %v1093 = vld [vmem:[#allocation2 + $0x1a] sm:$0xff]
    %v1094 = vld [vmem:[#allocation2 + $0x22] sm:$0xff]
    %v1095 = vld [vmem:[#allocation2 + $0x2a] sm:$0xff]
    %v1096 = vld [vmem:[#allocation2 + $0x32] sm:$0xff]
    %v1097 = vld [vmem:[#allocation2 + $0x3a] sm:$0xff]
    %v1098 = vld [vmem:[#allocation2 + $0x42] sm:$0xff]
    %v1099 = vld [vmem:[#allocation2 + $0x4a] sm:$0xff]
    %v1100 = vld [vmem:[#allocation2 + $0x52] sm:$0xff]
    %v1101 = vld [vmem:[#allocation2 + $0x5a] sm:$0xff]
    %v1102 = vld [vmem:[#allocation2 + $0x62] sm:$0xff]
    %v1103 = vld [vmem:[#allocation2 + $0x6a] sm:$0xff]
    %v1104 = vld [vmem:[#allocation2 + $0x72] sm:$0xff]
    %v1105 = vld [vmem:[#allocation2 + $0x7a] sm:$0xff]
    %v1106 = vld [vmem:[#allocation2 + $0x82] sm:$0xff]
    %v1107 = vld [vmem:[#allocation2 + $0x8a] sm:$0xff]
    %v1108 = vld [vmem:[#allocation2 + $0x92] sm:$0xff]
    %v1109 = vld [vmem:[#allocation2 + $0x9a] sm:$0xff]
    %v1110 = vld [vmem:[#allocation2 + $0xa2] sm:$0xff]
    %v1111 = vld [vmem:[#allocation2 + $0xaa] sm:$0xff]
    %v1112 = vld [vmem:[#allocation2 + $0xb2] sm:$0xff]
    %v1113 = vld [vmem:[#allocation2 + $0xba] sm:$0xff]
    %v1114 = vld [vmem:[#allocation2 + $0xc2] sm:$0xff]
    %v1115 = vld [vmem:[#allocation2 + $0xca] sm:$0xff]
    %v1116 = vld [vmem:[#allocation2 + $0xd2] sm:$0xff]
    %v1117 = vld [vmem:[#allocation2 + $0xda] sm:$0xff]
    %v1118 = vld [vmem:[#allocation2 + $0xe2] sm:$0xff]
    %v1119 = vld [vmem:[#allocation2 + $0xea] sm:$0xff]
    %v1120 = vld [vmem:[#allocation2 + $0xf2] sm:$0xff]
    %v1121 = vld [vmem:[#allocation2 + $0xfa] sm:$0xf]
    %v1122 = vld [vmem:[#allocation2 + $0x3] sm:$0xff]
    %v1123 = vld [vmem:[#allocation2 + $0xb] sm:$0xff]
    %v1124 = vld [vmem:[#allocation2 + $0x13] sm:$0xff]
    %v1125 = vld [vmem:[#allocation2 + $0x1b] sm:$0xff]
    %v1126 = vld [vmem:[#allocation2 + $0x23] sm:$0xff]
    %v1127 = vld [vmem:[#allocation2 + $0x2b] sm:$0xff]
    %v1128 = vld [vmem:[#allocation2 + $0x33] sm:$0xff]
    %v1129 = vld [vmem:[#allocation2 + $0x3b] sm:$0xff]
    %v1130 = vld [vmem:[#allocation2 + $0x43] sm:$0xff]
    %v1131 = vld [vmem:[#allocation2 + $0x4b] sm:$0xff]
    %v1132 = vld [vmem:[#allocation2 + $0x53] sm:$0xff]
    %v1133 = vld [vmem:[#allocation2 + $0x5b] sm:$0xff]
    %v1134 = vld [vmem:[#allocation2 + $0x63] sm:$0xff]
    %v1135 = vld [vmem:[#allocation2 + $0x6b] sm:$0xff]
    %v1136 = vld [vmem:[#allocation2 + $0x73] sm:$0xff]
    %v1137 = vld [vmem:[#allocation2 + $0x7b] sm:$0xff]
    %v1138 = vld [vmem:[#allocation2 + $0x83] sm:$0xff]
    %v1139 = vld [vmem:[#allocation2 + $0x8b] sm:$0xff]
    %v1140 = vld [vmem:[#allocation2 + $0x93] sm:$0xff]
    %v1141 = vld [vmem:[#allocation2 + $0x9b] sm:$0xff]
    %v1142 = vld [vmem:[#allocation2 + $0xa3] sm:$0xff]
    %v1143 = vld [vmem:[#allocation2 + $0xab] sm:$0xff]
    %v1144 = vld [vmem:[#allocation2 + $0xb3] sm:$0xff]
    %v1145 = vld [vmem:[#allocation2 + $0xbb] sm:$0xff]
    %v1146 = vld [vmem:[#allocation2 + $0xc3] sm:$0xff]
    %v1147 = vld [vmem:[#allocation2 + $0xcb] sm:$0xff]
    %v1148 = vld [vmem:[#allocation2 + $0xd3] sm:$0xff]
    %v1149 = vld [vmem:[#allocation2 + $0xdb] sm:$0xff]
    %v1150 = vld [vmem:[#allocation2 + $0xe3] sm:$0xff]
    %v1151 = vld [vmem:[#allocation2 + $0xeb] sm:$0xff]
    %v1152 = vld [vmem:[#allocation2 + $0xf3] sm:$0xff]
    %v1153 = vld [vmem:[#allocation2 + $0xfb] sm:$0xf]
    %v1154 = vld [vmem:[#allocation2 + $0x4] sm:$0xff]
    %v1155 = vld [vmem:[#allocation2 + $0xc] sm:$0xff]
    %v1156 = vld [vmem:[#allocation2 + $0x14] sm:$0xff]
    %v1157 = vld [vmem:[#allocation2 + $0x1c] sm:$0xff]
    %v1158 = vld [vmem:[#allocation2 + $0x24] sm:$0xff]
    %v1159 = vld [vmem:[#allocation2 + $0x2c] sm:$0xff]
    %v1160 = vld [vmem:[#allocation2 + $0x34] sm:$0xff]
    %v1161 = vld [vmem:[#allocation2 + $0x3c] sm:$0xff]
    %v1162 = vld [vmem:[#allocation2 + $0x44] sm:$0xff]
    %v1163 = vld [vmem:[#allocation2 + $0x4c] sm:$0xff]
    %v1164 = vld [vmem:[#allocation2 + $0x54] sm:$0xff]
    %v1165 = vld [vmem:[#allocation2 + $0x5c] sm:$0xff]
    %v1166 = vld [vmem:[#allocation2 + $0x64] sm:$0xff]
    %v1167 = vld [vmem:[#allocation2 + $0x6c] sm:$0xff]
    %v1168 = vld [vmem:[#allocation2 + $0x74] sm:$0xff]
    %v1169 = vld [vmem:[#allocation2 + $0x7c] sm:$0xff]
    %v1170 = vld [vmem:[#allocation2 + $0x84] sm:$0xff]
    %v1171 = vld [vmem:[#allocation2 + $0x8c] sm:$0xff]
    %v1172 = vld [vmem:[#allocation2 + $0x94] sm:$0xff]
    %v1173 = vld [vmem:[#allocation2 + $0x9c] sm:$0xff]
    %v1174 = vld [vmem:[#allocation2 + $0xa4] sm:$0xff]
    %v1175 = vld [vmem:[#allocation2 + $0xac] sm:$0xff]
    %v1176 = vld [vmem:[#allocation2 + $0xb4] sm:$0xff]
    %v1177 = vld [vmem:[#allocation2 + $0xbc] sm:$0xff]
    %v1178 = vld [vmem:[#allocation2 + $0xc4] sm:$0xff]
    %v1179 = vld [vmem:[#allocation2 + $0xcc] sm:$0xff]
    %v1180 = vld [vmem:[#allocation2 + $0xd4] sm:$0xff]
    %v1181 = vld [vmem:[#allocation2 + $0xdc] sm:$0xff]
    %v1182 = vld [vmem:[#allocation2 + $0xe4] sm:$0xff]
    %v1183 = vld [vmem:[#allocation2 + $0xec] sm:$0xff]
    %v1184 = vld [vmem:[#allocation2 + $0xf4] sm:$0xff]
    %v1185 = vld [vmem:[#allocation2 + $0xfc] sm:$0xf]
    %v1186 = vld [vmem:[%s3] sm:$0xff]
    %v1187 = vld [vmem:[%s3 + $0x8] sm:$0xff]
    %v1188 = vld [vmem:[%s3 + $0x10] sm:$0xff]
    %v1189 = vld [vmem:[%s3 + $0x18] sm:$0xff]
    %v1190 = vld [vmem:[%s3 + $0x20] sm:$0xff]
    %v1191 = vld [vmem:[%s3 + $0x28] sm:$0xff]
    %v1192 = vld [vmem:[%s3 + $0x30] sm:$0xff]
    %v1193 = vld [vmem:[%s3 + $0x38] sm:$0xff]
    %v1194 = vld [vmem:[%s3 + $0x40] sm:$0xff]
    %v1195 = vld [vmem:[%s3 + $0x48] sm:$0xff]
    %v1196 = vld [vmem:[%s3 + $0x50] sm:$0xff]
    %v1197 = vld [vmem:[%s3 + $0x58] sm:$0xff]
    %v1198 = vld [vmem:[%s3 + $0x60] sm:$0xff]
    %v1199 = vld [vmem:[%s3 + $0x68] sm:$0xff]
    %v1200 = vld [vmem:[%s3 + $0x70] sm:$0xff]
    %v1201 = vld [vmem:[%s3 + $0x78] sm:$0xff]
    %v1202 = vld [vmem:[%s3 + $0x80] sm:$0xff]
    %v1203 = vld [vmem:[%s3 + $0x88] sm:$0xff]
    %v1204 = vld [vmem:[%s3 + $0x90] sm:$0xff]
    %v1205 = vld [vmem:[%s3 + $0x98] sm:$0xff]
    %v1206 = vld [vmem:[%s3 + $0xa0] sm:$0xff]
    %v1207 = vld [vmem:[%s3 + $0xa8] sm:$0xff]
    %v1208 = vld [vmem:[%s3 + $0xb0] sm:$0xff]
    %v1209 = vld [vmem:[%s3 + $0xb8] sm:$0xff]
    %v1210 = vld [vmem:[%s3 + $0xc0] sm:$0xff]
    %v1211 = vld [vmem:[%s3 + $0xc8] sm:$0xff]
    %v1212 = vld [vmem:[%s3 + $0xd0] sm:$0xff]
    %v1213 = vld [vmem:[%s3 + $0xd8] sm:$0xff]
    %v1214 = vld [vmem:[%s3 + $0xe0] sm:$0xff]
    %v1215 = vld [vmem:[%s3 + $0xe8] sm:$0xff]
    %v1216 = vld [vmem:[%s3 + $0xf0] sm:$0xff]
    %v1217 = vld [vmem:[%s3 + $0xf8] sm:$0xff]
    %v1218 = vld [vmem:[%s3 + $0x100] sm:$0xff]
    %v1219 = vld [vmem:[%s3 + $0x108] sm:$0xff]
    %v1220 = vld [vmem:[%s3 + $0x110] sm:$0xff]
    %v1221 = vld [vmem:[%s3 + $0x118] sm:$0xff]
    %v1222 = vld [vmem:[%s3 + $0x120] sm:$0xff]
    %v1223 = vld [vmem:[%s3 + $0x128] sm:$0xff]
    %v1224 = vld [vmem:[%s3 + $0x130] sm:$0xff]
    %v1225 = vld [vmem:[%s3 + $0x138] sm:$0xff]
    %v1226 = vld [vmem:[%s3 + $0x140] sm:$0xff]
    %v1227 = vld [vmem:[%s3 + $0x148] sm:$0xff]
    %v1228 = vld [vmem:[%s3 + $0x150] sm:$0xff]
    %v1229 = vld [vmem:[%s3 + $0x158] sm:$0xff]
    %v1230 = vld [vmem:[%s3 + $0x160] sm:$0xff]
    %v1231 = vld [vmem:[%s3 + $0x168] sm:$0xff]
    %v1232 = vld [vmem:[%s3 + $0x170] sm:$0xff]
    %v1233 = vld [vmem:[%s3 + $0x178] sm:$0xff]
    %v1234 = vld [vmem:[%s3 + $0x180] sm:$0xff]
    %v1235 = vld [vmem:[%s3 + $0x188] sm:$0xff]
    %v1236 = vld [vmem:[%s3 + $0x190] sm:$0xff]
    %v1237 = vld [vmem:[%s3 + $0x198] sm:$0xff]
    %v1238 = vld [vmem:[%s3 + $0x1a0] sm:$0xff]
    %v1239 = vld [vmem:[%s3 + $0x1a8] sm:$0xff]
    %v1240 = vld [vmem:[%s3 + $0x1b0] sm:$0xff]
    %v1241 = vld [vmem:[%s3 + $0x1b8] sm:$0xff]
    %v1242 = vld [vmem:[%s3 + $0x1c0] sm:$0xff]
    %v1243 = vld [vmem:[%s3 + $0x1c8] sm:$0xff]
    %v1244 = vld [vmem:[%s3 + $0x1d0] sm:$0xff]
    %v1245 = vld [vmem:[%s3 + $0x1d8] sm:$0xff]
    %v1246 = vld [vmem:[%s3 + $0x1e0] sm:$0xff]
    %v1247 = vld [vmem:[%s3 + $0x1e8] sm:$0xff]
    %v1248 = vld [vmem:[%s3 + $0x1f0] sm:$0xff]
    %v1249 = vld [vmem:[%s3 + $0x1f8] sm:$0xff]
    %v1250 = vld [vmem:[%s3 + $0x200] sm:$0xff]
    %v1251 = vld [vmem:[%s3 + $0x208] sm:$0xff]
    %v1252 = vld [vmem:[%s3 + $0x210] sm:$0xff]
    %v1253 = vld [vmem:[%s3 + $0x218] sm:$0xff]
    %v1254 = vld [vmem:[%s3 + $0x220] sm:$0xff]
    %v1255 = vld [vmem:[%s3 + $0x228] sm:$0xff]
    %v1256 = vld [vmem:[%s3 + $0x230] sm:$0xff]
    %v1257 = vld [vmem:[%s3 + $0x238] sm:$0xff]
    %v1258 = vld [vmem:[%s3 + $0x240] sm:$0xff]
    %v1259 = vld [vmem:[%s3 + $0x248] sm:$0xff]
    %v1260 = vld [vmem:[%s3 + $0x250] sm:$0xff]
    %v1261 = vld [vmem:[%s3 + $0x258] sm:$0xff]
    %v1262 = vld [vmem:[%s3 + $0x260] sm:$0xff]
    %v1263 = vld [vmem:[%s3 + $0x268] sm:$0xff]
    %v1264 = vld [vmem:[%s3 + $0x270] sm:$0xff]
    %v1265 = vld [vmem:[%s3 + $0x278] sm:$0xff]
    %v1266 = vld [vmem:[%s4] sm:$0x1]
    %v1268 = vlaneseq
    %v1269 = vshrl.u32 %v1268, 7
    %v1270 = vsub.s32 0, %v1269
    %v1271 = vrot.slane %v1266, %v1270
    %1273 = vmatprep.subr.mxu0 0.0
    %1274 = vmatpush1.msra.mxu0 %v1201
    %1275 = vmatprep.subr.mxu0 0.0
    %1276 = vmatpush1.msra.mxu0 %v1200
    %1277 = vmatprep.subr.mxu0 0.0
    %1278 = vmatpush1.msra.mxu0 %v1199
    %1279 = vmatprep.subr.mxu0 0.0
    %1280 = vmatpush1.msra.mxu0 %v1198
    %1281 = vmatprep.subr.mxu0 0.0
    %1282 = vmatpush1.msra.mxu0 %v1197
    %1283 = vmatprep.subr.mxu0 0.0
    %1284 = vmatpush1.msra.mxu0 %v1196
    %1285 = vmatprep.subr.mxu0 0.0
    %1286 = vmatpush1.msra.mxu0 %v1195
    %1287 = vmatprep.subr.mxu0 0.0
    %1288 = vmatpush1.msra.mxu0 %v1194
    %1289 = vmatprep.subr.mxu0 0.0
    %1290 = vmatpush1.msra.mxu0 %v1193
    %1291 = vmatprep.subr.mxu0 0.0
    %1292 = vmatpush1.msra.mxu0 %v1192
    %1293 = vmatprep.subr.mxu0 0.0
    %1294 = vmatpush1.msra.mxu0 %v1191
    %1295 = vmatprep.subr.mxu0 0.0
    %1296 = vmatpush1.msra.mxu0 %v1190
    %1297 = vmatprep.subr.mxu0 0.0
    %1298 = vmatpush1.msra.mxu0 %v1189
    %1299 = vmatprep.subr.mxu0 0.0
    %1300 = vmatpush1.msra.mxu0 %v1188
    %1301 = vmatprep.subr.mxu0 0.0
    %1302 = vmatpush1.msra.mxu0 %v1187
    %1303 = vmatprep.subr.mxu0 0.0
    %1304 = vmatpush1.msra.mxu0 %v1186
    %1305 = vmatprep.subr.mxu0 0.0
    %1306 = vmatpush2.msra.mxu0 %v1217
    %1307 = vmatprep.subr.mxu0 0.0
    %1308 = vmatpush2.msra.mxu0 %v1216
    %1309 = vmatprep.subr.mxu0 0.0
    %1310 = vmatpush2.msra.mxu0 %v1215
    %1311 = vmatprep.subr.mxu0 0.0
    %1312 = vmatpush2.msra.mxu0 %v1214
    %1313 = vmatprep.subr.mxu0 0.0
    %1314 = vmatpush2.msra.mxu0 %v1213
    %1315 = vmatprep.subr.mxu0 0.0
    %1316 = vmatpush2.msra.mxu0 %v1212
    %1317 = vmatprep.subr.mxu0 0.0
    %1318 = vmatpush2.msra.mxu0 %v1211
    %1319 = vmatprep.subr.mxu0 0.0
    %1320 = vmatpush2.msra.mxu0 %v1210
    %1321 = vmatprep.subr.mxu0 0.0
    %1322 = vmatpush2.msra.mxu0 %v1209
    %1323 = vmatprep.subr.mxu0 0.0
    %1324 = vmatpush2.msra.mxu0 %v1208
    %1325 = vmatprep.subr.mxu0 0.0
    %1326 = vmatpush2.msra.mxu0 %v1207
    %1327 = vmatprep.subr.mxu0 0.0
    %1328 = vmatpush2.msra.mxu0 %v1206
    %1329 = vmatprep.subr.mxu0 0.0
    %1330 = vmatpush2.msra.mxu0 %v1205
    %1331 = vmatprep.subr.mxu0 0.0
    %1332 = vmatpush2.msra.mxu0 %v1204
    %1333 = vmatprep.subr.mxu0 0.0
    %1334 = vmatpush2.msra.mxu0 %v1203
    %1335 = vmatprep.subr.mxu0 0.0
    %1336 = vmatpush2.msra.mxu0 %v1202
    %1337 = vmatprep.mubr.f32.mxu0 %v1058
    %1338 = vmatmul.mubr.f32.gmra.mxu0 %v1026
    %v1339 = vpop.f32.mrf.mxu0
    %v1340 = vadd.f32 %v1271, %v1339
    %v1341 = vpop.f32.mrf.mxu0
    %1342 = vmatprep.mubr.f32.mxu0 %v1059
    %1343 = vmatmul.mubr.f32.gmra.mxu0 %v1027
    %v1344 = vpop.f32.mrf.mxu0
    %v1345 = vadd.f32 %v1271, %v1344
    %v1346 = vpop.f32.mrf.mxu0
    %1347 = vmatprep.mubr.f32.mxu0 %v1060
    %1348 = vmatmul.mubr.f32.gmra.mxu0 %v1028
    %v1349 = vpop.f32.mrf.mxu0
    %v1350 = vadd.f32 %v1271, %v1349
    %v1351 = vpop.f32.mrf.mxu0
    %1352 = vmatprep.mubr.f32.mxu0 %v1061
    %1353 = vmatmul.mubr.f32.gmra.mxu0 %v1029
    %v1354 = vpop.f32.mrf.mxu0
    %v1355 = vadd.f32 %v1271, %v1354
    %v1356 = vpop.f32.mrf.mxu0
    %1357 = vmatprep.mubr.f32.mxu0 %v1062
    %1358 = vmatmul.mubr.f32.gmra.mxu0 %v1030
    %v1359 = vpop.f32.mrf.mxu0
    %v1360 = vadd.f32 %v1271, %v1359
    %v1361 = vpop.f32.mrf.mxu0
    %1362 = vmatprep.mubr.f32.mxu0 %v1063
    %1363 = vmatmul.mubr.f32.gmra.mxu0 %v1031
    %v1364 = vpop.f32.mrf.mxu0
    %v1365 = vadd.f32 %v1271, %v1364
    %v1366 = vpop.f32.mrf.mxu0
    %1367 = vmatprep.mubr.f32.mxu0 %v1064
    %1368 = vmatmul.mubr.f32.gmra.mxu0 %v1032
    %v1369 = vpop.f32.mrf.mxu0
    %v1370 = vadd.f32 %v1271, %v1369
    %v1371 = vpop.f32.mrf.mxu0
    %1372 = vmatprep.mubr.f32.mxu0 %v1065
    %1373 = vmatmul.mubr.f32.gmra.mxu0 %v1033
    %v1374 = vpop.f32.mrf.mxu0
    %v1375 = vadd.f32 %v1271, %v1374
    %v1376 = vpop.f32.mrf.mxu0
    %1377 = vmatprep.mubr.f32.mxu0 %v1066
    %1378 = vmatmul.mubr.f32.gmra.mxu0 %v1034
    %v1379 = vpop.f32.mrf.mxu0
    %v1380 = vadd.f32 %v1271, %v1379
    %v1381 = vpop.f32.mrf.mxu0
    %1382 = vmatprep.mubr.f32.mxu0 %v1067
    %1383 = vmatmul.mubr.f32.gmra.mxu0 %v1035
    %v1384 = vpop.f32.mrf.mxu0
    %v1385 = vadd.f32 %v1271, %v1384
    %v1386 = vpop.f32.mrf.mxu0
    %1387 = vmatprep.mubr.f32.mxu0 %v1068
    %1388 = vmatmul.mubr.f32.gmra.mxu0 %v1036
    %v1389 = vpop.f32.mrf.mxu0
    %v1390 = vadd.f32 %v1271, %v1389
    %v1391 = vpop.f32.mrf.mxu0
    %1392 = vmatprep.mubr.f32.mxu0 %v1069
    %1393 = vmatmul.mubr.f32.gmra.mxu0 %v1037
    %v1394 = vpop.f32.mrf.mxu0
    %v1395 = vadd.f32 %v1271, %v1394
    %v1396 = vpop.f32.mrf.mxu0
    %1397 = vmatprep.mubr.f32.mxu0 %v1070
    %1398 = vmatmul.mubr.f32.gmra.mxu0 %v1038
    %v1399 = vpop.f32.mrf.mxu0
    %v1400 = vadd.f32 %v1271, %v1399
    %v1401 = vpop.f32.mrf.mxu0
    %1402 = vmatprep.mubr.f32.mxu0 %v1071
    %1403 = vmatmul.mubr.f32.gmra.mxu0 %v1039
    %v1404 = vpop.f32.mrf.mxu0
    %v1405 = vadd.f32 %v1271, %v1404
    %v1406 = vpop.f32.mrf.mxu0
    %1407 = vmatprep.mubr.f32.mxu0 %v1072
    %1408 = vmatmul.mubr.f32.gmra.mxu0 %v1040
    %v1409 = vpop.f32.mrf.mxu0
    %v1410 = vadd.f32 %v1271, %v1409
    %v1411 = vpop.f32.mrf.mxu0
    %1412 = vmatprep.mubr.f32.mxu0 %v1073
    %1413 = vmatmul.mubr.f32.gmra.mxu0 %v1041
    %v1414 = vpop.f32.mrf.mxu0
    %v1415 = vadd.f32 %v1271, %v1414
    %v1416 = vpop.f32.mrf.mxu0
    %1417 = vmatprep.mubr.f32.mxu0 %v1074
    %1418 = vmatmul.mubr.f32.gmra.mxu0 %v1042
    %v1419 = vpop.f32.mrf.mxu0
    %v1420 = vadd.f32 %v1271, %v1419
    %v1421 = vpop.f32.mrf.mxu0
    %1422 = vmatprep.mubr.f32.mxu0 %v1075
    %1423 = vmatmul.mubr.f32.gmra.mxu0 %v1043
    %v1424 = vpop.f32.mrf.mxu0
    %v1425 = vadd.f32 %v1271, %v1424
    %v1426 = vpop.f32.mrf.mxu0
    %1427 = vmatprep.mubr.f32.mxu0 %v1076
    %1428 = vmatmul.mubr.f32.gmra.mxu0 %v1044
    %v1429 = vpop.f32.mrf.mxu0
    %v1430 = vadd.f32 %v1271, %v1429
    %v1431 = vpop.f32.mrf.mxu0
    %1432 = vmatprep.mubr.f32.mxu0 %v1077
    %1433 = vmatmul.mubr.f32.gmra.mxu0 %v1045
    %v1434 = vpop.f32.mrf.mxu0
    %v1435 = vadd.f32 %v1271, %v1434
    %v1436 = vpop.f32.mrf.mxu0
    %1437 = vmatprep.mubr.f32.mxu0 %v1078
    %1438 = vmatmul.mubr.f32.gmra.mxu0 %v1046
    %v1439 = vpop.f32.mrf.mxu0
    %v1440 = vadd.f32 %v1271, %v1439
    %v1441 = vpop.f32.mrf.mxu0
    %1442 = vmatprep.mubr.f32.mxu0 %v1079
    %1443 = vmatmul.mubr.f32.gmra.mxu0 %v1047
    %v1444 = vpop.f32.mrf.mxu0
    %v1445 = vadd.f32 %v1271, %v1444
    %v1446 = vpop.f32.mrf.mxu0
    %1447 = vmatprep.mubr.f32.mxu0 %v1080
    %1448 = vmatmul.mubr.f32.gmra.mxu0 %v1048
    %v1449 = vpop.f32.mrf.mxu0
    %v1450 = vadd.f32 %v1271, %v1449
    %v1451 = vpop.f32.mrf.mxu0
    %1452 = vmatprep.mubr.f32.mxu0 %v1081
    %1453 = vmatmul.mubr.f32.gmra.mxu0 %v1049
    %v1454 = vpop.f32.mrf.mxu0
    %v1455 = vadd.f32 %v1271, %v1454
    %v1456 = vpop.f32.mrf.mxu0
    %1457 = vmatprep.mubr.f32.mxu0 %v1082
    %1458 = vmatmul.mubr.f32.gmra.mxu0 %v1050
    %v1459 = vpop.f32.mrf.mxu0
    %v1460 = vadd.f32 %v1271, %v1459
    %v1461 = vpop.f32.mrf.mxu0
    %1462 = vmatprep.mubr.f32.mxu0 %v1083
    %1463 = vmatmul.mubr.f32.gmra.mxu0 %v1051
    %v1464 = vpop.f32.mrf.mxu0
    %v1465 = vadd.f32 %v1271, %v1464
    %v1466 = vpop.f32.mrf.mxu0
    %1467 = vmatprep.mubr.f32.mxu0 %v1084
    %1468 = vmatmul.mubr.f32.gmra.mxu0 %v1052
    %v1469 = vpop.f32.mrf.mxu0
    %v1470 = vadd.f32 %v1271, %v1469
    %v1471 = vpop.f32.mrf.mxu0
    %1472 = vmatprep.mubr.f32.mxu0 %v1085
    %1473 = vmatmul.mubr.f32.gmra.mxu0 %v1053
    %v1474 = vpop.f32.mrf.mxu0
    %v1475 = vadd.f32 %v1271, %v1474
    %v1476 = vpop.f32.mrf.mxu0
    %1477 = vmatprep.mubr.f32.mxu0 %v1086
    %1478 = vmatmul.mubr.f32.gmra.mxu0 %v1054
    %v1479 = vpop.f32.mrf.mxu0
    %v1480 = vadd.f32 %v1271, %v1479
    %v1481 = vpop.f32.mrf.mxu0
    %1482 = vmatprep.mubr.f32.mxu0 %v1087
    %1483 = vmatmul.mubr.f32.gmra.mxu0 %v1055
    %v1484 = vpop.f32.mrf.mxu0
    %v1485 = vadd.f32 %v1271, %v1484
    %v1486 = vpop.f32.mrf.mxu0
    %1487 = vmatprep.mubr.f32.mxu0 %v1088
    %1488 = vmatmul.mubr.f32.gmra.mxu0 %v1056
    %v1489 = vpop.f32.mrf.mxu0
    %v1490 = vadd.f32 %v1271, %v1489
    %v1491 = vpop.f32.mrf.mxu0
    %1492 = vmatprep.mubr.f32.mxu0 %v1089
    %1493 = vmatmul.mubr.f32.gmra.mxu0 %v1057
    %v1494 = vpop.f32.mrf.mxu0
    %v1495 = vadd.f32 %v1271, %v1494
    %v1496 = vpop.f32.mrf.mxu0
    %1497 = vdwg.mxu0
    %1498 = vmatprep.subr.mxu0 0.0
    %1499 = vmatpush1.msra.mxu0 %v1233
    %1500 = vmatprep.subr.mxu0 0.0
    %1501 = vmatpush1.msra.mxu0 %v1232
    %1502 = vmatprep.subr.mxu0 0.0
    %1503 = vmatpush1.msra.mxu0 %v1231
    %1504 = vmatprep.subr.mxu0 0.0
    %1505 = vmatpush1.msra.mxu0 %v1230
    %1506 = vmatprep.subr.mxu0 0.0
    %1507 = vmatpush1.msra.mxu0 %v1229
    %1508 = vmatprep.subr.mxu0 0.0
    %1509 = vmatpush1.msra.mxu0 %v1228
    %1510 = vmatprep.subr.mxu0 0.0
    %1511 = vmatpush1.msra.mxu0 %v1227
    %1512 = vmatprep.subr.mxu0 0.0
    %1513 = vmatpush1.msra.mxu0 %v1226
    %1514 = vmatprep.subr.mxu0 0.0
    %1515 = vmatpush1.msra.mxu0 %v1225
    %1516 = vmatprep.subr.mxu0 0.0
    %1517 = vmatpush1.msra.mxu0 %v1224
    %1518 = vmatprep.subr.mxu0 0.0
    %1519 = vmatpush1.msra.mxu0 %v1223
    %1520 = vmatprep.subr.mxu0 0.0
    %1521 = vmatpush1.msra.mxu0 %v1222
    %1522 = vmatprep.subr.mxu0 0.0
    %1523 = vmatpush1.msra.mxu0 %v1221
    %1524 = vmatprep.subr.mxu0 0.0
    %1525 = vmatpush1.msra.mxu0 %v1220
    %1526 = vmatprep.subr.mxu0 0.0
    %1527 = vmatpush1.msra.mxu0 %v1219
    %1528 = vmatprep.subr.mxu0 0.0
    %1529 = vmatpush1.msra.mxu0 %v1218
    %1530 = vmatprep.subr.mxu0 0.0
    %1531 = vmatpush2.msra.mxu0 %v1249
    %1532 = vmatprep.subr.mxu0 0.0
    %1533 = vmatpush2.msra.mxu0 %v1248
    %1534 = vmatprep.subr.mxu0 0.0
    %1535 = vmatpush2.msra.mxu0 %v1247
    %1536 = vmatprep.subr.mxu0 0.0
    %1537 = vmatpush2.msra.mxu0 %v1246
    %1538 = vmatprep.subr.mxu0 0.0
    %1539 = vmatpush2.msra.mxu0 %v1245
    %1540 = vmatprep.subr.mxu0 0.0
    %1541 = vmatpush2.msra.mxu0 %v1244
    %1542 = vmatprep.subr.mxu0 0.0
    %1543 = vmatpush2.msra.mxu0 %v1243
    %1544 = vmatprep.subr.mxu0 0.0
    %1545 = vmatpush2.msra.mxu0 %v1242
    %1546 = vmatprep.subr.mxu0 0.0
    %1547 = vmatpush2.msra.mxu0 %v1241
    %1548 = vmatprep.subr.mxu0 0.0
    %1549 = vmatpush2.msra.mxu0 %v1240
    %1550 = vmatprep.subr.mxu0 0.0
    %1551 = vmatpush2.msra.mxu0 %v1239
    %1552 = vmatprep.subr.mxu0 0.0
    %1553 = vmatpush2.msra.mxu0 %v1238
    %1554 = vmatprep.subr.mxu0 0.0
    %1555 = vmatpush2.msra.mxu0 %v1237
    %1556 = vmatprep.subr.mxu0 0.0
    %1557 = vmatpush2.msra.mxu0 %v1236
    %1558 = vmatprep.subr.mxu0 0.0
    %1559 = vmatpush2.msra.mxu0 %v1235
    %1560 = vmatprep.subr.mxu0 0.0
    %1561 = vmatpush2.msra.mxu0 %v1234
    %1562 = vmatprep.mubr.f32.mxu0 %v1122
    %1563 = vmatmul.mubr.f32.gmra.mxu0 %v1090
    %v1564 = vpop.f32.mrf.mxu0
    %v1565 = vadd.f32 %v1340, %v1564
    %v1566 = vpop.f32.mrf.mxu0
    %1567 = vmatprep.mubr.f32.mxu0 %v1123
    %1568 = vmatmul.mubr.f32.gmra.mxu0 %v1091
    %v1569 = vpop.f32.mrf.mxu0
    %v1570 = vadd.f32 %v1345, %v1569
    %v1571 = vpop.f32.mrf.mxu0
    %1572 = vmatprep.mubr.f32.mxu0 %v1124
    %1573 = vmatmul.mubr.f32.gmra.mxu0 %v1092
    %v1574 = vpop.f32.mrf.mxu0
    %v1575 = vadd.f32 %v1350, %v1574
    %v1576 = vpop.f32.mrf.mxu0
    %1577 = vmatprep.mubr.f32.mxu0 %v1125
    %1578 = vmatmul.mubr.f32.gmra.mxu0 %v1093
    %v1579 = vpop.f32.mrf.mxu0
    %v1580 = vadd.f32 %v1355, %v1579
    %v1581 = vpop.f32.mrf.mxu0
    %1582 = vmatprep.mubr.f32.mxu0 %v1126
    %1583 = vmatmul.mubr.f32.gmra.mxu0 %v1094
    %v1584 = vpop.f32.mrf.mxu0
    %v1585 = vadd.f32 %v1360, %v1584
    %v1586 = vpop.f32.mrf.mxu0
    %1587 = vmatprep.mubr.f32.mxu0 %v1127
    %1588 = vmatmul.mubr.f32.gmra.mxu0 %v1095
    %v1589 = vpop.f32.mrf.mxu0
    %v1590 = vadd.f32 %v1365, %v1589
    %v1591 = vpop.f32.mrf.mxu0
    %1592 = vmatprep.mubr.f32.mxu0 %v1128
    %1593 = vmatmul.mubr.f32.gmra.mxu0 %v1096
    %v1594 = vpop.f32.mrf.mxu0
    %v1595 = vadd.f32 %v1370, %v1594
    %v1596 = vpop.f32.mrf.mxu0
    %1597 = vmatprep.mubr.f32.mxu0 %v1129
    %1598 = vmatmul.mubr.f32.gmra.mxu0 %v1097
    %v1599 = vpop.f32.mrf.mxu0
    %v1600 = vadd.f32 %v1375, %v1599
    %v1601 = vpop.f32.mrf.mxu0
    %1602 = vmatprep.mubr.f32.mxu0 %v1130
    %1603 = vmatmul.mubr.f32.gmra.mxu0 %v1098
    %v1604 = vpop.f32.mrf.mxu0
    %v1605 = vadd.f32 %v1380, %v1604
    %v1606 = vpop.f32.mrf.mxu0
    %1607 = vmatprep.mubr.f32.mxu0 %v1131
    %1608 = vmatmul.mubr.f32.gmra.mxu0 %v1099
    %v1609 = vpop.f32.mrf.mxu0
    %v1610 = vadd.f32 %v1385, %v1609
    %v1611 = vpop.f32.mrf.mxu0
    %1612 = vmatprep.mubr.f32.mxu0 %v1132
    %1613 = vmatmul.mubr.f32.gmra.mxu0 %v1100
    %v1614 = vpop.f32.mrf.mxu0
    %v1615 = vadd.f32 %v1390, %v1614
    %v1616 = vpop.f32.mrf.mxu0
    %1617 = vmatprep.mubr.f32.mxu0 %v1133
    %1618 = vmatmul.mubr.f32.gmra.mxu0 %v1101
    %v1619 = vpop.f32.mrf.mxu0
    %v1620 = vadd.f32 %v1395, %v1619
    %v1621 = vpop.f32.mrf.mxu0
    %1622 = vmatprep.mubr.f32.mxu0 %v1134
    %1623 = vmatmul.mubr.f32.gmra.mxu0 %v1102
    %v1624 = vpop.f32.mrf.mxu0
    %v1625 = vadd.f32 %v1400, %v1624
    %v1626 = vpop.f32.mrf.mxu0
    %1627 = vmatprep.mubr.f32.mxu0 %v1135
    %1628 = vmatmul.mubr.f32.gmra.mxu0 %v1103
    %v1629 = vpop.f32.mrf.mxu0
    %v1630 = vadd.f32 %v1405, %v1629
    %v1631 = vpop.f32.mrf.mxu0
    %1632 = vmatprep.mubr.f32.mxu0 %v1136
    %1633 = vmatmul.mubr.f32.gmra.mxu0 %v1104
    %v1634 = vpop.f32.mrf.mxu0
    %v1635 = vadd.f32 %v1410, %v1634
    %v1636 = vpop.f32.mrf.mxu0
    %1637 = vmatprep.mubr.f32.mxu0 %v1137
    %1638 = vmatmul.mubr.f32.gmra.mxu0 %v1105
    %v1639 = vpop.f32.mrf.mxu0
    %v1640 = vadd.f32 %v1415, %v1639
    %v1641 = vpop.f32.mrf.mxu0
    %1642 = vmatprep.mubr.f32.mxu0 %v1138
    %1643 = vmatmul.mubr.f32.gmra.mxu0 %v1106
    %v1644 = vpop.f32.mrf.mxu0
    %v1645 = vadd.f32 %v1420, %v1644
    %v1646 = vpop.f32.mrf.mxu0
    %1647 = vmatprep.mubr.f32.mxu0 %v1139
    %1648 = vmatmul.mubr.f32.gmra.mxu0 %v1107
    %v1649 = vpop.f32.mrf.mxu0
    %v1650 = vadd.f32 %v1425, %v1649
    %v1651 = vpop.f32.mrf.mxu0
    %1652 = vmatprep.mubr.f32.mxu0 %v1140
    %1653 = vmatmul.mubr.f32.gmra.mxu0 %v1108
    %v1654 = vpop.f32.mrf.mxu0
    %v1655 = vadd.f32 %v1430, %v1654
    %v1656 = vpop.f32.mrf.mxu0
    %1657 = vmatprep.mubr.f32.mxu0 %v1141
    %1658 = vmatmul.mubr.f32.gmra.mxu0 %v1109
    %v1659 = vpop.f32.mrf.mxu0
    %v1660 = vadd.f32 %v1435, %v1659
    %v1661 = vpop.f32.mrf.mxu0
    %1662 = vmatprep.mubr.f32.mxu0 %v1142
    %1663 = vmatmul.mubr.f32.gmra.mxu0 %v1110
    %v1664 = vpop.f32.mrf.mxu0
    %v1665 = vadd.f32 %v1440, %v1664
    %v1666 = vpop.f32.mrf.mxu0
    %1667 = vmatprep.mubr.f32.mxu0 %v1143
    %1668 = vmatmul.mubr.f32.gmra.mxu0 %v1111
    %v1669 = vpop.f32.mrf.mxu0
    %v1670 = vadd.f32 %v1445, %v1669
    %v1671 = vpop.f32.mrf.mxu0
    %1672 = vmatprep.mubr.f32.mxu0 %v1144
    %1673 = vmatmul.mubr.f32.gmra.mxu0 %v1112
    %v1674 = vpop.f32.mrf.mxu0
    %v1675 = vadd.f32 %v1450, %v1674
    %v1676 = vpop.f32.mrf.mxu0
    %1677 = vmatprep.mubr.f32.mxu0 %v1145
    %1678 = vmatmul.mubr.f32.gmra.mxu0 %v1113
    %v1679 = vpop.f32.mrf.mxu0
    %v1680 = vadd.f32 %v1455, %v1679
    %v1681 = vpop.f32.mrf.mxu0
    %1682 = vmatprep.mubr.f32.mxu0 %v1146
    %1683 = vmatmul.mubr.f32.gmra.mxu0 %v1114
    %v1684 = vpop.f32.mrf.mxu0
    %v1685 = vadd.f32 %v1460, %v1684
    %v1686 = vpop.f32.mrf.mxu0
    %1687 = vmatprep.mubr.f32.mxu0 %v1147
    %1688 = vmatmul.mubr.f32.gmra.mxu0 %v1115
    %v1689 = vpop.f32.mrf.mxu0
    %v1690 = vadd.f32 %v1465, %v1689
    %v1691 = vpop.f32.mrf.mxu0
    %1692 = vmatprep.mubr.f32.mxu0 %v1148
    %1693 = vmatmul.mubr.f32.gmra.mxu0 %v1116
    %v1694 = vpop.f32.mrf.mxu0
    %v1695 = vadd.f32 %v1470, %v1694
    %v1696 = vpop.f32.mrf.mxu0
    %1697 = vmatprep.mubr.f32.mxu0 %v1149
    %1698 = vmatmul.mubr.f32.gmra.mxu0 %v1117
    %v1699 = vpop.f32.mrf.mxu0
    %v1700 = vadd.f32 %v1475, %v1699
    %v1701 = vpop.f32.mrf.mxu0
    %1702 = vmatprep.mubr.f32.mxu0 %v1150
    %1703 = vmatmul.mubr.f32.gmra.mxu0 %v1118
    %v1704 = vpop.f32.mrf.mxu0
    %v1705 = vadd.f32 %v1480, %v1704
    %v1706 = vpop.f32.mrf.mxu0
    %1707 = vmatprep.mubr.f32.mxu0 %v1151
    %1708 = vmatmul.mubr.f32.gmra.mxu0 %v1119
    %v1709 = vpop.f32.mrf.mxu0
    %v1710 = vadd.f32 %v1485, %v1709
    %v1711 = vpop.f32.mrf.mxu0
    %1712 = vmatprep.mubr.f32.mxu0 %v1152
    %1713 = vmatmul.mubr.f32.gmra.mxu0 %v1120
    %v1714 = vpop.f32.mrf.mxu0
    %v1715 = vadd.f32 %v1490, %v1714
    %v1716 = vpop.f32.mrf.mxu0
    %1717 = vmatprep.mubr.f32.mxu0 %v1153
    %1718 = vmatmul.mubr.f32.gmra.mxu0 %v1121
    %v1719 = vpop.f32.mrf.mxu0
    %v1720 = vadd.f32 %v1495, %v1719
    %v1721 = vpop.f32.mrf.mxu0
    %1722 = vdwg.mxu0
    %1723 = vmatprep.subr.mxu0 0.0
    %1724 = vmatpush1.msra.mxu0 %v1265
    %1725 = vmatprep.subr.mxu0 0.0
    %1726 = vmatpush1.msra.mxu0 %v1264
    %1727 = vmatprep.subr.mxu0 0.0
    %1728 = vmatpush1.msra.mxu0 %v1263
    %1729 = vmatprep.subr.mxu0 0.0
    %1730 = vmatpush1.msra.mxu0 %v1262
    %1731 = vmatprep.subr.mxu0 0.0
    %1732 = vmatpush1.msra.mxu0 %v1261
    %1733 = vmatprep.subr.mxu0 0.0
    %1734 = vmatpush1.msra.mxu0 %v1260
    %1735 = vmatprep.subr.mxu0 0.0
    %1736 = vmatpush1.msra.mxu0 %v1259
    %1737 = vmatprep.subr.mxu0 0.0
    %1738 = vmatpush1.msra.mxu0 %v1258
    %1739 = vmatprep.subr.mxu0 0.0
    %1740 = vmatpush1.msra.mxu0 %v1257
    %1741 = vmatprep.subr.mxu0 0.0
    %1742 = vmatpush1.msra.mxu0 %v1256
    %1743 = vmatprep.subr.mxu0 0.0
    %1744 = vmatpush1.msra.mxu0 %v1255
    %1745 = vmatprep.subr.mxu0 0.0
    %1746 = vmatpush1.msra.mxu0 %v1254
    %1747 = vmatprep.subr.mxu0 0.0
    %1748 = vmatpush1.msra.mxu0 %v1253
    %1749 = vmatprep.subr.mxu0 0.0
    %1750 = vmatpush1.msra.mxu0 %v1252
    %1751 = vmatprep.subr.mxu0 0.0
    %1752 = vmatpush1.msra.mxu0 %v1251
    %1753 = vmatprep.subr.mxu0 0.0
    %1754 = vmatpush1.msra.mxu0 %v1250
    %1755 = vmatprep.subr.mxu0 0.0
    %1756 = vmatpush2.msra.mxu0 0.0
    %1757 = vmatprep.subr.mxu0 0.0
    %1758 = vmatpush2.msra.mxu0 0.0
    %1759 = vmatprep.subr.mxu0 0.0
    %1760 = vmatpush2.msra.mxu0 0.0
    %1761 = vmatprep.subr.mxu0 0.0
    %1762 = vmatpush2.msra.mxu0 0.0
    %1763 = vmatprep.subr.mxu0 0.0
    %1764 = vmatpush2.msra.mxu0 0.0
    %1765 = vmatprep.subr.mxu0 0.0
    %1766 = vmatpush2.msra.mxu0 0.0
    %1767 = vmatprep.subr.mxu0 0.0
    %1768 = vmatpush2.msra.mxu0 0.0
    %1769 = vmatprep.subr.mxu0 0.0
    %1770 = vmatpush2.msra.mxu0 0.0
    %1771 = vmatprep.subr.mxu0 0.0
    %1772 = vmatpush2.msra.mxu0 0.0
    %1773 = vmatprep.subr.mxu0 0.0
    %1774 = vmatpush2.msra.mxu0 0.0
    %1775 = vmatprep.subr.mxu0 0.0
    %1776 = vmatpush2.msra.mxu0 0.0
    %1777 = vmatprep.subr.mxu0 0.0
    %1778 = vmatpush2.msra.mxu0 0.0
    %1779 = vmatprep.subr.mxu0 0.0
    %1780 = vmatpush2.msra.mxu0 0.0
    %1781 = vmatprep.subr.mxu0 0.0
    %1782 = vmatpush2.msra.mxu0 0.0
    %1783 = vmatprep.subr.mxu0 0.0
    %1784 = vmatpush2.msra.mxu0 0.0
    %1785 = vmatprep.subr.mxu0 0.0
    %1786 = vmatpush2.msra.mxu0 0.0
    %1787 = vmatprep.mubr.f32.mxu0 0.0
    %1788 = vmatmul.mubr.f32.gmra.mxu0 %v1154
    %v1789 = vpop.f32.mrf.mxu0
    %v1790 = vadd.f32 %v1565, %v1789
    %v1791 = vpop.f32.mrf.mxu0
    %1792 = vmatprep.mubr.f32.mxu0 0.0
    %1793 = vmatmul.mubr.f32.gmra.mxu0 %v1155
    %v1794 = vpop.f32.mrf.mxu0
    %v1795 = vadd.f32 %v1570, %v1794
    %v1796 = vpop.f32.mrf.mxu0
    %1797 = vmatprep.mubr.f32.mxu0 0.0
    %1798 = vmatmul.mubr.f32.gmra.mxu0 %v1156
    %v1799 = vpop.f32.mrf.mxu0
    %v1800 = vadd.f32 %v1575, %v1799
    %v1801 = vpop.f32.mrf.mxu0
    %1802 = vmatprep.mubr.f32.mxu0 0.0
    %1803 = vmatmul.mubr.f32.gmra.mxu0 %v1157
    %v1804 = vpop.f32.mrf.mxu0
    %v1805 = vadd.f32 %v1580, %v1804
    %v1806 = vpop.f32.mrf.mxu0
    %1807 = vmatprep.mubr.f32.mxu0 0.0
    %1808 = vmatmul.mubr.f32.gmra.mxu0 %v1158
    %v1809 = vpop.f32.mrf.mxu0
    %v1810 = vadd.f32 %v1585, %v1809
    %v1811 = vpop.f32.mrf.mxu0
    %1812 = vmatprep.mubr.f32.mxu0 0.0
    %1813 = vmatmul.mubr.f32.gmra.mxu0 %v1159
    %v1814 = vpop.f32.mrf.mxu0
    %v1815 = vadd.f32 %v1590, %v1814
    %v1816 = vpop.f32.mrf.mxu0
    %1817 = vmatprep.mubr.f32.mxu0 0.0
    %1818 = vmatmul.mubr.f32.gmra.mxu0 %v1160
    %v1819 = vpop.f32.mrf.mxu0
    %v1820 = vadd.f32 %v1595, %v1819
    %v1821 = vpop.f32.mrf.mxu0
    %1822 = vmatprep.mubr.f32.mxu0 0.0
    %1823 = vmatmul.mubr.f32.gmra.mxu0 %v1161
    %v1824 = vpop.f32.mrf.mxu0
    %v1825 = vadd.f32 %v1600, %v1824
    %v1826 = vpop.f32.mrf.mxu0
    %1827 = vmatprep.mubr.f32.mxu0 0.0
    %1828 = vmatmul.mubr.f32.gmra.mxu0 %v1162
    %v1829 = vpop.f32.mrf.mxu0
    %v1830 = vadd.f32 %v1605, %v1829
    %v1831 = vpop.f32.mrf.mxu0
    %1832 = vmatprep.mubr.f32.mxu0 0.0
    %1833 = vmatmul.mubr.f32.gmra.mxu0 %v1163
    %v1834 = vpop.f32.mrf.mxu0
    %v1835 = vadd.f32 %v1610, %v1834
    %v1836 = vpop.f32.mrf.mxu0
    %1837 = vmatprep.mubr.f32.mxu0 0.0
    %1838 = vmatmul.mubr.f32.gmra.mxu0 %v1164
    %v1839 = vpop.f32.mrf.mxu0
    %v1840 = vadd.f32 %v1615, %v1839
    %v1841 = vpop.f32.mrf.mxu0
    %1842 = vmatprep.mubr.f32.mxu0 0.0
    %1843 = vmatmul.mubr.f32.gmra.mxu0 %v1165
    %v1844 = vpop.f32.mrf.mxu0
    %v1845 = vadd.f32 %v1620, %v1844
    %v1846 = vpop.f32.mrf.mxu0
    %1847 = vmatprep.mubr.f32.mxu0 0.0
    %1848 = vmatmul.mubr.f32.gmra.mxu0 %v1166
    %v1849 = vpop.f32.mrf.mxu0
    %v1850 = vadd.f32 %v1625, %v1849
    %v1851 = vpop.f32.mrf.mxu0
    %1852 = vmatprep.mubr.f32.mxu0 0.0
    %1853 = vmatmul.mubr.f32.gmra.mxu0 %v1167
    %v1854 = vpop.f32.mrf.mxu0
    %v1855 = vadd.f32 %v1630, %v1854
    %v1856 = vpop.f32.mrf.mxu0
    %1857 = vmatprep.mubr.f32.mxu0 0.0
    %1858 = vmatmul.mubr.f32.gmra.mxu0 %v1168
    %v1859 = vpop.f32.mrf.mxu0
    %v1860 = vadd.f32 %v1635, %v1859
    %v1861 = vpop.f32.mrf.mxu0
    %1862 = vmatprep.mubr.f32.mxu0 0.0
    %1863 = vmatmul.mubr.f32.gmra.mxu0 %v1169
    %v1864 = vpop.f32.mrf.mxu0
    %v1865 = vadd.f32 %v1640, %v1864
    %v1866 = vpop.f32.mrf.mxu0
    %1867 = vmatprep.mubr.f32.mxu0 0.0
    %1868 = vmatmul.mubr.f32.gmra.mxu0 %v1170
    %v1869 = vpop.f32.mrf.mxu0
    %v1870 = vadd.f32 %v1645, %v1869
    %v1871 = vpop.f32.mrf.mxu0
    %1872 = vmatprep.mubr.f32.mxu0 0.0
    %1873 = vmatmul.mubr.f32.gmra.mxu0 %v1171
    %v1874 = vpop.f32.mrf.mxu0
    %v1875 = vadd.f32 %v1650, %v1874
    %v1876 = vpop.f32.mrf.mxu0
    %1877 = vmatprep.mubr.f32.mxu0 0.0
    %1878 = vmatmul.mubr.f32.gmra.mxu0 %v1172
    %v1879 = vpop.f32.mrf.mxu0
    %v1880 = vadd.f32 %v1655, %v1879
    %v1881 = vpop.f32.mrf.mxu0
    %1882 = vmatprep.mubr.f32.mxu0 0.0
    %1883 = vmatmul.mubr.f32.gmra.mxu0 %v1173
    %v1884 = vpop.f32.mrf.mxu0
    %v1885 = vadd.f32 %v1660, %v1884
    %v1886 = vpop.f32.mrf.mxu0
    %1887 = vmatprep.mubr.f32.mxu0 0.0
    %1888 = vmatmul.mubr.f32.gmra.mxu0 %v1174
    %v1889 = vpop.f32.mrf.mxu0
    %v1890 = vadd.f32 %v1665, %v1889
    %v1891 = vpop.f32.mrf.mxu0
    %1892 = vmatprep.mubr.f32.mxu0 0.0
    %1893 = vmatmul.mubr.f32.gmra.mxu0 %v1175
    %v1894 = vpop.f32.mrf.mxu0
    %v1895 = vadd.f32 %v1670, %v1894
    %v1896 = vpop.f32.mrf.mxu0
    %1897 = vmatprep.mubr.f32.mxu0 0.0
    %1898 = vmatmul.mubr.f32.gmra.mxu0 %v1176
    %v1899 = vpop.f32.mrf.mxu0
    %v1900 = vadd.f32 %v1675, %v1899
    %v1901 = vpop.f32.mrf.mxu0
    %1902 = vmatprep.mubr.f32.mxu0 0.0
    %1903 = vmatmul.mubr.f32.gmra.mxu0 %v1177
    %v1904 = vpop.f32.mrf.mxu0
    %v1905 = vadd.f32 %v1680, %v1904
    %v1906 = vpop.f32.mrf.mxu0
    %1907 = vmatprep.mubr.f32.mxu0 0.0
    %1908 = vmatmul.mubr.f32.gmra.mxu0 %v1178
    %v1909 = vpop.f32.mrf.mxu0
    %v1910 = vadd.f32 %v1685, %v1909
    %v1911 = vpop.f32.mrf.mxu0
    %1912 = vmatprep.mubr.f32.mxu0 0.0
    %1913 = vmatmul.mubr.f32.gmra.mxu0 %v1179
    %v1914 = vpop.f32.mrf.mxu0
    %v1915 = vadd.f32 %v1690, %v1914
    %v1916 = vpop.f32.mrf.mxu0
    %1917 = vmatprep.mubr.f32.mxu0 0.0
    %1918 = vmatmul.mubr.f32.gmra.mxu0 %v1180
    %v1919 = vpop.f32.mrf.mxu0
    %v1920 = vadd.f32 %v1695, %v1919
    %v1921 = vpop.f32.mrf.mxu0
    %1922 = vmatprep.mubr.f32.mxu0 0.0
    %1923 = vmatmul.mubr.f32.gmra.mxu0 %v1181
    %v1924 = vpop.f32.mrf.mxu0
    %v1925 = vadd.f32 %v1700, %v1924
    %v1926 = vpop.f32.mrf.mxu0
    %1927 = vmatprep.mubr.f32.mxu0 0.0
    %1928 = vmatmul.mubr.f32.gmra.mxu0 %v1182
    %v1929 = vpop.f32.mrf.mxu0
    %v1930 = vadd.f32 %v1705, %v1929
    %v1931 = vpop.f32.mrf.mxu0
    %1932 = vmatprep.mubr.f32.mxu0 0.0
    %1933 = vmatmul.mubr.f32.gmra.mxu0 %v1183
    %v1934 = vpop.f32.mrf.mxu0
    %v1935 = vadd.f32 %v1710, %v1934
    %v1936 = vpop.f32.mrf.mxu0
    %1937 = vmatprep.mubr.f32.mxu0 0.0
    %1938 = vmatmul.mubr.f32.gmra.mxu0 %v1184
    %v1939 = vpop.f32.mrf.mxu0
    %v1940 = vadd.f32 %v1715, %v1939
    %v1941 = vpop.f32.mrf.mxu0
    %1942 = vmatprep.mubr.f32.mxu0 0.0
    %1943 = vmatmul.mubr.f32.gmra.mxu0 %v1185
    %v1944 = vpop.f32.mrf.mxu0
    %v1945 = vadd.f32 %v1720, %v1944
    %v1946 = vpop.f32.mrf.mxu0
    %1947 = vdwg.mxu0
    %v1948 = vmin.f32 %v1790, 0.0
    %v1949 = vmin.f32 %v1795, 0.0
    %v1950 = vmin.f32 %v1800, 0.0
    %v1951 = vmin.f32 %v1805, 0.0
    %v1952 = vmin.f32 %v1810, 0.0
    %v1953 = vmin.f32 %v1815, 0.0
    %v1954 = vmin.f32 %v1820, 0.0
    %v1955 = vmin.f32 %v1825, 0.0
    %v1956 = vmin.f32 %v1830, 0.0
    %v1957 = vmin.f32 %v1835, 0.0
    %v1958 = vmin.f32 %v1840, 0.0
    %v1959 = vmin.f32 %v1845, 0.0
    %v1960 = vmin.f32 %v1850, 0.0
    %v1961 = vmin.f32 %v1855, 0.0
    %v1962 = vmin.f32 %v1860, 0.0
    %v1963 = vmin.f32 %v1865, 0.0
    %v1964 = vmin.f32 %v1870, 0.0
    %v1965 = vmin.f32 %v1875, 0.0
    %v1966 = vmin.f32 %v1880, 0.0
    %v1967 = vmin.f32 %v1885, 0.0
    %v1968 = vmin.f32 %v1890, 0.0
    %v1969 = vmin.f32 %v1895, 0.0
    %v1970 = vmin.f32 %v1900, 0.0
    %v1971 = vmin.f32 %v1905, 0.0
    %v1972 = vmin.f32 %v1910, 0.0
    %v1973 = vmin.f32 %v1915, 0.0
    %v1974 = vmin.f32 %v1920, 0.0
    %v1975 = vmin.f32 %v1925, 0.0
    %v1976 = vmin.f32 %v1930, 0.0
    %v1977 = vmin.f32 %v1935, 0.0
    %v1978 = vmin.f32 %v1940, 0.0
    %v1979 = vmin.f32 %v1945, 0.0
    %v1980 = vand.u32 2147483647, %v1790
    %v1981 = vand.u32 2147483647, %v1795
    %v1982 = vand.u32 2147483647, %v1800
    %v1983 = vand.u32 2147483647, %v1805
    %v1984 = vand.u32 2147483647, %v1810
    %v1985 = vand.u32 2147483647, %v1815
    %v1986 = vand.u32 2147483647, %v1820
    %v1987 = vand.u32 2147483647, %v1825
    %v1988 = vand.u32 2147483647, %v1830
    %v1989 = vand.u32 2147483647, %v1835
    %v1990 = vand.u32 2147483647, %v1840
    %v1991 = vand.u32 2147483647, %v1845
    %v1992 = vand.u32 2147483647, %v1850
    %v1993 = vand.u32 2147483647, %v1855
    %v1994 = vand.u32 2147483647, %v1860
    %v1995 = vand.u32 2147483647, %v1865
    %v1996 = vand.u32 2147483647, %v1870
    %v1997 = vand.u32 2147483647, %v1875
    %v1998 = vand.u32 2147483647, %v1880
    %v1999 = vand.u32 2147483647, %v1885
    %v2000 = vand.u32 2147483647, %v1890
    %v2001 = vand.u32 2147483647, %v1895
    %v2002 = vand.u32 2147483647, %v1900
    %v2003 = vand.u32 2147483647, %v1905
    %v2004 = vand.u32 2147483647, %v1910
    %v2005 = vand.u32 2147483647, %v1915
    %v2006 = vand.u32 2147483647, %v1920
    %v2007 = vand.u32 2147483647, %v1925
    %v2008 = vand.u32 2147483647, %v1930
    %v2009 = vand.u32 2147483647, %v1935
    %v2010 = vand.u32 2147483647, %v1940
    %v2011 = vand.u32 2147483647, %v1945
    %v2012 = vsub.f32 0.0, %v1980
    %v2013 = vsub.f32 0.0, %v1981
    %v2014 = vsub.f32 0.0, %v1982
    %v2015 = vsub.f32 0.0, %v1983
    %v2016 = vsub.f32 0.0, %v1984
    %v2017 = vsub.f32 0.0, %v1985
    %v2018 = vsub.f32 0.0, %v1986
    %v2019 = vsub.f32 0.0, %v1987
    %v2020 = vsub.f32 0.0, %v1988
    %v2021 = vsub.f32 0.0, %v1989
    %v2022 = vsub.f32 0.0, %v1990
    %v2023 = vsub.f32 0.0, %v1991
    %v2024 = vsub.f32 0.0, %v1992
    %v2025 = vsub.f32 0.0, %v1993
    %v2026 = vsub.f32 0.0, %v1994
    %v2027 = vsub.f32 0.0, %v1995
    %v2028 = vsub.f32 0.0, %v1996
    %v2029 = vsub.f32 0.0, %v1997
    %v2030 = vsub.f32 0.0, %v1998
    %v2031 = vsub.f32 0.0, %v1999
    %v2032 = vsub.f32 0.0, %v2000
    %v2033 = vsub.f32 0.0, %v2001
    %v2034 = vsub.f32 0.0, %v2002
    %v2035 = vsub.f32 0.0, %v2003
    %v2036 = vsub.f32 0.0, %v2004
    %v2037 = vsub.f32 0.0, %v2005
    %v2038 = vsub.f32 0.0, %v2006
    %v2039 = vsub.f32 0.0, %v2007
    %v2040 = vsub.f32 0.0, %v2008
    %v2041 = vsub.f32 0.0, %v2009
    %v2042 = vsub.f32 0.0, %v2010
    %v2043 = vsub.f32 0.0, %v2011
    %v2044 = vmul.f32 %v2012, 1.442695
    %v2045 = vpow.pop %v2044
    %v2046 = vmul.f32 %v2013, 1.442695
    %v2047 = vpow.pop %v2046
    %v2048 = vmul.f32 %v2014, 1.442695
    %v2049 = vpow.pop %v2048
    %v2050 = vmul.f32 %v2015, 1.442695
    %v2051 = vpow.pop %v2050
    %v2052 = vmul.f32 %v2016, 1.442695
    %v2053 = vpow.pop %v2052
    %v2054 = vmul.f32 %v2017, 1.442695
    %v2055 = vpow.pop %v2054
    %v2056 = vmul.f32 %v2018, 1.442695
    %v2057 = vpow.pop %v2056
    %v2058 = vmul.f32 %v2019, 1.442695
    %v2059 = vpow.pop %v2058
    %v2060 = vmul.f32 %v2020, 1.442695
    %v2061 = vpow.pop %v2060
    %v2062 = vmul.f32 %v2021, 1.442695
    %v2063 = vpow.pop %v2062
    %v2064 = vmul.f32 %v2022, 1.442695
    %v2065 = vpow.pop %v2064
    %v2066 = vmul.f32 %v2023, 1.442695
    %v2067 = vpow.pop %v2066
    %v2068 = vmul.f32 %v2024, 1.442695
    %v2069 = vpow.pop %v2068
    %v2070 = vmul.f32 %v2025, 1.442695
    %v2071 = vpow.pop %v2070
    %v2072 = vmul.f32 %v2026, 1.442695
    %v2073 = vpow.pop %v2072
    %v2074 = vmul.f32 %v2027, 1.442695
    %v2075 = vpow.pop %v2074
    %v2076 = vmul.f32 %v2028, 1.442695
    %v2077 = vpow.pop %v2076
    %v2078 = vmul.f32 %v2029, 1.442695
    %v2079 = vpow.pop %v2078
    %v2080 = vmul.f32 %v2030, 1.442695
    %v2081 = vpow.pop %v2080
    %v2082 = vmul.f32 %v2031, 1.442695
    %v2083 = vpow.pop %v2082
    %v2084 = vmul.f32 %v2032, 1.442695
    %v2085 = vpow.pop %v2084
    %v2086 = vmul.f32 %v2033, 1.442695
    %v2087 = vpow.pop %v2086
    %v2088 = vmul.f32 %v2034, 1.442695
    %v2089 = vpow.pop %v2088
    %v2090 = vmul.f32 %v2035, 1.442695
    %v2091 = vpow.pop %v2090
    %v2092 = vmul.f32 %v2036, 1.442695
    %v2093 = vpow.pop %v2092
    %v2094 = vmul.f32 %v2037, 1.442695
    %v2095 = vpow.pop %v2094
    %v2096 = vmul.f32 %v2038, 1.442695
    %v2097 = vpow.pop %v2096
    %v2098 = vmul.f32 %v2039, 1.442695
    %v2099 = vpow.pop %v2098
    %v2100 = vmul.f32 %v2040, 1.442695
    %v2101 = vpow.pop %v2100
    %v2102 = vmul.f32 %v2041, 1.442695
    %v2103 = vpow.pop %v2102
    %v2104 = vmul.f32 %v2042, 1.442695
    %v2105 = vpow.pop %v2104
    %v2106 = vmul.f32 %v2043, 1.442695
    %v2107 = vpow.pop %v2106
    %v2108 = vadd.f32 %v2045, 1.0
    %v2109 = vadd.f32 %v2047, 1.0
    %v2110 = vadd.f32 %v2049, 1.0
    %v2111 = vadd.f32 %v2051, 1.0
    %v2112 = vadd.f32 %v2053, 1.0
    %v2113 = vadd.f32 %v2055, 1.0
    %v2114 = vadd.f32 %v2057, 1.0
    %v2115 = vadd.f32 %v2059, 1.0
    %v2116 = vadd.f32 %v2061, 1.0
    %v2117 = vadd.f32 %v2063, 1.0
    %v2118 = vadd.f32 %v2065, 1.0
    %v2119 = vadd.f32 %v2067, 1.0
    %v2120 = vadd.f32 %v2069, 1.0
    %v2121 = vadd.f32 %v2071, 1.0
    %v2122 = vadd.f32 %v2073, 1.0
    %v2123 = vadd.f32 %v2075, 1.0
    %v2124 = vadd.f32 %v2077, 1.0
    %v2125 = vadd.f32 %v2079, 1.0
    %v2126 = vadd.f32 %v2081, 1.0
    %v2127 = vadd.f32 %v2083, 1.0
    %v2128 = vadd.f32 %v2085, 1.0
    %v2129 = vadd.f32 %v2087, 1.0
    %v2130 = vadd.f32 %v2089, 1.0
    %v2131 = vadd.f32 %v2091, 1.0
    %v2132 = vadd.f32 %v2093, 1.0
    %v2133 = vadd.f32 %v2095, 1.0
    %v2134 = vadd.f32 %v2097, 1.0
    %v2135 = vadd.f32 %v2099, 1.0
    %v2136 = vadd.f32 %v2101, 1.0
    %v2137 = vadd.f32 %v2103, 1.0
    %v2138 = vadd.f32 %v2105, 1.0
    %v2139 = vadd.f32 %v2107, 1.0
    %v2140 = vlog2.pop %v2108
    %v2141 = vmul.f32 %v2140, 0.6931472
    %v2142 = vlog2.pop %v2109
    %v2143 = vmul.f32 %v2142, 0.6931472
    %v2144 = vlog2.pop %v2110
    %v2145 = vmul.f32 %v2144, 0.6931472
    %v2146 = vlog2.pop %v2111
    %v2147 = vmul.f32 %v2146, 0.6931472
    %v2148 = vlog2.pop %v2112
    %v2149 = vmul.f32 %v2148, 0.6931472
    %v2150 = vlog2.pop %v2113
    %v2151 = vmul.f32 %v2150, 0.6931472
    %v2152 = vlog2.pop %v2114
    %v2153 = vmul.f32 %v2152, 0.6931472
    %v2154 = vlog2.pop %v2115
    %v2155 = vmul.f32 %v2154, 0.6931472
    %v2156 = vlog2.pop %v2116
    %v2157 = vmul.f32 %v2156, 0.6931472
    %v2158 = vlog2.pop %v2117
    %v2159 = vmul.f32 %v2158, 0.6931472
    %v2160 = vlog2.pop %v2118
    %v2161 = vmul.f32 %v2160, 0.6931472
    %v2162 = vlog2.pop %v2119
    %v2163 = vmul.f32 %v2162, 0.6931472
    %v2164 = vlog2.pop %v2120
    %v2165 = vmul.f32 %v2164, 0.6931472
    %v2166 = vlog2.pop %v2121
    %v2167 = vmul.f32 %v2166, 0.6931472
    %v2168 = vlog2.pop %v2122
    %v2169 = vmul.f32 %v2168, 0.6931472
    %v2170 = vlog2.pop %v2123
    %v2171 = vmul.f32 %v2170, 0.6931472
    %v2172 = vlog2.pop %v2124
    %v2173 = vmul.f32 %v2172, 0.6931472
    %v2174 = vlog2.pop %v2125
    %v2175 = vmul.f32 %v2174, 0.6931472
    %v2176 = vlog2.pop %v2126
    %v2177 = vmul.f32 %v2176, 0.6931472
    %v2178 = vlog2.pop %v2127
    %v2179 = vmul.f32 %v2178, 0.6931472
    %v2180 = vlog2.pop %v2128
    %v2181 = vmul.f32 %v2180, 0.6931472
    %v2182 = vlog2.pop %v2129
    %v2183 = vmul.f32 %v2182, 0.6931472
    %v2184 = vlog2.pop %v2130
    %v2185 = vmul.f32 %v2184, 0.6931472
    %v2186 = vlog2.pop %v2131
    %v2187 = vmul.f32 %v2186, 0.6931472
    %v2188 = vlog2.pop %v2132
    %v2189 = vmul.f32 %v2188, 0.6931472
    %v2190 = vlog2.pop %v2133
    %v2191 = vmul.f32 %v2190, 0.6931472
    %v2192 = vlog2.pop %v2134
    %v2193 = vmul.f32 %v2192, 0.6931472
    %v2194 = vlog2.pop %v2135
    %v2195 = vmul.f32 %v2194, 0.6931472
    %v2196 = vlog2.pop %v2136
    %v2197 = vmul.f32 %v2196, 0.6931472
    %v2198 = vlog2.pop %v2137
    %v2199 = vmul.f32 %v2198, 0.6931472
    %v2200 = vlog2.pop %v2138
    %v2201 = vmul.f32 %v2200, 0.6931472
    %v2202 = vlog2.pop %v2139
    %v2203 = vmul.f32 %v2202, 0.6931472
    %v2204 = vsub.f32 %v1948, %v2141
    %v2205 = vsub.f32 %v1949, %v2143
    %v2206 = vsub.f32 %v1950, %v2145
    %v2207 = vsub.f32 %v1951, %v2147
    %v2208 = vsub.f32 %v1952, %v2149
    %v2209 = vsub.f32 %v1953, %v2151
    %v2210 = vsub.f32 %v1954, %v2153
    %v2211 = vsub.f32 %v1955, %v2155
    %v2212 = vsub.f32 %v1956, %v2157
    %v2213 = vsub.f32 %v1957, %v2159
    %v2214 = vsub.f32 %v1958, %v2161
    %v2215 = vsub.f32 %v1959, %v2163
    %v2216 = vsub.f32 %v1960, %v2165
    %v2217 = vsub.f32 %v1961, %v2167
    %v2218 = vsub.f32 %v1962, %v2169
    %v2219 = vsub.f32 %v1963, %v2171
    %v2220 = vsub.f32 %v1964, %v2173
    %v2221 = vsub.f32 %v1965, %v2175
    %v2222 = vsub.f32 %v1966, %v2177
    %v2223 = vsub.f32 %v1967, %v2179
    %v2224 = vsub.f32 %v1968, %v2181
    %v2225 = vsub.f32 %v1969, %v2183
    %v2226 = vsub.f32 %v1970, %v2185
    %v2227 = vsub.f32 %v1971, %v2187
    %v2228 = vsub.f32 %v1972, %v2189
    %v2229 = vsub.f32 %v1973, %v2191
    %v2230 = vsub.f32 %v1974, %v2193
    %v2231 = vsub.f32 %v1975, %v2195
    %v2232 = vsub.f32 %v1976, %v2197
    %v2233 = vsub.f32 %v1977, %v2199
    %v2234 = vsub.f32 %v1978, %v2201
    %v2235 = vsub.f32 %v1979, %v2203
    %2236 = vst [vmem:[#allocation2] sm:$0xff] %v2204
    %2237 = vst [vmem:[#allocation2 + $0x8] sm:$0xff] %v2205
    %2238 = vst [vmem:[#allocation2 + $0x10] sm:$0xff] %v2206
    %2239 = vst [vmem:[#allocation2 + $0x18] sm:$0xff] %v2207
    %2240 = vst [vmem:[#allocation2 + $0x20] sm:$0xff] %v2208
    %2241 = vst [vmem:[#allocation2 + $0x28] sm:$0xff] %v2209
    %2242 = vst [vmem:[#allocation2 + $0x30] sm:$0xff] %v2210
    %2243 = vst [vmem:[#allocation2 + $0x38] sm:$0xff] %v2211
    %2244 = vst [vmem:[#allocation2 + $0x40] sm:$0xff] %v2212
    %2245 = vst [vmem:[#allocation2 + $0x48] sm:$0xff] %v2213
    %2246 = vst [vmem:[#allocation2 + $0x50] sm:$0xff] %v2214
    %2247 = vst [vmem:[#allocation2 + $0x58] sm:$0xff] %v2215
    %2248 = vst [vmem:[#allocation2 + $0x60] sm:$0xff] %v2216
    %2249 = vst [vmem:[#allocation2 + $0x68] sm:$0xff] %v2217
    %2250 = vst [vmem:[#allocation2 + $0x70] sm:$0xff] %v2218
    %2251 = vst [vmem:[#allocation2 + $0x78] sm:$0xff] %v2219
    %2252 = vst [vmem:[#allocation2 + $0x80] sm:$0xff] %v2220
    %2253 = vst [vmem:[#allocation2 + $0x88] sm:$0xff] %v2221
    %2254 = vst [vmem:[#allocation2 + $0x90] sm:$0xff] %v2222
    %2255 = vst [vmem:[#allocation2 + $0x98] sm:$0xff] %v2223
    %2256 = vst [vmem:[#allocation2 + $0xa0] sm:$0xff] %v2224
    %2257 = vst [vmem:[#allocation2 + $0xa8] sm:$0xff] %v2225
    %2258 = vst [vmem:[#allocation2 + $0xb0] sm:$0xff] %v2226
    %2259 = vst [vmem:[#allocation2 + $0xb8] sm:$0xff] %v2227
    %2260 = vst [vmem:[#allocation2 + $0xc0] sm:$0xff] %v2228
    %2261 = vst [vmem:[#allocation2 + $0xc8] sm:$0xff] %v2229
    %2262 = vst [vmem:[#allocation2 + $0xd0] sm:$0xff] %v2230
    %2263 = vst [vmem:[#allocation2 + $0xd8] sm:$0xff] %v2231
    %2264 = vst [vmem:[#allocation2 + $0xe0] sm:$0xff] %v2232
    %2265 = vst [vmem:[#allocation2 + $0xe8] sm:$0xff] %v2233
    %2266 = vst [vmem:[#allocation2 + $0xf0] sm:$0xff] %v2234
    %2267 = vst [vmem:[#allocation2 + $0xf8] sm:$0xf] %v2235
    %v2268 = vld [vmem:[#allocation2] ss:$16 sm:$0x3]
    %v2269 = vld [vmem:[#allocation2] ss:$16 sm:$0xc]
    %v2270 = vor.u32 %v2268, %v2269
    %v2271 = vld [vmem:[#allocation2] ss:$16 sm:$0x30]
    %v2272 = vor.u32 %v2270, %v2271
    %v2273 = vld [vmem:[#allocation2] ss:$16 sm:$0xc0]
    %v2274 = vor.u32 %v2272, %v2273
    %s2275 = scalar_lea.vmem [#allocation2], 128
    %v2276 = vld [vmem:[%s2275] ss:$16 sm:$0x3]
    %v2277 = vld [vmem:[%s2275] ss:$16 sm:$0xc]
    %v2278 = vor.u32 %v2276, %v2277
    %v2279 = vld [vmem:[%s2275] ss:$16 sm:$0x30]
    %v2280 = vor.u32 %v2278, %v2279
    %v2281 = vld [vmem:[%s2275] ss:$16 sm:$0xc0]
    %v2282 = vor.u32 %v2280, %v2281
    %s2283 = scalar_lea.vmem [#allocation2], 1
    %v2284 = vld [vmem:[%s2283] ss:$16 sm:$0x3]
    %v2285 = vld [vmem:[%s2283] ss:$16 sm:$0xc]
    %v2286 = vor.u32 %v2284, %v2285
    %v2287 = vld [vmem:[%s2283] ss:$16 sm:$0x30]
    %v2288 = vor.u32 %v2286, %v2287
    %v2289 = vld [vmem:[%s2283] ss:$16 sm:$0xc0]
    %v2290 = vor.u32 %v2288, %v2289
    %s2291 = scalar_lea.vmem [#allocation2], 129
    %v2292 = vld [vmem:[%s2291] ss:$16 sm:$0x3]
    %v2293 = vld [vmem:[%s2291] ss:$16 sm:$0xc]
    %v2294 = vor.u32 %v2292, %v2293
    %v2295 = vld [vmem:[%s2291] ss:$16 sm:$0x30]
    %v2296 = vor.u32 %v2294, %v2295
    %v2297 = vld [vmem:[%s2291] ss:$16 sm:$0xc0]
    %v2298 = vor.u32 %v2296, %v2297
    %s2299 = scalar_lea.vmem [#allocation2], 2
    %v2300 = vld [vmem:[%s2299] ss:$16 sm:$0x3]
    %v2301 = vld [vmem:[%s2299] ss:$16 sm:$0xc]
    %v2302 = vor.u32 %v2300, %v2301
    %v2303 = vld [vmem:[%s2299] ss:$16 sm:$0x30]
    %v2304 = vor.u32 %v2302, %v2303
    %v2305 = vld [vmem:[%s2299] ss:$16 sm:$0xc0]
    %v2306 = vor.u32 %v2304, %v2305
    %s2307 = scalar_lea.vmem [#allocation2], 130
    %v2308 = vld [vmem:[%s2307] ss:$16 sm:$0x3]
    %v2309 = vld [vmem:[%s2307] ss:$16 sm:$0xc]
    %v2310 = vor.u32 %v2308, %v2309
    %v2311 = vld [vmem:[%s2307] ss:$16 sm:$0x30]
    %v2312 = vor.u32 %v2310, %v2311
    %v2313 = vld [vmem:[%s2307] ss:$16 sm:$0xc0]
    %v2314 = vor.u32 %v2312, %v2313
    %s2315 = scalar_lea.vmem [#allocation2], 3
    %v2316 = vld [vmem:[%s2315] ss:$16 sm:$0x3]
    %v2317 = vld [vmem:[%s2315] ss:$16 sm:$0xc]
    %v2318 = vor.u32 %v2316, %v2317
    %v2319 = vld [vmem:[%s2315] ss:$16 sm:$0x30]
    %v2320 = vor.u32 %v2318, %v2319
    %v2321 = vld [vmem:[%s2315] ss:$16 sm:$0xc0]
    %v2322 = vor.u32 %v2320, %v2321
    %s2323 = scalar_lea.vmem [#allocation2], 131
    %v2324 = vld [vmem:[%s2323] ss:$16 sm:$0x3]
    %v2325 = vld [vmem:[%s2323] ss:$16 sm:$0xc]
    %v2326 = vor.u32 %v2324, %v2325
    %v2327 = vld [vmem:[%s2323] ss:$16 sm:$0x30]
    %v2328 = vor.u32 %v2326, %v2327
    %v2329 = vld [vmem:[%s2323] ss:$16 sm:$0xc0]
    %v2330 = vor.u32 %v2328, %v2329
    %s2331 = scalar_lea.vmem [#allocation2], 4
    %v2332 = vld [vmem:[%s2331] ss:$16 sm:$0x3]
    %v2333 = vld [vmem:[%s2331] ss:$16 sm:$0xc]
    %v2334 = vor.u32 %v2332, %v2333
    %v2335 = vld [vmem:[%s2331] ss:$16 sm:$0x30]
    %v2336 = vor.u32 %v2334, %v2335
    %v2337 = vld [vmem:[%s2331] ss:$16 sm:$0xc0]
    %v2338 = vor.u32 %v2336, %v2337
    %s2339 = scalar_lea.vmem [#allocation2], 132
    %v2340 = vld [vmem:[%s2339] ss:$16 sm:$0x3]
    %v2341 = vld [vmem:[%s2339] ss:$16 sm:$0xc]
    %v2342 = vor.u32 %v2340, %v2341
    %v2343 = vld [vmem:[%s2339] ss:$16 sm:$0x30]
    %v2344 = vor.u32 %v2342, %v2343
    %v2345 = vld [vmem:[%s2339] ss:$16 sm:$0xc0]
    %v2346 = vor.u32 %v2344, %v2345
    %s2347 = scalar_lea.vmem [#allocation2], 5
    %v2348 = vld [vmem:[%s2347] ss:$16 sm:$0x3]
    %v2349 = vld [vmem:[%s2347] ss:$16 sm:$0xc]
    %v2350 = vor.u32 %v2348, %v2349
    %v2351 = vld [vmem:[%s2347] ss:$16 sm:$0x30]
    %v2352 = vor.u32 %v2350, %v2351
    %v2353 = vld [vmem:[%s2347] ss:$16 sm:$0xc0]
    %v2354 = vor.u32 %v2352, %v2353
    %s2355 = scalar_lea.vmem [#allocation2], 133
    %v2356 = vld [vmem:[%s2355] ss:$16 sm:$0x3]
    %v2357 = vld [vmem:[%s2355] ss:$16 sm:$0xc]
    %v2358 = vor.u32 %v2356, %v2357
    %v2359 = vld [vmem:[%s2355] ss:$16 sm:$0x30]
    %v2360 = vor.u32 %v2358, %v2359
    %v2361 = vld [vmem:[%s2355] ss:$16 sm:$0xc0]
    %v2362 = vor.u32 %v2360, %v2361
    %s2363 = scalar_lea.vmem [#allocation2], 6
    %v2364 = vld [vmem:[%s2363] ss:$16 sm:$0x3]
    %v2365 = vld [vmem:[%s2363] ss:$16 sm:$0xc]
    %v2366 = vor.u32 %v2364, %v2365
    %v2367 = vld [vmem:[%s2363] ss:$16 sm:$0x30]
    %v2368 = vor.u32 %v2366, %v2367
    %v2369 = vld [vmem:[%s2363] ss:$16 sm:$0xc0]
    %v2370 = vor.u32 %v2368, %v2369
    %s2371 = scalar_lea.vmem [#allocation2], 134
    %v2372 = vld [vmem:[%s2371] ss:$16 sm:$0x3]
    %v2373 = vld [vmem:[%s2371] ss:$16 sm:$0xc]
    %v2374 = vor.u32 %v2372, %v2373
    %v2375 = vld [vmem:[%s2371] ss:$16 sm:$0x30]
    %v2376 = vor.u32 %v2374, %v2375
    %v2377 = vld [vmem:[%s2371] ss:$16 sm:$0xc0]
    %v2378 = vor.u32 %v2376, %v2377
    %s2379 = scalar_lea.vmem [#allocation2], 7
    %v2380 = vld [vmem:[%s2379] ss:$16 sm:$0x3]
    %v2381 = vld [vmem:[%s2379] ss:$16 sm:$0xc]
    %v2382 = vor.u32 %v2380, %v2381
    %v2383 = vld [vmem:[%s2379] ss:$16 sm:$0x30]
    %v2384 = vor.u32 %v2382, %v2383
    %v2385 = vld [vmem:[%s2379] ss:$16 sm:$0xc0]
    %v2386 = vor.u32 %v2384, %v2385
    %s2387 = scalar_lea.vmem [#allocation2], 135
    %v2388 = vld [vmem:[%s2387] ss:$16 sm:$0x3]
    %v2389 = vld [vmem:[%s2387] ss:$16 sm:$0xc]
    %v2390 = vor.u32 %v2388, %v2389
    %v2391 = vld [vmem:[%s2387] ss:$16 sm:$0x30]
    %v2392 = vor.u32 %v2390, %v2391
    %v2393 = vld [vmem:[%s2387] ss:$16 sm:$0xc0]
    %v2394 = vor.u32 %v2392, %v2393
    %s2395 = scalar_lea.vmem [#allocation2], 8
    %v2396 = vld [vmem:[%s2395] ss:$16 sm:$0x3]
    %v2397 = vld [vmem:[%s2395] ss:$16 sm:$0xc]
    %v2398 = vor.u32 %v2396, %v2397
    %v2399 = vld [vmem:[%s2395] ss:$16 sm:$0x30]
    %v2400 = vor.u32 %v2398, %v2399
    %v2401 = vld [vmem:[%s2395] ss:$16 sm:$0xc0]
    %v2402 = vor.u32 %v2400, %v2401
    %s2403 = scalar_lea.vmem [#allocation2], 136
    %v2404 = vld [vmem:[%s2403] ss:$16 sm:$0x3]
    %v2405 = vld [vmem:[%s2403] ss:$16 sm:$0xc]
    %v2406 = vor.u32 %v2404, %v2405
    %v2407 = vld [vmem:[%s2403] ss:$16 sm:$0x30]
    %v2408 = vor.u32 %v2406, %v2407
    %v2409 = vld [vmem:[%s2403] ss:$16 sm:$0xc0]
    %v2410 = vor.u32 %v2408, %v2409
    %s2411 = scalar_lea.vmem [#allocation2], 9
    %v2412 = vld [vmem:[%s2411] ss:$16 sm:$0x3]
    %v2413 = vld [vmem:[%s2411] ss:$16 sm:$0xc]
    %v2414 = vor.u32 %v2412, %v2413
    %v2415 = vld [vmem:[%s2411] ss:$16 sm:$0x30]
    %v2416 = vor.u32 %v2414, %v2415
    %v2417 = vld [vmem:[%s2411] ss:$16 sm:$0xc0]
    %v2418 = vor.u32 %v2416, %v2417
    %s2419 = scalar_lea.vmem [#allocation2], 137
    %v2420 = vld [vmem:[%s2419] ss:$16 sm:$0x3]
    %v2421 = vld [vmem:[%s2419] ss:$16 sm:$0xc]
    %v2422 = vor.u32 %v2420, %v2421
    %v2423 = vld [vmem:[%s2419] ss:$16 sm:$0x30]
    %v2424 = vor.u32 %v2422, %v2423
    %v2425 = vld [vmem:[%s2419] ss:$16 sm:$0xc0]
    %v2426 = vor.u32 %v2424, %v2425
    %v2427 = vld [vmem:[#allocation5] sm:$0xff]
    %v2428 = vld [vmem:[#allocation5 + $0x8] sm:$0xff]
    %v2429 = vld [vmem:[#allocation5 + $0x10] sm:$0xff]
    %v2430 = vld [vmem:[#allocation5 + $0x18] sm:$0xff]
    %v2431 = vld [vmem:[#allocation5 + $0x20] sm:$0xff]
    %v2432 = vld [vmem:[#allocation5 + $0x28] sm:$0xff]
    %v2433 = vld [vmem:[#allocation5 + $0x30] sm:$0xff]
    %v2434 = vld [vmem:[#allocation5 + $0x38] sm:$0xff]
    %v2435 = vld [vmem:[#allocation5 + $0x40] sm:$0xff]
    %v2436 = vld [vmem:[#allocation5 + $0x48] sm:$0xff]
    %v2437 = vld [vmem:[#allocation5 + $0x50] sm:$0xff]
    %v2438 = vld [vmem:[#allocation5 + $0x58] sm:$0xff]
    %v2439 = vld [vmem:[#allocation5 + $0x60] sm:$0xff]
    %v2440 = vld [vmem:[#allocation5 + $0x68] sm:$0xff]
    %v2441 = vld [vmem:[#allocation5 + $0x70] sm:$0xff]
    %v2442 = vld [vmem:[#allocation5 + $0x78] sm:$0xff]
    %v2443 = vld [vmem:[#allocation5 + $0x80] sm:$0xff]
    %v2444 = vld [vmem:[#allocation5 + $0x88] sm:$0xff]
    %v2445 = vld [vmem:[#allocation5 + $0x90] sm:$0xff]
    %v2446 = vld [vmem:[#allocation5 + $0x98] sm:$0xff]
    %v2447 = vld [vmem:[#allocation5 + $0xa0] sm:$0xff]
    %v2448 = vld [vmem:[#allocation5 + $0xa8] sm:$0xff]
    %v2449 = vld [vmem:[#allocation5 + $0xb0] sm:$0xff]
    %v2450 = vld [vmem:[#allocation5 + $0xb8] sm:$0xff]
    %v2451 = vld [vmem:[#allocation5 + $0xc0] sm:$0xff]
    %v2452 = vld [vmem:[#allocation5 + $0xc8] sm:$0xff]
    %v2453 = vld [vmem:[#allocation5 + $0xd0] sm:$0xff]
    %v2454 = vld [vmem:[#allocation5 + $0xd8] sm:$0xff]
    %v2455 = vld [vmem:[#allocation5 + $0xe0] sm:$0xff]
    %v2456 = vld [vmem:[#allocation5 + $0xe8] sm:$0xff]
    %v2457 = vld [vmem:[#allocation5 + $0xf0] sm:$0xff]
    %v2458 = vld [vmem:[#allocation5 + $0xf8] sm:$0xff]
    %v2459 = vld [vmem:[#allocation5 + $0x100] sm:$0xff]
    %v2460 = vld [vmem:[#allocation5 + $0x108] sm:$0xff]
    %v2461 = vld [vmem:[#allocation5 + $0x110] sm:$0xff]
    %v2462 = vld [vmem:[#allocation5 + $0x118] sm:$0xff]
    %v2463 = vld [vmem:[#allocation5 + $0x120] sm:$0xff]
    %v2464 = vld [vmem:[#allocation5 + $0x128] sm:$0xff]
    %v2465 = vld [vmem:[#allocation5 + $0x130] sm:$0xff]
    %v2466 = vld [vmem:[#allocation5 + $0x138] sm:$0xff]
    %v2467 = vld [vmem:[#allocation5 + $0x140] sm:$0xff]
    %v2468 = vld [vmem:[#allocation5 + $0x148] sm:$0xff]
    %v2469 = vld [vmem:[#allocation5 + $0x150] sm:$0xff]
    %v2470 = vld [vmem:[#allocation5 + $0x158] sm:$0xff]
    %v2471 = vld [vmem:[#allocation5 + $0x160] sm:$0xff]
    %v2472 = vld [vmem:[#allocation5 + $0x168] sm:$0xff]
    %v2473 = vld [vmem:[#allocation5 + $0x170] sm:$0xff]
    %v2474 = vld [vmem:[#allocation5 + $0x178] sm:$0xff]
    %v2475 = vld [vmem:[#allocation5 + $0x180] sm:$0xff]
    %v2476 = vld [vmem:[#allocation5 + $0x188] sm:$0xff]
    %v2477 = vld [vmem:[#allocation5 + $0x190] sm:$0xff]
    %v2478 = vld [vmem:[#allocation5 + $0x198] sm:$0xff]
    %v2479 = vld [vmem:[#allocation5 + $0x1a0] sm:$0xff]
    %v2480 = vld [vmem:[#allocation5 + $0x1a8] sm:$0xff]
    %v2481 = vld [vmem:[#allocation5 + $0x1b0] sm:$0xff]
    %v2482 = vld [vmem:[#allocation5 + $0x1b8] sm:$0xff]
    %v2483 = vld [vmem:[#allocation5 + $0x1c0] sm:$0xff]
    %v2484 = vld [vmem:[#allocation5 + $0x1c8] sm:$0xff]
    %v2485 = vld [vmem:[#allocation5 + $0x1d0] sm:$0xff]
    %v2486 = vld [vmem:[#allocation5 + $0x1d8] sm:$0xff]
    %v2487 = vld [vmem:[#allocation5 + $0x1e0] sm:$0xff]
    %v2488 = vld [vmem:[#allocation5 + $0x1e8] sm:$0xff]
    %v2489 = vld [vmem:[#allocation5 + $0x1f0] sm:$0xff]
    %v2490 = vld [vmem:[#allocation5 + $0x1f8] sm:$0xff]
    %v2491 = vld [vmem:[#allocation5 + $0x200] sm:$0xff]
    %v2492 = vld [vmem:[#allocation5 + $0x208] sm:$0xff]
    %v2493 = vld [vmem:[#allocation5 + $0x210] sm:$0xff]
    %v2494 = vld [vmem:[#allocation5 + $0x218] sm:$0xff]
    %v2495 = vld [vmem:[#allocation5 + $0x220] sm:$0xff]
    %v2496 = vld [vmem:[#allocation5 + $0x228] sm:$0xff]
    %v2497 = vld [vmem:[#allocation5 + $0x230] sm:$0xff]
    %v2498 = vld [vmem:[#allocation5 + $0x238] sm:$0xff]
    %v2499 = vld [vmem:[#allocation5 + $0x240] sm:$0xff]
    %v2500 = vld [vmem:[#allocation5 + $0x248] sm:$0xff]
    %v2501 = vld [vmem:[#allocation5 + $0x250] sm:$0xff]
    %v2502 = vld [vmem:[#allocation5 + $0x258] sm:$0xff]
    %v2503 = vld [vmem:[#allocation5 + $0x260] sm:$0xff]
    %v2504 = vld [vmem:[#allocation5 + $0x268] sm:$0xff]
    %v2505 = vld [vmem:[#allocation5 + $0x270] sm:$0xff]
    %v2506 = vld [vmem:[#allocation5 + $0x278] sm:$0xff]
    %v2507 = vld [vmem:[#allocation5 + $0x280] sm:$0xff]
    %v2508 = vld [vmem:[#allocation5 + $0x288] sm:$0xff]
    %v2509 = vld [vmem:[#allocation5 + $0x290] sm:$0xff]
    %v2510 = vld [vmem:[#allocation5 + $0x298] sm:$0xff]
    %v2511 = vld [vmem:[#allocation5 + $0x2a0] sm:$0xff]
    %v2512 = vld [vmem:[#allocation5 + $0x2a8] sm:$0xff]
    %v2513 = vld [vmem:[#allocation5 + $0x2b0] sm:$0xff]
    %v2514 = vld [vmem:[#allocation5 + $0x2b8] sm:$0xff]
    %v2515 = vld [vmem:[#allocation5 + $0x2c0] sm:$0xff]
    %v2516 = vld [vmem:[#allocation5 + $0x2c8] sm:$0xff]
    %v2517 = vld [vmem:[#allocation5 + $0x2d0] sm:$0xff]
    %v2518 = vld [vmem:[#allocation5 + $0x2d8] sm:$0xff]
    %v2519 = vld [vmem:[#allocation5 + $0x2e0] sm:$0xff]
    %v2520 = vld [vmem:[#allocation5 + $0x2e8] sm:$0xff]
    %v2521 = vld [vmem:[#allocation5 + $0x2f0] sm:$0xff]
    %v2522 = vld [vmem:[#allocation5 + $0x2f8] sm:$0xff]
    %v2523 = vld [vmem:[#allocation5 + $0x300] sm:$0xff]
    %v2524 = vld [vmem:[#allocation5 + $0x308] sm:$0xff]
    %v2525 = vld [vmem:[#allocation5 + $0x310] sm:$0xff]
    %v2526 = vld [vmem:[#allocation5 + $0x318] sm:$0xff]
    %v2527 = vld [vmem:[#allocation5 + $0x320] sm:$0xff]
    %v2528 = vld [vmem:[#allocation5 + $0x328] sm:$0xff]
    %v2529 = vld [vmem:[#allocation5 + $0x330] sm:$0xff]
    %v2530 = vld [vmem:[#allocation5 + $0x338] sm:$0xff]
    %v2531 = vld [vmem:[#allocation5 + $0x340] sm:$0xff]
    %v2532 = vld [vmem:[#allocation5 + $0x348] sm:$0xff]
    %v2533 = vld [vmem:[#allocation5 + $0x350] sm:$0xff]
    %v2534 = vld [vmem:[#allocation5 + $0x358] sm:$0xff]
    %v2535 = vld [vmem:[#allocation5 + $0x360] sm:$0xff]
    %v2536 = vld [vmem:[#allocation5 + $0x368] sm:$0xff]
    %v2537 = vld [vmem:[#allocation5 + $0x370] sm:$0xff]
    %v2538 = vld [vmem:[#allocation5 + $0x378] sm:$0xff]
    %v2539 = vld [vmem:[#allocation5 + $0x380] sm:$0xff]
    %v2540 = vld [vmem:[#allocation5 + $0x388] sm:$0xff]
    %v2541 = vld [vmem:[#allocation5 + $0x390] sm:$0xff]
    %v2542 = vld [vmem:[#allocation5 + $0x398] sm:$0xff]
    %v2543 = vld [vmem:[#allocation5 + $0x3a0] sm:$0xff]
    %v2544 = vld [vmem:[#allocation5 + $0x3a8] sm:$0xff]
    %v2545 = vld [vmem:[#allocation5 + $0x3b0] sm:$0xff]
    %v2546 = vld [vmem:[#allocation5 + $0x3b8] sm:$0xff]
    %v2547 = vld [vmem:[#allocation5 + $0x3c0] sm:$0xff]
    %v2548 = vld [vmem:[#allocation5 + $0x3c8] sm:$0xff]
    %v2549 = vld [vmem:[#allocation5 + $0x3d0] sm:$0xff]
    %v2550 = vld [vmem:[#allocation5 + $0x3d8] sm:$0xff]
    %v2551 = vld [vmem:[#allocation5 + $0x3e0] sm:$0xff]
    %v2552 = vld [vmem:[#allocation5 + $0x3e8] sm:$0xff]
    %v2553 = vld [vmem:[#allocation5 + $0x3f0] sm:$0xff]
    %v2554 = vld [vmem:[#allocation5 + $0x3f8] sm:$0xff]
    %v2555 = vld [vmem:[#allocation5 + $0x400] sm:$0xff]
    %v2556 = vld [vmem:[#allocation5 + $0x408] sm:$0xff]
    %v2557 = vld [vmem:[#allocation5 + $0x410] sm:$0xff]
    %v2558 = vld [vmem:[#allocation5 + $0x418] sm:$0xff]
    %v2559 = vld [vmem:[#allocation5 + $0x420] sm:$0xff]
    %v2560 = vld [vmem:[#allocation5 + $0x428] sm:$0xff]
    %v2561 = vld [vmem:[#allocation5 + $0x430] sm:$0xff]
    %v2562 = vld [vmem:[#allocation5 + $0x438] sm:$0xff]
    %v2563 = vld [vmem:[#allocation5 + $0x440] sm:$0xff]
    %v2564 = vld [vmem:[#allocation5 + $0x448] sm:$0xff]
    %v2565 = vld [vmem:[#allocation5 + $0x450] sm:$0xff]
    %v2566 = vld [vmem:[#allocation5 + $0x458] sm:$0xff]
    %v2567 = vld [vmem:[#allocation5 + $0x460] sm:$0xff]
    %v2568 = vld [vmem:[#allocation5 + $0x468] sm:$0xff]
    %v2569 = vld [vmem:[#allocation5 + $0x470] sm:$0xff]
    %v2570 = vld [vmem:[#allocation5 + $0x478] sm:$0xff]
    %v2571 = vld [vmem:[#allocation5 + $0x480] sm:$0xff]
    %v2572 = vld [vmem:[#allocation5 + $0x488] sm:$0xff]
    %v2573 = vld [vmem:[#allocation5 + $0x490] sm:$0xff]
    %v2574 = vld [vmem:[#allocation5 + $0x498] sm:$0xff]
    %v2575 = vld [vmem:[#allocation5 + $0x4a0] sm:$0xff]
    %v2576 = vld [vmem:[#allocation5 + $0x4a8] sm:$0xff]
    %v2577 = vld [vmem:[#allocation5 + $0x4b0] sm:$0xff]
    %v2578 = vld [vmem:[#allocation5 + $0x4b8] sm:$0xff]
    %v2579 = vld [vmem:[#allocation5 + $0x4c0] sm:$0xff]
    %v2580 = vld [vmem:[#allocation5 + $0x4c8] sm:$0xff]
    %v2581 = vld [vmem:[#allocation5 + $0x4d0] sm:$0xff]
    %v2582 = vld [vmem:[#allocation5 + $0x4d8] sm:$0xff]
    %v2583 = vld [vmem:[#allocation5 + $0x4e0] sm:$0xff]
    %v2584 = vld [vmem:[#allocation5 + $0x4e8] sm:$0xff]
    %v2585 = vld [vmem:[#allocation5 + $0x4f0] sm:$0xff]
    %v2586 = vld [vmem:[#allocation5 + $0x4f8] sm:$0xff]
    %v2587 = vld [vmem:[%s6] sm:$0x1]
    %v2589 = vlaneseq
    %v2590 = vshrl.u32 %v2589, 7
    %v2591 = vsub.s32 0, %v2590
    %v2592 = vrot.slane %v2587, %v2591
    %2594 = vmatprep.subr.mxu0 0.0
    %2595 = vmatpush1.msra.mxu0 %v2442
    %2596 = vmatprep.subr.mxu0 0.0
    %2597 = vmatpush1.msra.mxu0 %v2441
    %2598 = vmatprep.subr.mxu0 0.0
    %2599 = vmatpush1.msra.mxu0 %v2440
    %2600 = vmatprep.subr.mxu0 0.0
    %2601 = vmatpush1.msra.mxu0 %v2439
    %2602 = vmatprep.subr.mxu0 0.0
    %2603 = vmatpush1.msra.mxu0 %v2438
    %2604 = vmatprep.subr.mxu0 0.0
    %2605 = vmatpush1.msra.mxu0 %v2437
    %2606 = vmatprep.subr.mxu0 0.0
    %2607 = vmatpush1.msra.mxu0 %v2436
    %2608 = vmatprep.subr.mxu0 0.0
    %2609 = vmatpush1.msra.mxu0 %v2435
    %2610 = vmatprep.subr.mxu0 0.0
    %2611 = vmatpush1.msra.mxu0 %v2434
    %2612 = vmatprep.subr.mxu0 0.0
    %2613 = vmatpush1.msra.mxu0 %v2433
    %2614 = vmatprep.subr.mxu0 0.0
    %2615 = vmatpush1.msra.mxu0 %v2432
    %2616 = vmatprep.subr.mxu0 0.0
    %2617 = vmatpush1.msra.mxu0 %v2431
    %2618 = vmatprep.subr.mxu0 0.0
    %2619 = vmatpush1.msra.mxu0 %v2430
    %2620 = vmatprep.subr.mxu0 0.0
    %2621 = vmatpush1.msra.mxu0 %v2429
    %2622 = vmatprep.subr.mxu0 0.0
    %2623 = vmatpush1.msra.mxu0 %v2428
    %2624 = vmatprep.subr.mxu0 0.0
    %2625 = vmatpush1.msra.mxu0 %v2427
    %2626 = vmatprep.subr.mxu0 0.0
    %2627 = vmatpush2.msra.mxu0 %v2458
    %2628 = vmatprep.subr.mxu0 0.0
    %2629 = vmatpush2.msra.mxu0 %v2457
    %2630 = vmatprep.subr.mxu0 0.0
    %2631 = vmatpush2.msra.mxu0 %v2456
    %2632 = vmatprep.subr.mxu0 0.0
    %2633 = vmatpush2.msra.mxu0 %v2455
    %2634 = vmatprep.subr.mxu0 0.0
    %2635 = vmatpush2.msra.mxu0 %v2454
    %2636 = vmatprep.subr.mxu0 0.0
    %2637 = vmatpush2.msra.mxu0 %v2453
    %2638 = vmatprep.subr.mxu0 0.0
    %2639 = vmatpush2.msra.mxu0 %v2452
    %2640 = vmatprep.subr.mxu0 0.0
    %2641 = vmatpush2.msra.mxu0 %v2451
    %2642 = vmatprep.subr.mxu0 0.0
    %2643 = vmatpush2.msra.mxu0 %v2450
    %2644 = vmatprep.subr.mxu0 0.0
    %2645 = vmatpush2.msra.mxu0 %v2449
    %2646 = vmatprep.subr.mxu0 0.0
    %2647 = vmatpush2.msra.mxu0 %v2448
    %2648 = vmatprep.subr.mxu0 0.0
    %2649 = vmatpush2.msra.mxu0 %v2447
    %2650 = vmatprep.subr.mxu0 0.0
    %2651 = vmatpush2.msra.mxu0 %v2446
    %2652 = vmatprep.subr.mxu0 0.0
    %2653 = vmatpush2.msra.mxu0 %v2445
    %2654 = vmatprep.subr.mxu0 0.0
    %2655 = vmatpush2.msra.mxu0 %v2444
    %2656 = vmatprep.subr.mxu0 0.0
    %2657 = vmatpush2.msra.mxu0 %v2443
    %2658 = vmatprep.mubr.f32.mxu0 %v2290
    %2659 = vmatmul.mubr.f32.gmra.mxu0 %v2274
    %v2660 = vpop.f32.mrf.mxu0
    %v2661 = vadd.f32 %v2592, %v2660
    %v2662 = vpop.f32.mrf.mxu0
    %2663 = vmatprep.mubr.f32.mxu0 %v2298
    %2664 = vmatmul.mubr.f32.gmra.mxu0 %v2282
    %v2665 = vpop.f32.mrf.mxu0
    %v2666 = vadd.f32 %v2592, %v2665
    %v2667 = vpop.f32.mrf.mxu0
    %2668 = vdwg.mxu0
    %2669 = vmatprep.subr.mxu0 0.0
    %2670 = vmatpush1.msra.mxu0 %v2474
    %2671 = vmatprep.subr.mxu0 0.0
    %2672 = vmatpush1.msra.mxu0 %v2473
    %2673 = vmatprep.subr.mxu0 0.0
    %2674 = vmatpush1.msra.mxu0 %v2472
    %2675 = vmatprep.subr.mxu0 0.0
    %2676 = vmatpush1.msra.mxu0 %v2471
    %2677 = vmatprep.subr.mxu0 0.0
    %2678 = vmatpush1.msra.mxu0 %v2470
    %2679 = vmatprep.subr.mxu0 0.0
    %2680 = vmatpush1.msra.mxu0 %v2469
    %2681 = vmatprep.subr.mxu0 0.0
    %2682 = vmatpush1.msra.mxu0 %v2468
    %2683 = vmatprep.subr.mxu0 0.0
    %2684 = vmatpush1.msra.mxu0 %v2467
    %2685 = vmatprep.subr.mxu0 0.0
    %2686 = vmatpush1.msra.mxu0 %v2466
    %2687 = vmatprep.subr.mxu0 0.0
    %2688 = vmatpush1.msra.mxu0 %v2465
    %2689 = vmatprep.subr.mxu0 0.0
    %2690 = vmatpush1.msra.mxu0 %v2464
    %2691 = vmatprep.subr.mxu0 0.0
    %2692 = vmatpush1.msra.mxu0 %v2463
    %2693 = vmatprep.subr.mxu0 0.0
    %2694 = vmatpush1.msra.mxu0 %v2462
    %2695 = vmatprep.subr.mxu0 0.0
    %2696 = vmatpush1.msra.mxu0 %v2461
    %2697 = vmatprep.subr.mxu0 0.0
    %2698 = vmatpush1.msra.mxu0 %v2460
    %2699 = vmatprep.subr.mxu0 0.0
    %2700 = vmatpush1.msra.mxu0 %v2459
    %2701 = vmatprep.subr.mxu0 0.0
    %2702 = vmatpush2.msra.mxu0 %v2490
    %2703 = vmatprep.subr.mxu0 0.0
    %2704 = vmatpush2.msra.mxu0 %v2489
    %2705 = vmatprep.subr.mxu0 0.0
    %2706 = vmatpush2.msra.mxu0 %v2488
    %2707 = vmatprep.subr.mxu0 0.0
    %2708 = vmatpush2.msra.mxu0 %v2487
    %2709 = vmatprep.subr.mxu0 0.0
    %2710 = vmatpush2.msra.mxu0 %v2486
    %2711 = vmatprep.subr.mxu0 0.0
    %2712 = vmatpush2.msra.mxu0 %v2485
    %2713 = vmatprep.subr.mxu0 0.0
    %2714 = vmatpush2.msra.mxu0 %v2484
    %2715 = vmatprep.subr.mxu0 0.0
    %2716 = vmatpush2.msra.mxu0 %v2483
    %2717 = vmatprep.subr.mxu0 0.0
    %2718 = vmatpush2.msra.mxu0 %v2482
    %2719 = vmatprep.subr.mxu0 0.0
    %2720 = vmatpush2.msra.mxu0 %v2481
    %2721 = vmatprep.subr.mxu0 0.0
    %2722 = vmatpush2.msra.mxu0 %v2480
    %2723 = vmatprep.subr.mxu0 0.0
    %2724 = vmatpush2.msra.mxu0 %v2479
    %2725 = vmatprep.subr.mxu0 0.0
    %2726 = vmatpush2.msra.mxu0 %v2478
    %2727 = vmatprep.subr.mxu0 0.0
    %2728 = vmatpush2.msra.mxu0 %v2477
    %2729 = vmatprep.subr.mxu0 0.0
    %2730 = vmatpush2.msra.mxu0 %v2476
    %2731 = vmatprep.subr.mxu0 0.0
    %2732 = vmatpush2.msra.mxu0 %v2475
    %2733 = vmatprep.mubr.f32.mxu0 %v2322
    %2734 = vmatmul.mubr.f32.gmra.mxu0 %v2306
    %v2735 = vpop.f32.mrf.mxu0
    %v2736 = vadd.f32 %v2661, %v2735
    %v2737 = vpop.f32.mrf.mxu0
    %2738 = vmatprep.mubr.f32.mxu0 %v2330
    %2739 = vmatmul.mubr.f32.gmra.mxu0 %v2314
    %v2740 = vpop.f32.mrf.mxu0
    %v2741 = vadd.f32 %v2666, %v2740
    %v2742 = vpop.f32.mrf.mxu0
    %2743 = vdwg.mxu0
    %2744 = vmatprep.subr.mxu0 0.0
    %2745 = vmatpush1.msra.mxu0 %v2506
    %2746 = vmatprep.subr.mxu0 0.0
    %2747 = vmatpush1.msra.mxu0 %v2505
    %2748 = vmatprep.subr.mxu0 0.0
    %2749 = vmatpush1.msra.mxu0 %v2504
    %2750 = vmatprep.subr.mxu0 0.0
    %2751 = vmatpush1.msra.mxu0 %v2503
    %2752 = vmatprep.subr.mxu0 0.0
    %2753 = vmatpush1.msra.mxu0 %v2502
    %2754 = vmatprep.subr.mxu0 0.0
    %2755 = vmatpush1.msra.mxu0 %v2501
    %2756 = vmatprep.subr.mxu0 0.0
    %2757 = vmatpush1.msra.mxu0 %v2500
    %2758 = vmatprep.subr.mxu0 0.0
    %2759 = vmatpush1.msra.mxu0 %v2499
    %2760 = vmatprep.subr.mxu0 0.0
    %2761 = vmatpush1.msra.mxu0 %v2498
    %2762 = vmatprep.subr.mxu0 0.0
    %2763 = vmatpush1.msra.mxu0 %v2497
    %2764 = vmatprep.subr.mxu0 0.0
    %2765 = vmatpush1.msra.mxu0 %v2496
    %2766 = vmatprep.subr.mxu0 0.0
    %2767 = vmatpush1.msra.mxu0 %v2495
    %2768 = vmatprep.subr.mxu0 0.0
    %2769 = vmatpush1.msra.mxu0 %v2494
    %2770 = vmatprep.subr.mxu0 0.0
    %2771 = vmatpush1.msra.mxu0 %v2493
    %2772 = vmatprep.subr.mxu0 0.0
    %2773 = vmatpush1.msra.mxu0 %v2492
    %2774 = vmatprep.subr.mxu0 0.0
    %2775 = vmatpush1.msra.mxu0 %v2491
    %2776 = vmatprep.subr.mxu0 0.0
    %2777 = vmatpush2.msra.mxu0 %v2522
    %2778 = vmatprep.subr.mxu0 0.0
    %2779 = vmatpush2.msra.mxu0 %v2521
    %2780 = vmatprep.subr.mxu0 0.0
    %2781 = vmatpush2.msra.mxu0 %v2520
    %2782 = vmatprep.subr.mxu0 0.0
    %2783 = vmatpush2.msra.mxu0 %v2519
    %2784 = vmatprep.subr.mxu0 0.0
    %2785 = vmatpush2.msra.mxu0 %v2518
    %2786 = vmatprep.subr.mxu0 0.0
    %2787 = vmatpush2.msra.mxu0 %v2517
    %2788 = vmatprep.subr.mxu0 0.0
    %2789 = vmatpush2.msra.mxu0 %v2516
    %2790 = vmatprep.subr.mxu0 0.0
    %2791 = vmatpush2.msra.mxu0 %v2515
    %2792 = vmatprep.subr.mxu0 0.0
    %2793 = vmatpush2.msra.mxu0 %v2514
    %2794 = vmatprep.subr.mxu0 0.0
    %2795 = vmatpush2.msra.mxu0 %v2513
    %2796 = vmatprep.subr.mxu0 0.0
    %2797 = vmatpush2.msra.mxu0 %v2512
    %2798 = vmatprep.subr.mxu0 0.0
    %2799 = vmatpush2.msra.mxu0 %v2511
    %2800 = vmatprep.subr.mxu0 0.0
    %2801 = vmatpush2.msra.mxu0 %v2510
    %2802 = vmatprep.subr.mxu0 0.0
    %2803 = vmatpush2.msra.mxu0 %v2509
    %2804 = vmatprep.subr.mxu0 0.0
    %2805 = vmatpush2.msra.mxu0 %v2508
    %2806 = vmatprep.subr.mxu0 0.0
    %2807 = vmatpush2.msra.mxu0 %v2507
    %2808 = vmatprep.mubr.f32.mxu0 %v2354
    %2809 = vmatmul.mubr.f32.gmra.mxu0 %v2338
    %v2810 = vpop.f32.mrf.mxu0
    %v2811 = vadd.f32 %v2736, %v2810
    %v2812 = vpop.f32.mrf.mxu0
    %2813 = vmatprep.mubr.f32.mxu0 %v2362
    %2814 = vmatmul.mubr.f32.gmra.mxu0 %v2346
    %v2815 = vpop.f32.mrf.mxu0
    %v2816 = vadd.f32 %v2741, %v2815
    %v2817 = vpop.f32.mrf.mxu0
    %2818 = vdwg.mxu0
    %2819 = vmatprep.subr.mxu0 0.0
    %2820 = vmatpush1.msra.mxu0 %v2538
    %2821 = vmatprep.subr.mxu0 0.0
    %2822 = vmatpush1.msra.mxu0 %v2537
    %2823 = vmatprep.subr.mxu0 0.0
    %2824 = vmatpush1.msra.mxu0 %v2536
    %2825 = vmatprep.subr.mxu0 0.0
    %2826 = vmatpush1.msra.mxu0 %v2535
    %2827 = vmatprep.subr.mxu0 0.0
    %2828 = vmatpush1.msra.mxu0 %v2534
    %2829 = vmatprep.subr.mxu0 0.0
    %2830 = vmatpush1.msra.mxu0 %v2533
    %2831 = vmatprep.subr.mxu0 0.0
    %2832 = vmatpush1.msra.mxu0 %v2532
    %2833 = vmatprep.subr.mxu0 0.0
    %2834 = vmatpush1.msra.mxu0 %v2531
    %2835 = vmatprep.subr.mxu0 0.0
    %2836 = vmatpush1.msra.mxu0 %v2530
    %2837 = vmatprep.subr.mxu0 0.0
    %2838 = vmatpush1.msra.mxu0 %v2529
    %2839 = vmatprep.subr.mxu0 0.0
    %2840 = vmatpush1.msra.mxu0 %v2528
    %2841 = vmatprep.subr.mxu0 0.0
    %2842 = vmatpush1.msra.mxu0 %v2527
    %2843 = vmatprep.subr.mxu0 0.0
    %2844 = vmatpush1.msra.mxu0 %v2526
    %2845 = vmatprep.subr.mxu0 0.0
    %2846 = vmatpush1.msra.mxu0 %v2525
    %2847 = vmatprep.subr.mxu0 0.0
    %2848 = vmatpush1.msra.mxu0 %v2524
    %2849 = vmatprep.subr.mxu0 0.0
    %2850 = vmatpush1.msra.mxu0 %v2523
    %2851 = vmatprep.subr.mxu0 0.0
    %2852 = vmatpush2.msra.mxu0 %v2554
    %2853 = vmatprep.subr.mxu0 0.0
    %2854 = vmatpush2.msra.mxu0 %v2553
    %2855 = vmatprep.subr.mxu0 0.0
    %2856 = vmatpush2.msra.mxu0 %v2552
    %2857 = vmatprep.subr.mxu0 0.0
    %2858 = vmatpush2.msra.mxu0 %v2551
    %2859 = vmatprep.subr.mxu0 0.0
    %2860 = vmatpush2.msra.mxu0 %v2550
    %2861 = vmatprep.subr.mxu0 0.0
    %2862 = vmatpush2.msra.mxu0 %v2549
    %2863 = vmatprep.subr.mxu0 0.0
    %2864 = vmatpush2.msra.mxu0 %v2548
    %2865 = vmatprep.subr.mxu0 0.0
    %2866 = vmatpush2.msra.mxu0 %v2547
    %2867 = vmatprep.subr.mxu0 0.0
    %2868 = vmatpush2.msra.mxu0 %v2546
    %2869 = vmatprep.subr.mxu0 0.0
    %2870 = vmatpush2.msra.mxu0 %v2545
    %2871 = vmatprep.subr.mxu0 0.0
    %2872 = vmatpush2.msra.mxu0 %v2544
    %2873 = vmatprep.subr.mxu0 0.0
    %2874 = vmatpush2.msra.mxu0 %v2543
    %2875 = vmatprep.subr.mxu0 0.0
    %2876 = vmatpush2.msra.mxu0 %v2542
    %2877 = vmatprep.subr.mxu0 0.0
    %2878 = vmatpush2.msra.mxu0 %v2541
    %2879 = vmatprep.subr.mxu0 0.0
    %2880 = vmatpush2.msra.mxu0 %v2540
    %2881 = vmatprep.subr.mxu0 0.0
    %2882 = vmatpush2.msra.mxu0 %v2539
    %2883 = vmatprep.mubr.f32.mxu0 %v2386
    %2884 = vmatmul.mubr.f32.gmra.mxu0 %v2370
    %v2885 = vpop.f32.mrf.mxu0
    %v2886 = vadd.f32 %v2811, %v2885
    %v2887 = vpop.f32.mrf.mxu0
    %2888 = vmatprep.mubr.f32.mxu0 %v2394
    %2889 = vmatmul.mubr.f32.gmra.mxu0 %v2378
    %v2890 = vpop.f32.mrf.mxu0
    %v2891 = vadd.f32 %v2816, %v2890
    %v2892 = vpop.f32.mrf.mxu0
    %2893 = vdwg.mxu0
    %2894 = vmatprep.subr.mxu0 0.0
    %2895 = vmatpush1.msra.mxu0 %v2570
    %2896 = vmatprep.subr.mxu0 0.0
    %2897 = vmatpush1.msra.mxu0 %v2569
    %2898 = vmatprep.subr.mxu0 0.0
    %2899 = vmatpush1.msra.mxu0 %v2568
    %2900 = vmatprep.subr.mxu0 0.0
    %2901 = vmatpush1.msra.mxu0 %v2567
    %2902 = vmatprep.subr.mxu0 0.0
    %2903 = vmatpush1.msra.mxu0 %v2566
    %2904 = vmatprep.subr.mxu0 0.0
    %2905 = vmatpush1.msra.mxu0 %v2565
    %2906 = vmatprep.subr.mxu0 0.0
    %2907 = vmatpush1.msra.mxu0 %v2564
    %2908 = vmatprep.subr.mxu0 0.0
    %2909 = vmatpush1.msra.mxu0 %v2563
    %2910 = vmatprep.subr.mxu0 0.0
    %2911 = vmatpush1.msra.mxu0 %v2562
    %2912 = vmatprep.subr.mxu0 0.0
    %2913 = vmatpush1.msra.mxu0 %v2561
    %2914 = vmatprep.subr.mxu0 0.0
    %2915 = vmatpush1.msra.mxu0 %v2560
    %2916 = vmatprep.subr.mxu0 0.0
    %2917 = vmatpush1.msra.mxu0 %v2559
    %2918 = vmatprep.subr.mxu0 0.0
    %2919 = vmatpush1.msra.mxu0 %v2558
    %2920 = vmatprep.subr.mxu0 0.0
    %2921 = vmatpush1.msra.mxu0 %v2557
    %2922 = vmatprep.subr.mxu0 0.0
    %2923 = vmatpush1.msra.mxu0 %v2556
    %2924 = vmatprep.subr.mxu0 0.0
    %2925 = vmatpush1.msra.mxu0 %v2555
    %2926 = vmatprep.subr.mxu0 0.0
    %2927 = vmatpush2.msra.mxu0 %v2586
    %2928 = vmatprep.subr.mxu0 0.0
    %2929 = vmatpush2.msra.mxu0 %v2585
    %2930 = vmatprep.subr.mxu0 0.0
    %2931 = vmatpush2.msra.mxu0 %v2584
    %2932 = vmatprep.subr.mxu0 0.0
    %2933 = vmatpush2.msra.mxu0 %v2583
    %2934 = vmatprep.subr.mxu0 0.0
    %2935 = vmatpush2.msra.mxu0 %v2582
    %2936 = vmatprep.subr.mxu0 0.0
    %2937 = vmatpush2.msra.mxu0 %v2581
    %2938 = vmatprep.subr.mxu0 0.0
    %2939 = vmatpush2.msra.mxu0 %v2580
    %2940 = vmatprep.subr.mxu0 0.0
    %2941 = vmatpush2.msra.mxu0 %v2579
    %2942 = vmatprep.subr.mxu0 0.0
    %2943 = vmatpush2.msra.mxu0 %v2578
    %2944 = vmatprep.subr.mxu0 0.0
    %2945 = vmatpush2.msra.mxu0 %v2577
    %2946 = vmatprep.subr.mxu0 0.0
    %2947 = vmatpush2.msra.mxu0 %v2576
    %2948 = vmatprep.subr.mxu0 0.0
    %2949 = vmatpush2.msra.mxu0 %v2575
    %2950 = vmatprep.subr.mxu0 0.0
    %2951 = vmatpush2.msra.mxu0 %v2574
    %2952 = vmatprep.subr.mxu0 0.0
    %2953 = vmatpush2.msra.mxu0 %v2573
    %2954 = vmatprep.subr.mxu0 0.0
    %2955 = vmatpush2.msra.mxu0 %v2572
    %2956 = vmatprep.subr.mxu0 0.0
    %2957 = vmatpush2.msra.mxu0 %v2571
    %2958 = vmatprep.mubr.f32.mxu0 %v2418
    %2959 = vmatmul.mubr.f32.gmra.mxu0 %v2402
    %v2960 = vpop.f32.mrf.mxu0
    %v2961 = vadd.f32 %v2886, %v2960
    %v2962 = vpop.f32.mrf.mxu0
    %2963 = vmatprep.mubr.f32.mxu0 %v2426
    %2964 = vmatmul.mubr.f32.gmra.mxu0 %v2410
    %v2965 = vpop.f32.mrf.mxu0
    %v2966 = vadd.f32 %v2891, %v2965
    %v2967 = vpop.f32.mrf.mxu0
    %2968 = vdwg.mxu0
    %v2969 = vmin.f32 %v2961, 0.0
    %v2970 = vmin.f32 %v2966, 0.0
    %v2971 = vand.u32 2147483647, %v2961
    %v2972 = vand.u32 2147483647, %v2966
    %v2973 = vsub.f32 0.0, %v2971
    %v2974 = vsub.f32 0.0, %v2972
    %v2975 = vmul.f32 %v2973, 1.442695
    %v2976 = vpow.pop %v2975
    %v2977 = vmul.f32 %v2974, 1.442695
    %v2978 = vpow.pop %v2977
    %v2979 = vadd.f32 %v2976, 1.0
    %v2980 = vadd.f32 %v2978, 1.0
    %v2981 = vlog2.pop %v2979
    %v2982 = vmul.f32 %v2981, 0.6931472
    %v2983 = vlog2.pop %v2980
    %v2984 = vmul.f32 %v2983, 0.6931472
    %v2985 = vsub.f32 %v2969, %v2982
    %v2986 = vsub.f32 %v2970, %v2984
    %v2987 = vld [vmem:[#allocation7] sm:$0xff]
    %v2988 = vld [vmem:[#allocation7 + $0x8] sm:$0xff]
    %v2989 = vld [vmem:[#allocation7 + $0x10] sm:$0xff]
    %v2990 = vld [vmem:[#allocation7 + $0x18] sm:$0xff]
    %v2991 = vld [vmem:[#allocation7 + $0x20] sm:$0xff]
    %v2992 = vld [vmem:[#allocation7 + $0x28] sm:$0xff]
    %v2993 = vld [vmem:[#allocation7 + $0x30] sm:$0xff]
    %v2994 = vld [vmem:[#allocation7 + $0x38] sm:$0xff]
    %v2995 = vld [vmem:[#allocation7 + $0x40] sm:$0xff]
    %v2996 = vld [vmem:[#allocation7 + $0x48] sm:$0xff]
    %v2997 = vld [vmem:[#allocation7 + $0x50] sm:$0xff]
    %v2998 = vld [vmem:[#allocation7 + $0x58] sm:$0xff]
    %v2999 = vld [vmem:[#allocation7 + $0x60] sm:$0xff]
    %v3000 = vld [vmem:[#allocation7 + $0x68] sm:$0xff]
    %v3001 = vld [vmem:[#allocation7 + $0x70] sm:$0xff]
    %v3002 = vld [vmem:[#allocation7 + $0x78] sm:$0xff]
    %v3003 = vld [vmem:[%s8] sm:$0x1]
    %v3005 = vlaneseq
    %v3006 = vshrl.u32 %v3005, 7
    %v3007 = vsub.s32 0, %v3006
    %v3008 = vrot.slane %v3003, %v3007
    %3010 = vmatprep.subr.mxu0 0.0
    %3011 = vmatpush1.msra.mxu0 %v3002
    %3012 = vmatprep.subr.mxu0 0.0
    %3013 = vmatpush1.msra.mxu0 %v3001
    %3014 = vmatprep.subr.mxu0 0.0
    %3015 = vmatpush1.msra.mxu0 %v3000
    %3016 = vmatprep.subr.mxu0 0.0
    %3017 = vmatpush1.msra.mxu0 %v2999
    %3018 = vmatprep.subr.mxu0 0.0
    %3019 = vmatpush1.msra.mxu0 %v2998
    %3020 = vmatprep.subr.mxu0 0.0
    %3021 = vmatpush1.msra.mxu0 %v2997
    %3022 = vmatprep.subr.mxu0 0.0
    %3023 = vmatpush1.msra.mxu0 %v2996
    %3024 = vmatprep.subr.mxu0 0.0
    %3025 = vmatpush1.msra.mxu0 %v2995
    %3026 = vmatprep.subr.mxu0 0.0
    %3027 = vmatpush1.msra.mxu0 %v2994
    %3028 = vmatprep.subr.mxu0 0.0
    %3029 = vmatpush1.msra.mxu0 %v2993
    %3030 = vmatprep.subr.mxu0 0.0
    %3031 = vmatpush1.msra.mxu0 %v2992
    %3032 = vmatprep.subr.mxu0 0.0
    %3033 = vmatpush1.msra.mxu0 %v2991
    %3034 = vmatprep.subr.mxu0 0.0
    %3035 = vmatpush1.msra.mxu0 %v2990
    %3036 = vmatprep.subr.mxu0 0.0
    %3037 = vmatpush1.msra.mxu0 %v2989
    %3038 = vmatprep.subr.mxu0 0.0
    %3039 = vmatpush1.msra.mxu0 %v2988
    %3040 = vmatprep.subr.mxu0 0.0
    %3041 = vmatpush1.msra.mxu0 %v2987
    %3042 = vmatprep.subr.mxu0 0.0
    %3043 = vmatpush2.msra.mxu0 0.0
    %3044 = vmatprep.subr.mxu0 0.0
    %3045 = vmatpush2.msra.mxu0 0.0
    %3046 = vmatprep.subr.mxu0 0.0
    %3047 = vmatpush2.msra.mxu0 0.0
    %3048 = vmatprep.subr.mxu0 0.0
    %3049 = vmatpush2.msra.mxu0 0.0
    %3050 = vmatprep.subr.mxu0 0.0
    %3051 = vmatpush2.msra.mxu0 0.0
    %3052 = vmatprep.subr.mxu0 0.0
    %3053 = vmatpush2.msra.mxu0 0.0
    %3054 = vmatprep.subr.mxu0 0.0
    %3055 = vmatpush2.msra.mxu0 0.0
    %3056 = vmatprep.subr.mxu0 0.0
    %3057 = vmatpush2.msra.mxu0 0.0
    %3058 = vmatprep.subr.mxu0 0.0
    %3059 = vmatpush2.msra.mxu0 0.0
    %3060 = vmatprep.subr.mxu0 0.0
    %3061 = vmatpush2.msra.mxu0 0.0
    %3062 = vmatprep.subr.mxu0 0.0
    %3063 = vmatpush2.msra.mxu0 0.0
    %3064 = vmatprep.subr.mxu0 0.0
    %3065 = vmatpush2.msra.mxu0 0.0
    %3066 = vmatprep.subr.mxu0 0.0
    %3067 = vmatpush2.msra.mxu0 0.0
    %3068 = vmatprep.subr.mxu0 0.0
    %3069 = vmatpush2.msra.mxu0 0.0
    %3070 = vmatprep.subr.mxu0 0.0
    %3071 = vmatpush2.msra.mxu0 0.0
    %3072 = vmatprep.subr.mxu0 0.0
    %3073 = vmatpush2.msra.mxu0 0.0
    %3074 = vmatprep.mubr.f32.mxu0 0.0
    %3075 = vmatmul.mubr.f32.gmra.mxu0 %v2985
    %v3076 = vpop.f32.mrf.mxu0
    %v3077 = vadd.f32 %v3008, %v3076
    %v3078 = vpop.f32.mrf.mxu0
    %3079 = vmatprep.mubr.f32.mxu0 0.0
    %3080 = vmatmul.mubr.f32.gmra.mxu0 %v2986
    %v3081 = vpop.f32.mrf.mxu0
    %v3082 = vadd.f32 %v3008, %v3081
    %v3083 = vpop.f32.mrf.mxu0
    %3084 = vdwg.mxu0
    %v3085 = vlaneseq
    %v3086 = vand.u32 %v3085, 127
    %vm3087 = vcmp.lt.s32.totalorder %v3086, 10
    %v3088 = vsel %vm3087, %v3077, -1e+30
    %v3089 = vsel %vm3087, %v3082, -1e+30
    %3090 = vmax.xlane.f32.xlu0 %v3088
    %v3091 = vpop.xlane.xlu0 %3090
    %3092 = vmax.xlane.f32.xlu0 %v3089
    %v3093 = vpop.xlane.xlu0 %3092
    %v3094 = vsub.f32 %v3088, %v3091
    %v3095 = vsub.f32 %v3089, %v3093
    %v3096 = vmul.f32 %v3094, 1.442695
    %v3097 = vpow.pop %v3096
    %v3098 = vmul.f32 %v3095, 1.442695
    %v3099 = vpow.pop %v3098
    %3100 = vadd.xlane.f32.xlu0 %v3097
    %v3101 = vpop.xlane.xlu0 %3100
    %3102 = vadd.xlane.f32.xlu0 %v3099
    %v3103 = vpop.xlane.xlu0 %3102
    %v3104 = vlog2.pop %v3101
    %v3105 = vmul.f32 %v3104, 0.6931472
    %v3106 = vlog2.pop %v3103
    %v3107 = vmul.f32 %v3106, 0.6931472
    %v3108 = vsub.f32 %v3094, %v3105
    %v3109 = vsub.f32 %v3095, %v3107
    %3110 = vst [vmem:[%s9] sm:$0xff] %v3108
    %3111 = vst [vmem:[%s9 + $0x8] sm:$0xff] %v3109
    // Predicated region
    $region50: #{forward.1} parent=1 // pred_check
      _
    $region51: #{forward.1} parent=1 // pred_check_branch
      %3113 = sbr.rel (0) target = $region53
    $region52: #{forward.1} parent=1 // pred_region
      _
    $region53: #{forward.1} parent=1 // pred_fallthru
      _
    // Predicated region
    $region54: #{forward.1} parent=1 // pred_check
      _
    $region55: #{forward.1} parent=1 // pred_check_branch
      %3115 = sbr.rel (0) target = $region57
    $region56: #{forward.1} parent=1 // pred_region
      _
    $region57: #{forward.1} parent=1 // pred_fallthru
      _
    %3116 = vsyncpa [#allocation4], 1
    %3117 = vsyncpa [#allocation6], 1

</llo_original>
